<compile_context>
chip_gen: v7x
topology: tpu7x:2x2x1
jax: 0.10.0
libtpu: 0.0.40
codegen_flags: <defaults>
</compile_context>

<pallas_src>
import jax
import jax.numpy as jnp
from jax import lax
from jax.experimental import pallas as pl
from jax.experimental.pallas import tpu as pltpu


# ---------------------------------------------------------------------------
# Fused Pallas kernel: one grid step == one batch element, both conv stages.
# ---------------------------------------------------------------------------
def _basic_block_kernel(x_ref, w1_ref, b1_ref, w2_ref, b2_ref, out_ref,
                        xpad_ref, patch_ref):
    Hp, Wp, C = xpad_ref.shape
    H, W = Hp - 2, Wp - 2
    HW = H * W

    # Zero the padded scratch once; both stages overwrite the full interior,
    # so the zero border stays valid for stage 2 as well.
    xpad_ref[...] = jnp.zeros(xpad_ref.shape, xpad_ref.dtype)

    def conv_bn(inp_hwc, w_ref, b_ref):
        """3x3 SAME conv + folded BN on a VMEM-resident (H, W, C) f32 block.

        Builds the (HW, 9C) bf16 im2col matrix in VMEM, then one MXU matmul
        with f32 accumulation.  Returns (HW, C) f32 (bias already added).
        """
        xpad_ref[1:1 + H, 1:1 + W, :] = inp_hwc
        for tap in range(9):
            ky, kx = divmod(tap, 3)
            win = xpad_ref[ky:ky + H, kx:kx + W, :]            # (H, W, C) f32
            # f32 -> (HW, C) reshape is layout-free (W == 8 sublanes), then a
            # cheap VPU cast gives the bf16 MXU operand.
            patch_ref[:, tap * C:(tap + 1) * C] = (
                win.reshape(HW, C).astype(patch_ref.dtype))
        acc = jnp.dot(patch_ref[...], w_ref[...],
                      preferred_element_type=jnp.float32)       # (HW, C) f32
        return acc + b_ref[...]

    x = x_ref[...]                                              # (H, W, C) f32; also the residual
    # Stage 1: relu(bn1(conv1(x)))
    out1 = jnp.maximum(conv_bn(x, w1_ref, b1_ref), 0.0)         # (HW, C) f32
    # Stage 2: relu(bn2(conv2(out1)) + x)   (residual taken from VMEM, f32)
    out2 = conv_bn(out1.reshape(H, W, C), w2_ref, b2_ref)
    out2 = jnp.maximum(out2 + x.reshape(HW, C), 0.0)
    out_ref[...] = out2.reshape(H, W, C).astype(out_ref.dtype)


# ---------------------------------------------------------------------------
# Wrapper helpers (XLA side)
# ---------------------------------------------------------------------------
def _fold_bn(w_oihw, gamma, beta, mean, var, eps):
    """Fold eval-mode BatchNorm into the conv weight/bias.

    Returns w: (9*Cin, Cout) bf16 (MXU operand, tap-major / Cin-minor matching
    the in-kernel patch layout) and b: (1, Cout) f32 (epilogue stays f32).
    """
    s = gamma / jnp.sqrt(var + eps)                       # (Cout,)
    w = jnp.transpose(w_oihw, (2, 3, 1, 0))               # (kh, kw, Cin, Cout)
    kh, kw, ci, co = w.shape
    w = (w.reshape(kh * kw * ci, co) * s[None, :]).astype(jnp.bfloat16)
    b = (beta - mean * s).reshape(1, co).astype(jnp.float32)
    return w, b


def basic_block_forward(x, params, eps=1e-5):
    """BasicBlock forward.  x: (bs, C, H, W) float32 NCHW -> (bs, C, H, W)."""
    bs, C, H, W = x.shape
    HW, K = H * W, 9 * C
    # NCHW <-> NHWC transposes kept at the module boundary (the surrounding
    # model is NCHW); drop them if the caller can run channels-last.
    x_nhwc = jnp.transpose(x, (0, 2, 3, 1)).astype(jnp.float32)

    w1, b1 = _fold_bn(params["w1"], params["g1"], params["b1"],
                      params["m1"], params["v1"], eps)
    w2, b2 = _fold_bn(params["w2"], params["g2"], params["b2"],
                      params["m2"], params["v2"], eps)

    flops = 2 * 2 * bs * HW * K * C                      # two convs, 2*M*K*N each
    bytes_accessed = (2 * bs * HW * C * 4                # x in + y out (f32)
                      + 2 * K * C * 2                    # bf16 folded weights
                      + 2 * C * 4)                       # f32 folded biases

    per_batch = lambda i: (i, 0, 0, 0)
    const_blk = lambda i: (0, 0)

    y = pl.pallas_call(
        _basic_block_kernel,
        out_shape=jax.ShapeDtypeStruct((bs, H, W, C), jnp.float32),
        grid=(bs,),
        in_specs=[
            pl.BlockSpec((pl.Squeezed(), H, W, C), per_batch),   # x (also residual)
            pl.BlockSpec((K, C), const_blk),                     # conv1+bn1 weight (bf16)
            pl.BlockSpec((1, C), const_blk),                     # bn1 bias (f32)
            pl.BlockSpec((K, C), const_blk),                     # conv2+bn2 weight (bf16)
            pl.BlockSpec((1, C), const_blk),                     # bn2 bias (f32)
        ],
        out_specs=pl.BlockSpec((pl.Squeezed(), H, W, C), per_batch),
        scratch_shapes=[
            pltpu.VMEM((H + 2, W + 2, C), jnp.float32),          # zero-padded activations
            pltpu.VMEM((HW, K), jnp.bfloat16),                   # in-VMEM im2col patches
        ],
        compiler_params=pltpu.CompilerParams(dimension_semantics=("parallel",)),
        cost_estimate=pl.CostEstimate(flops=flops, transcendentals=0,
                                      bytes_accessed=bytes_accessed),
    )(x_nhwc, w1, b1, w2, b2)

    # TODO(synk): stride > 1 and the optional `downsample` submodule are not
    # implemented (module defaults: stride=1, downsample=None).
    # TODO(synk): for production HRNet spatial sizes (HW ~ 3072+) tile the HW
    # axis into <=512-1024 row blocks and set vmem_limit_bytes explicitly
    # (v7x has only 64 MiB physical / 32 MiB scoped-default VMEM).
    return jnp.transpose(y, (0, 3, 1, 2))


# ---------------------------------------------------------------------------
# References
# ---------------------------------------------------------------------------
def ref_forward(x, params, eps=1e-5):
    """Pure-JAX f32 / HIGHEST-precision forward mirroring the PyTorch module."""
    hp = lax.Precision.HIGHEST

    def conv(inp, w):
        return lax.conv_general_dilated(
            inp, w, window_strides=(1, 1), padding="SAME",
            dimension_numbers=("NCHW", "OIHW", "NCHW"), precision=hp)

    def bn(o, g, b, m, v):
        s = (g / jnp.sqrt(v + eps))[None, :, None, None]
        return (o - m[None, :, None, None]) * s + b[None, :, None, None]

    out = conv(x, params["w1"])
    out = jnp.maximum(bn(out, params["g1"], params["b1"], params["m1"], params["v1"]), 0.0)
    out = conv(out, params["w2"])
    out = bn(out, params["g2"], params["b2"], params["m2"], params["v2"])
    return jnp.maximum(out + x, 0.0)


def _im2col(x_nhwc):
    """(bs, H, W, C) -> (bs, H*W, 9*C) patches for a 3x3 SAME conv (test helper)."""
    bs, H, W, C = x_nhwc.shape
    xp = jnp.pad(x_nhwc, ((0, 0), (1, 1), (1, 1), (0, 0)))
    cols = [xp[:, ky:ky + H, kx:kx + W, :] for ky in range(3) for kx in range(3)]
    return jnp.stack(cols, axis=3).reshape(bs, H * W, 9 * C)


def ref_forward_matched(x, params, eps=1e-5):
    """Reference with the kernel's exact precision policy (bf16 matmul operands,
    f32 accumulation, f32 epilogue/residual) — used for the tight check."""
    bs, C, H, W = x.shape
    xn = jnp.transpose(x, (0, 2, 3, 1)).astype(jnp.float32)
    w1, b1 = _fold_bn(params["w1"], params["g1"], params["b1"],
                      params["m1"], params["v1"], eps)
    w2, b2 = _fold_bn(params["w2"], params["g2"], params["b2"],
                      params["m2"], params["v2"], eps)

    def stage(inp_nhwc, w, b):
        p = _im2col(inp_nhwc).astype(jnp.bfloat16)
        return jnp.dot(p, w, preferred_element_type=jnp.float32) + b

    out1 = jnp.maximum(stage(xn, w1, b1), 0.0)                      # (bs, HW, C)
    out2 = stage(out1.reshape(bs, H, W, C), w2, b2)
    out2 = jnp.maximum(out2 + xn.reshape(bs, H * W, C), 0.0)
    return jnp.transpose(out2.reshape(bs, H, W, C), (0, 3, 1, 2))


if __name__ == "__main__":
    # HRNet-like BasicBlock shapes: 128 channels, 16 x 8 spatial (HW = 128), batch 2.
    bs, C, H, W = 2, 128, 16, 8

    key = jax.random.PRNGKey(0)
    ks = jax.random.split(key, 11)
    n = lambda k, s, scale=1.0: scale * jax.random.normal(k, s, jnp.float32)
    params = {
        "w1": n(ks[0], (C, C, 3, 3), 0.05),                                  # conv1 (OIHW, no bias)
        "g1": 1.0 + n(ks[1], (C,), 0.1), "b1": n(ks[2], (C,), 0.1),          # bn1 gamma/beta
        "m1": n(ks[3], (C,), 0.1),
        "v1": jax.random.uniform(ks[4], (C,), jnp.float32, 0.5, 1.5),        # bn1 running stats
        "w2": n(ks[5], (C, C, 3, 3), 0.05),                                  # conv2
        "g2": 1.0 + n(ks[6], (C,), 0.1), "b2": n(ks[7], (C,), 0.1),          # bn2 gamma/beta
        "m2": n(ks[8], (C,), 0.1),
        "v2": jax.random.uniform(ks[9], (C,), jnp.float32, 0.5, 1.5),        # bn2 running stats
    }
    x = jax.random.normal(ks[10], (bs, C, H, W), jnp.float32)

    out = jax.block_until_ready(jax.jit(basic_block_forward)(x, params))
    assert out.shape == (bs, C, H, W)

    # Tight check vs. a reference using the identical precision policy
    # (bf16 matmul operands, f32 accumulation) — catches any kernel logic bug.
    ref_m = ref_forward_matched(x, params)
    assert jnp.allclose(out, ref_m, rtol=2e-3, atol=2e-3), \
        float(jnp.max(jnp.abs(out - ref_m)))

    # Semantic check vs. the full-f32 HIGHEST-precision PyTorch-style forward;
    # tolerance reflects bf16 matmul operands (error is well under this bound).
    ref = ref_forward(x, params)
    assert jnp.allclose(out, ref, rtol=5e-2, atol=5e-2), \
        float(jnp.max(jnp.abs(out - ref)))

    print("KERNEL_OK")
</pallas_src>

<mosaic_0001>
module attributes {stable_mosaic.version = 11 : i64} {
  func.func @_basic_block_kernel(%arg0: i32, %arg1: memref<1x16x8x128xf32, #tpu.memory_space<vmem>>, %arg2: memref<1152x128xbf16, #tpu.memory_space<vmem>>, %arg3: memref<1x128xf32, #tpu.memory_space<vmem>>, %arg4: memref<1152x128xbf16, #tpu.memory_space<vmem>>, %arg5: memref<1x128xf32, #tpu.memory_space<vmem>>, %arg6: memref<1x16x8x128xf32, #tpu.memory_space<vmem>>, %arg7: memref<18x10x128xf32, #tpu.memory_space<vmem>>, %arg8: memref<128x1152xbf16, #tpu.memory_space<vmem>>) attributes {dimension_semantics = [#tpu.dimension_semantics<parallel>], iteration_bounds = array<i64: 2>, scalar_prefetch = 0 : i64, scratch_operands = 2 : i64, tpu.core_type = #tpu.core_type<tc>, window_params = [{transform_indices = @transform_0, window_bounds = array<i64: 1, 16, 8, 128>}, {pipeline_mode = #tpu.pipeline_mode<synchronous>, transform_indices = @transform_1, window_bounds = array<i64: 1152, 128>}, {pipeline_mode = #tpu.pipeline_mode<synchronous>, transform_indices = @transform_2, window_bounds = array<i64: 1, 128>}, {pipeline_mode = #tpu.pipeline_mode<synchronous>, transform_indices = @transform_3, window_bounds = array<i64: 1152, 128>}, {pipeline_mode = #tpu.pipeline_mode<synchronous>, transform_indices = @transform_4, window_bounds = array<i64: 1, 128>}, {transform_indices = @transform_5, window_bounds = array<i64: 1, 16, 8, 128>}]} {
    %cst = arith.constant 0.000000e+00 : f32
    %0 = vector.broadcast %cst : f32 to vector<18x10x128xf32>
    %c0 = arith.constant 0 : index
    %c0_0 = arith.constant 0 : index
    %c0_1 = arith.constant 0 : index
    %1 = vector.load %arg7[%c0, %c0_0, %c0_1] : memref<18x10x128xf32, #tpu.memory_space<vmem>>, vector<18x10x128xf32>
    tpu.vector_store %arg7[%c0, %c0_0, %c0_1], %0 {strides = array<i32>} : memref<18x10x128xf32, #tpu.memory_space<vmem>>, vector<18x10x128xf32>,
    %c0_2 = arith.constant 0 : index
    %c0_3 = arith.constant 0 : index
    %c0_4 = arith.constant 0 : index
    %c0_5 = arith.constant 0 : index
    %2 = vector.load %arg1[%c0_2, %c0_3, %c0_4, %c0_5] : memref<1x16x8x128xf32, #tpu.memory_space<vmem>>, vector<1x16x8x128xf32>
    %3 = vector.shape_cast %2 : vector<1x16x8x128xf32> to vector<16x8x128xf32>
    %c1 = arith.constant 1 : index
    %c1_6 = arith.constant 1 : index
    %c0_7 = arith.constant 0 : index
    %4 = vector.load %arg7[%c1, %c1_6, %c0_7] : memref<18x10x128xf32, #tpu.memory_space<vmem>>, vector<16x8x128xf32>
    tpu.vector_store %arg7[%c1, %c1_6, %c0_7], %3 {strides = array<i32>} : memref<18x10x128xf32, #tpu.memory_space<vmem>>, vector<16x8x128xf32>,
    %c0_8 = arith.constant 0 : index
    %c0_9 = arith.constant 0 : index
    %c0_10 = arith.constant 0 : index
    %5 = vector.load %arg7[%c0_8, %c0_9, %c0_10] : memref<18x10x128xf32, #tpu.memory_space<vmem>>, vector<16x8x128xf32>
    %6 = vector.shape_cast %5 : vector<16x8x128xf32> to vector<128x128xf32>
    %7 = arith.truncf %6 : vector<128x128xf32> to vector<128x128xbf16>
    %c0_11 = arith.constant 0 : index
    %c0_12 = arith.constant 0 : index
    %8 = vector.load %arg8[%c0_11, %c0_12] : memref<128x1152xbf16, #tpu.memory_space<vmem>>, vector<128x128xbf16>
    tpu.vector_store %arg8[%c0_11, %c0_12], %7 {strides = array<i32>} : memref<128x1152xbf16, #tpu.memory_space<vmem>>, vector<128x128xbf16>,
    %c0_13 = arith.constant 0 : index
    %c1_14 = arith.constant 1 : index
    %c0_15 = arith.constant 0 : index
    %9 = vector.load %arg7[%c0_13, %c1_14, %c0_15] : memref<18x10x128xf32, #tpu.memory_space<vmem>>, vector<16x8x128xf32>
    %10 = vector.shape_cast %9 : vector<16x8x128xf32> to vector<128x128xf32>
    %11 = arith.truncf %10 : vector<128x128xf32> to vector<128x128xbf16>
    %c0_16 = arith.constant 0 : index
    %c128 = arith.constant 128 : index
    %12 = vector.load %arg8[%c0_16, %c128] : memref<128x1152xbf16, #tpu.memory_space<vmem>>, vector<128x128xbf16>
    tpu.vector_store %arg8[%c0_16, %c128], %11 {strides = array<i32>} : memref<128x1152xbf16, #tpu.memory_space<vmem>>, vector<128x128xbf16>,
    %c0_17 = arith.constant 0 : index
    %c2 = arith.constant 2 : index
    %c0_18 = arith.constant 0 : index
    %13 = vector.load %arg7[%c0_17, %c2, %c0_18] : memref<18x10x128xf32, #tpu.memory_space<vmem>>, vector<16x8x128xf32>
    %14 = vector.shape_cast %13 : vector<16x8x128xf32> to vector<128x128xf32>
    %15 = arith.truncf %14 : vector<128x128xf32> to vector<128x128xbf16>
    %c0_19 = arith.constant 0 : index
    %c256 = arith.constant 256 : index
    %16 = vector.load %arg8[%c0_19, %c256] : memref<128x1152xbf16, #tpu.memory_space<vmem>>, vector<128x128xbf16>
    tpu.vector_store %arg8[%c0_19, %c256], %15 {strides = array<i32>} : memref<128x1152xbf16, #tpu.memory_space<vmem>>, vector<128x128xbf16>,
    %c1_20 = arith.constant 1 : index
    %c0_21 = arith.constant 0 : index
    %c0_22 = arith.constant 0 : index
    %17 = vector.load %arg7[%c1_20, %c0_21, %c0_22] : memref<18x10x128xf32, #tpu.memory_space<vmem>>, vector<16x8x128xf32>
    %18 = vector.shape_cast %17 : vector<16x8x128xf32> to vector<128x128xf32>
    %19 = arith.truncf %18 : vector<128x128xf32> to vector<128x128xbf16>
    %c0_23 = arith.constant 0 : index
    %c384 = arith.constant 384 : index
    %20 = vector.load %arg8[%c0_23, %c384] : memref<128x1152xbf16, #tpu.memory_space<vmem>>, vector<128x128xbf16>
    tpu.vector_store %arg8[%c0_23, %c384], %19 {strides = array<i32>} : memref<128x1152xbf16, #tpu.memory_space<vmem>>, vector<128x128xbf16>,
    %c1_24 = arith.constant 1 : index
    %c1_25 = arith.constant 1 : index
    %c0_26 = arith.constant 0 : index
    %21 = vector.load %arg7[%c1_24, %c1_25, %c0_26] : memref<18x10x128xf32, #tpu.memory_space<vmem>>, vector<16x8x128xf32>
    %22 = vector.shape_cast %21 : vector<16x8x128xf32> to vector<128x128xf32>
    %23 = arith.truncf %22 : vector<128x128xf32> to vector<128x128xbf16>
    %c0_27 = arith.constant 0 : index
    %c512 = arith.constant 512 : index
    %24 = vector.load %arg8[%c0_27, %c512] : memref<128x1152xbf16, #tpu.memory_space<vmem>>, vector<128x128xbf16>
    tpu.vector_store %arg8[%c0_27, %c512], %23 {strides = array<i32>} : memref<128x1152xbf16, #tpu.memory_space<vmem>>, vector<128x128xbf16>,
    %c1_28 = arith.constant 1 : index
    %c2_29 = arith.constant 2 : index
    %c0_30 = arith.constant 0 : index
    %25 = vector.load %arg7[%c1_28, %c2_29, %c0_30] : memref<18x10x128xf32, #tpu.memory_space<vmem>>, vector<16x8x128xf32>
    %26 = vector.shape_cast %25 : vector<16x8x128xf32> to vector<128x128xf32>
    %27 = arith.truncf %26 : vector<128x128xf32> to vector<128x128xbf16>
    %c0_31 = arith.constant 0 : index
    %c640 = arith.constant 640 : index
    %28 = vector.load %arg8[%c0_31, %c640] : memref<128x1152xbf16, #tpu.memory_space<vmem>>, vector<128x128xbf16>
    tpu.vector_store %arg8[%c0_31, %c640], %27 {strides = array<i32>} : memref<128x1152xbf16, #tpu.memory_space<vmem>>, vector<128x128xbf16>,
    %c2_32 = arith.constant 2 : index
    %c0_33 = arith.constant 0 : index
    %c0_34 = arith.constant 0 : index
    %29 = vector.load %arg7[%c2_32, %c0_33, %c0_34] : memref<18x10x128xf32, #tpu.memory_space<vmem>>, vector<16x8x128xf32>
    %30 = vector.shape_cast %29 : vector<16x8x128xf32> to vector<128x128xf32>
    %31 = arith.truncf %30 : vector<128x128xf32> to vector<128x128xbf16>
    %c0_35 = arith.constant 0 : index
    %c768 = arith.constant 768 : index
    %32 = vector.load %arg8[%c0_35, %c768] : memref<128x1152xbf16, #tpu.memory_space<vmem>>, vector<128x128xbf16>
    tpu.vector_store %arg8[%c0_35, %c768], %31 {strides = array<i32>} : memref<128x1152xbf16, #tpu.memory_space<vmem>>, vector<128x128xbf16>,
    %c2_36 = arith.constant 2 : index
    %c1_37 = arith.constant 1 : index
    %c0_38 = arith.constant 0 : index
    %33 = vector.load %arg7[%c2_36, %c1_37, %c0_38] : memref<18x10x128xf32, #tpu.memory_space<vmem>>, vector<16x8x128xf32>
    %34 = vector.shape_cast %33 : vector<16x8x128xf32> to vector<128x128xf32>
    %35 = arith.truncf %34 : vector<128x128xf32> to vector<128x128xbf16>
    %c0_39 = arith.constant 0 : index
    %c896 = arith.constant 896 : index
    %36 = vector.load %arg8[%c0_39, %c896] : memref<128x1152xbf16, #tpu.memory_space<vmem>>, vector<128x128xbf16>
    tpu.vector_store %arg8[%c0_39, %c896], %35 {strides = array<i32>} : memref<128x1152xbf16, #tpu.memory_space<vmem>>, vector<128x128xbf16>,
    %c2_40 = arith.constant 2 : index
    %c2_41 = arith.constant 2 : index
    %c0_42 = arith.constant 0 : index
    %37 = vector.load %arg7[%c2_40, %c2_41, %c0_42] : memref<18x10x128xf32, #tpu.memory_space<vmem>>, vector<16x8x128xf32>
    %38 = vector.shape_cast %37 : vector<16x8x128xf32> to vector<128x128xf32>
    %39 = arith.truncf %38 : vector<128x128xf32> to vector<128x128xbf16>
    %c0_43 = arith.constant 0 : index
    %c1024 = arith.constant 1024 : index
    %40 = vector.load %arg8[%c0_43, %c1024] : memref<128x1152xbf16, #tpu.memory_space<vmem>>, vector<128x128xbf16>
    tpu.vector_store %arg8[%c0_43, %c1024], %39 {strides = array<i32>} : memref<128x1152xbf16, #tpu.memory_space<vmem>>, vector<128x128xbf16>,
    %c0_44 = arith.constant 0 : index
    %c0_45 = arith.constant 0 : index
    %41 = vector.load %arg8[%c0_44, %c0_45] : memref<128x1152xbf16, #tpu.memory_space<vmem>>, vector<128x1152xbf16>
    %c0_46 = arith.constant 0 : index
    %c0_47 = arith.constant 0 : index
    %42 = vector.load %arg2[%c0_46, %c0_47] : memref<1152x128xbf16, #tpu.memory_space<vmem>>, vector<1152x128xbf16>
    %cst_48 = arith.constant dense<0.000000e+00> : vector<128x128xf32>
    %43 = tpu.matmul %41, %42, %cst_48 {dimension_numbers = #tpu.dot_dimension_numbers<[1], [0], [0], [1], [0, 0, 1, 1], [], []>} : vector<128x1152xbf16>, vector<1152x128xbf16>, vector<128x128xf32> -> vector<128x128xf32>
    %c0_49 = arith.constant 0 : index
    %c0_50 = arith.constant 0 : index
    %44 = vector.load %arg3[%c0_49, %c0_50] : memref<1x128xf32, #tpu.memory_space<vmem>>, vector<1x128xf32>
    %45 = vector.broadcast %44 : vector<1x128xf32> to vector<128x128xf32>
    %46 = arith.addf %43, %45 : vector<128x128xf32>
    %cst_51 = arith.constant 0.000000e+00 : f32
    %47 = vector.broadcast %cst_51 : f32 to vector<128x128xf32>
    %48 = arith.maximumf %46, %47 : vector<128x128xf32>
    %49 = vector.shape_cast %48 : vector<128x128xf32> to vector<16x8x128xf32>
    %c1_52 = arith.constant 1 : index
    %c1_53 = arith.constant 1 : index
    %c0_54 = arith.constant 0 : index
    %50 = vector.load %arg7[%c1_52, %c1_53, %c0_54] : memref<18x10x128xf32, #tpu.memory_space<vmem>>, vector<16x8x128xf32>
    tpu.vector_store %arg7[%c1_52, %c1_53, %c0_54], %49 {strides = array<i32>} : memref<18x10x128xf32, #tpu.memory_space<vmem>>, vector<16x8x128xf32>,
    %c0_55 = arith.constant 0 : index
    %c0_56 = arith.constant 0 : index
    %c0_57 = arith.constant 0 : index
    %51 = vector.load %arg7[%c0_55, %c0_56, %c0_57] : memref<18x10x128xf32, #tpu.memory_space<vmem>>, vector<16x8x128xf32>
    %52 = vector.shape_cast %51 : vector<16x8x128xf32> to vector<128x128xf32>
    %53 = arith.truncf %52 : vector<128x128xf32> to vector<128x128xbf16>
    %c0_58 = arith.constant 0 : index
    %c0_59 = arith.constant 0 : index
    %54 = vector.load %arg8[%c0_58, %c0_59] : memref<128x1152xbf16, #tpu.memory_space<vmem>>, vector<128x128xbf16>
    tpu.vector_store %arg8[%c0_58, %c0_59], %53 {strides = array<i32>} : memref<128x1152xbf16, #tpu.memory_space<vmem>>, vector<128x128xbf16>,
    %c0_60 = arith.constant 0 : index
    %c1_61 = arith.constant 1 : index
    %c0_62 = arith.constant 0 : index
    %55 = vector.load %arg7[%c0_60, %c1_61, %c0_62] : memref<18x10x128xf32, #tpu.memory_space<vmem>>, vector<16x8x128xf32>
    %56 = vector.shape_cast %55 : vector<16x8x128xf32> to vector<128x128xf32>
    %57 = arith.truncf %56 : vector<128x128xf32> to vector<128x128xbf16>
    %c0_63 = arith.constant 0 : index
    %c128_64 = arith.constant 128 : index
    %58 = vector.load %arg8[%c0_63, %c128_64] : memref<128x1152xbf16, #tpu.memory_space<vmem>>, vector<128x128xbf16>
    tpu.vector_store %arg8[%c0_63, %c128_64], %57 {strides = array<i32>} : memref<128x1152xbf16, #tpu.memory_space<vmem>>, vector<128x128xbf16>,
    %c0_65 = arith.constant 0 : index
    %c2_66 = arith.constant 2 : index
    %c0_67 = arith.constant 0 : index
    %59 = vector.load %arg7[%c0_65, %c2_66, %c0_67] : memref<18x10x128xf32, #tpu.memory_space<vmem>>, vector<16x8x128xf32>
    %60 = vector.shape_cast %59 : vector<16x8x128xf32> to vector<128x128xf32>
    %61 = arith.truncf %60 : vector<128x128xf32> to vector<128x128xbf16>
    %c0_68 = arith.constant 0 : index
    %c256_69 = arith.constant 256 : index
    %62 = vector.load %arg8[%c0_68, %c256_69] : memref<128x1152xbf16, #tpu.memory_space<vmem>>, vector<128x128xbf16>
    tpu.vector_store %arg8[%c0_68, %c256_69], %61 {strides = array<i32>} : memref<128x1152xbf16, #tpu.memory_space<vmem>>, vector<128x128xbf16>,
    %c1_70 = arith.constant 1 : index
    %c0_71 = arith.constant 0 : index
    %c0_72 = arith.constant 0 : index
    %63 = vector.load %arg7[%c1_70, %c0_71, %c0_72] : memref<18x10x128xf32, #tpu.memory_space<vmem>>, vector<16x8x128xf32>
    %64 = vector.shape_cast %63 : vector<16x8x128xf32> to vector<128x128xf32>
    %65 = arith.truncf %64 : vector<128x128xf32> to vector<128x128xbf16>
    %c0_73 = arith.constant 0 : index
    %c384_74 = arith.constant 384 : index
    %66 = vector.load %arg8[%c0_73, %c384_74] : memref<128x1152xbf16, #tpu.memory_space<vmem>>, vector<128x128xbf16>
    tpu.vector_store %arg8[%c0_73, %c384_74], %65 {strides = array<i32>} : memref<128x1152xbf16, #tpu.memory_space<vmem>>, vector<128x128xbf16>,
    %c1_75 = arith.constant 1 : index
    %c1_76 = arith.constant 1 : index
    %c0_77 = arith.constant 0 : index
    %67 = vector.load %arg7[%c1_75, %c1_76, %c0_77] : memref<18x10x128xf32, #tpu.memory_space<vmem>>, vector<16x8x128xf32>
    %68 = vector.shape_cast %67 : vector<16x8x128xf32> to vector<128x128xf32>
    %69 = arith.truncf %68 : vector<128x128xf32> to vector<128x128xbf16>
    %c0_78 = arith.constant 0 : index
    %c512_79 = arith.constant 512 : index
    %70 = vector.load %arg8[%c0_78, %c512_79] : memref<128x1152xbf16, #tpu.memory_space<vmem>>, vector<128x128xbf16>
    tpu.vector_store %arg8[%c0_78, %c512_79], %69 {strides = array<i32>} : memref<128x1152xbf16, #tpu.memory_space<vmem>>, vector<128x128xbf16>,
    %c1_80 = arith.constant 1 : index
    %c2_81 = arith.constant 2 : index
    %c0_82 = arith.constant 0 : index
    %71 = vector.load %arg7[%c1_80, %c2_81, %c0_82] : memref<18x10x128xf32, #tpu.memory_space<vmem>>, vector<16x8x128xf32>
    %72 = vector.shape_cast %71 : vector<16x8x128xf32> to vector<128x128xf32>
    %73 = arith.truncf %72 : vector<128x128xf32> to vector<128x128xbf16>
    %c0_83 = arith.constant 0 : index
    %c640_84 = arith.constant 640 : index
    %74 = vector.load %arg8[%c0_83, %c640_84] : memref<128x1152xbf16, #tpu.memory_space<vmem>>, vector<128x128xbf16>
    tpu.vector_store %arg8[%c0_83, %c640_84], %73 {strides = array<i32>} : memref<128x1152xbf16, #tpu.memory_space<vmem>>, vector<128x128xbf16>,
    %c2_85 = arith.constant 2 : index
    %c0_86 = arith.constant 0 : index
    %c0_87 = arith.constant 0 : index
    %75 = vector.load %arg7[%c2_85, %c0_86, %c0_87] : memref<18x10x128xf32, #tpu.memory_space<vmem>>, vector<16x8x128xf32>
    %76 = vector.shape_cast %75 : vector<16x8x128xf32> to vector<128x128xf32>
    %77 = arith.truncf %76 : vector<128x128xf32> to vector<128x128xbf16>
    %c0_88 = arith.constant 0 : index
    %c768_89 = arith.constant 768 : index
    %78 = vector.load %arg8[%c0_88, %c768_89] : memref<128x1152xbf16, #tpu.memory_space<vmem>>, vector<128x128xbf16>
    tpu.vector_store %arg8[%c0_88, %c768_89], %77 {strides = array<i32>} : memref<128x1152xbf16, #tpu.memory_space<vmem>>, vector<128x128xbf16>,
    %c2_90 = arith.constant 2 : index
    %c1_91 = arith.constant 1 : index
    %c0_92 = arith.constant 0 : index
    %79 = vector.load %arg7[%c2_90, %c1_91, %c0_92] : memref<18x10x128xf32, #tpu.memory_space<vmem>>, vector<16x8x128xf32>
    %80 = vector.shape_cast %79 : vector<16x8x128xf32> to vector<128x128xf32>
    %81 = arith.truncf %80 : vector<128x128xf32> to vector<128x128xbf16>
    %c0_93 = arith.constant 0 : index
    %c896_94 = arith.constant 896 : index
    %82 = vector.load %arg8[%c0_93, %c896_94] : memref<128x1152xbf16, #tpu.memory_space<vmem>>, vector<128x128xbf16>
    tpu.vector_store %arg8[%c0_93, %c896_94], %81 {strides = array<i32>} : memref<128x1152xbf16, #tpu.memory_space<vmem>>, vector<128x128xbf16>,
    %c2_95 = arith.constant 2 : index
    %c2_96 = arith.constant 2 : index
    %c0_97 = arith.constant 0 : index
    %83 = vector.load %arg7[%c2_95, %c2_96, %c0_97] : memref<18x10x128xf32, #tpu.memory_space<vmem>>, vector<16x8x128xf32>
    %84 = vector.shape_cast %83 : vector<16x8x128xf32> to vector<128x128xf32>
    %85 = arith.truncf %84 : vector<128x128xf32> to vector<128x128xbf16>
    %c0_98 = arith.constant 0 : index
    %c1024_99 = arith.constant 1024 : index
    %86 = vector.load %arg8[%c0_98, %c1024_99] : memref<128x1152xbf16, #tpu.memory_space<vmem>>, vector<128x128xbf16>
    tpu.vector_store %arg8[%c0_98, %c1024_99], %85 {strides = array<i32>} : memref<128x1152xbf16, #tpu.memory_space<vmem>>, vector<128x128xbf16>,
    %c0_100 = arith.constant 0 : index
    %c0_101 = arith.constant 0 : index
    %87 = vector.load %arg8[%c0_100, %c0_101] : memref<128x1152xbf16, #tpu.memory_space<vmem>>, vector<128x1152xbf16>
    %c0_102 = arith.constant 0 : index
    %c0_103 = arith.constant 0 : index
    %88 = vector.load %arg4[%c0_102, %c0_103] : memref<1152x128xbf16, #tpu.memory_space<vmem>>, vector<1152x128xbf16>
    %cst_104 = arith.constant dense<0.000000e+00> : vector<128x128xf32>
    %89 = tpu.matmul %87, %88, %cst_104 {dimension_numbers = #tpu.dot_dimension_numbers<[1], [0], [0], [1], [0, 0, 1, 1], [], []>} : vector<128x1152xbf16>, vector<1152x128xbf16>, vector<128x128xf32> -> vector<128x128xf32>
    %c0_105 = arith.constant 0 : index
    %c0_106 = arith.constant 0 : index
    %90 = vector.load %arg5[%c0_105, %c0_106] : memref<1x128xf32, #tpu.memory_space<vmem>>, vector<1x128xf32>
    %91 = vector.broadcast %90 : vector<1x128xf32> to vector<128x128xf32>
    %92 = arith.addf %89, %91 : vector<128x128xf32>
    %93 = vector.shape_cast %3 : vector<16x8x128xf32> to vector<128x128xf32>
    %94 = arith.addf %92, %93 : vector<128x128xf32>
    %cst_107 = arith.constant 0.000000e+00 : f32
    %95 = vector.broadcast %cst_107 : f32 to vector<128x128xf32>
    %96 = arith.maximumf %94, %95 : vector<128x128xf32>
    %97 = vector.shape_cast %96 : vector<128x128xf32> to vector<16x8x128xf32>
    %c0_108 = arith.constant 0 : index
    %c0_109 = arith.constant 0 : index
    %c0_110 = arith.constant 0 : index
    %c0_111 = arith.constant 0 : index
    %98 = vector.load %arg6[%c0_108, %c0_109, %c0_110, %c0_111] : memref<1x16x8x128xf32, #tpu.memory_space<vmem>>, vector<1x16x8x128xf32>
    %99 = vector.shape_cast %98 : vector<1x16x8x128xf32> to vector<16x8x128xf32>
    %100 = vector.shape_cast %97 : vector<16x8x128xf32> to vector<1x16x8x128xf32>
    tpu.vector_store %arg6[%c0_108, %c0_109, %c0_110, %c0_111], %100 {strides = array<i32>} : memref<1x16x8x128xf32, #tpu.memory_space<vmem>>, vector<1x16x8x128xf32>,
    return
  }
  func.func @transform_0(%arg0: i32) -> (i32, i32, i32, i32) {
    %c0_i32 = arith.constant 0 : i32
    %c0_i32_0 = arith.constant 0 : i32
    %c0_i32_1 = arith.constant 0 : i32
    %c0_i32_2 = arith.constant 0 : i32
    return %arg0, %c0_i32, %c0_i32_0, %c0_i32_1 : i32, i32, i32, i32
  }
  func.func @transform_1(%arg0: i32) -> (i32, i32) {
    %c0_i32 = arith.constant 0 : i32
    %c0_i32_0 = arith.constant 0 : i32
    %c0_i32_1 = arith.constant 0 : i32
    return %c0_i32, %c0_i32_0 : i32, i32
  }
  func.func @transform_2(%arg0: i32) -> (i32, i32) {
    %c0_i32 = arith.constant 0 : i32
    %c0_i32_0 = arith.constant 0 : i32
    %c0_i32_1 = arith.constant 0 : i32
    return %c0_i32, %c0_i32_0 : i32, i32
  }
  func.func @transform_3(%arg0: i32) -> (i32, i32) {
    %c0_i32 = arith.constant 0 : i32
    %c0_i32_0 = arith.constant 0 : i32
    %c0_i32_1 = arith.constant 0 : i32
    return %c0_i32, %c0_i32_0 : i32, i32
  }
  func.func @transform_4(%arg0: i32) -> (i32, i32) {
    %c0_i32 = arith.constant 0 : i32
    %c0_i32_0 = arith.constant 0 : i32
    %c0_i32_1 = arith.constant 0 : i32
    return %c0_i32, %c0_i32_0 : i32, i32
  }
  func.func @transform_5(%arg0: i32) -> (i32, i32, i32, i32) {
    %c0_i32 = arith.constant 0 : i32
    %c0_i32_0 = arith.constant 0 : i32
    %c0_i32_1 = arith.constant 0 : i32
    %c0_i32_2 = arith.constant 0 : i32
    return %arg0, %c0_i32, %c0_i32_0, %c0_i32_1 : i32, i32, i32, i32
  }
}

</mosaic_0001>

<llo_original>
// kernel: basic_block_forward.1
$region0: #{basic_block_forward.1}
  #allocation0 [shape = 'u32[]', space=smem, size = 0x4, offset = 0x4, fixed_abs, tag = 'smem constant byte address 0x4 - core index']
  #allocation1 [shape = 'u32[144,128]{1,0:T(1,128)}', space=vmem, size = 0x12000, scoped, tag = 'internal scratch']
  #allocation2 [shape = 'f32[18,10,128]{2,1,0:T(8,128)}', space=vmem, size = 0x24000, scoped, tag = 'scratch operand']
  #allocation3 [shape = 'bf16[128,1152]{1,0:T(16,128)(2,1)}', space=vmem, size = 0x48000, scoped, tag = 'scratch operand']
  %s0 = inlined_call_operand.vmem [shape: f32[2,16,8,128], index: 0, kind: input, shape index: {}]
  %s1 = inlined_call_operand.vmem [shape: bf16[1152,128], index: 1, kind: input, shape index: {}]
  %s2 = inlined_call_operand.vmem [shape: f32[1,128], index: 2, kind: input, shape index: {}]
  %s3 = inlined_call_operand.vmem [shape: bf16[1152,128], index: 3, kind: input, shape index: {}]
  %s4 = inlined_call_operand.vmem [shape: f32[1,128], index: 4, kind: input, shape index: {}]
  %s5 = inlined_call_operand.hbm [shape: f32[2,16,8,128], index: 5, kind: output, shape index: {}]
  %s6 = sld [smem:[#allocation0]]
  $region53: #{basic_block_forward.1} parent=0
    _
  %s8 = ssub.s32 1, %s6
  %s9 = scalar_select 0, %s8, %s6
  $region1: #{basic_block_forward.1} parent=0
    #allocation4 [shape = 'u8[131072]{0}', space=vmem, size = 0x20000, scoped, tag = 'output window, operand 0']
    #allocation5 [shape = 's32[2]{0}', space=sflag, size = 0x8, scoped, tag = 'scoped memory for basic_block_forward.1']
    %10 = vsyncpa [#allocation5], 0
    %s11 = scalar_lea.sflag [#allocation5], 1
    %12 = vsyncpa %s11, 0
    loop: start=0, step=1, limit=4
    $region2: #{basic_block_forward.1} parent=1 // loop_pre_header
      _
    $region3: #{basic_block_forward.1} parent=1 // loop_header
      %s14 = sphi 0, %s18
      %p15 = scmp.ge.s32.totalorder %s14, 4
      %s24 = sphi 0, %s26
      %s27 = sphi 0, %s24
      %s28 = sphi 0, %s27
      %s44 = sphi 0, %s28
      %s48 = sphi 0, %s48
      %s50 = sphi 0, %s48
      %s51 = sphi 0, %s50
      %s65 = sphi 0, %s51
      %s69 = sphi 0, %s69
      %s71 = sphi 0, %s69
      %s72 = sphi 0, %s71
      %s86 = sphi 0, %s72
      %s90 = sphi 0, %s90
      %s92 = sphi 0, %s90
      %s93 = sphi 0, %s92
      %s107 = sphi 0, %s93
      %s111 = sphi 0, %s111
      %s113 = sphi 0, %s111
      %s114 = sphi 0, %s113
      %s128 = sphi 0, %s114
      %s134 = sphi 0, %s136
      %s137 = sphi 0, %s134
      %s138 = sphi 0, %s137
      %s154 = sphi 0, %s138
    $region4: #{basic_block_forward.1} parent=1 // loop_header_branch
      %17 = sbr.rel (%p15) target = $region8
    $region5: #{basic_block_forward.1} parent=1 // loop_body
      %s19 = ssub.s32 %s14, 1
      %s20 = ssub.s32 %s14, 2
      %s21 = sadd.s32 %s14, 1
      %s22 = ssub.s32 %s14, %s21
      %p23 = scmp.eq.s32.totalorder %s22, 0
      %s25 = sadd.s32 %s24, 1
      %s26 = scalar_select %p23, %s24, %s25
      %p29 = pneg %p23
      %p30 = scmp.eq.s32.totalorder %s14, 1
      %p31 = por %p29, %p30
      %p32 = scmp.ne.s32.totalorder %s24, %s27
      %p33 = scmp.eq.s32.totalorder %s14, 0
      %p34 = por %p32, %p33
      %p35 = scmp.ne.s32.totalorder %s24, %s27
      %p36 = scmp.eq.s32.totalorder %s19, 1
      %p37 = por %p35, %p36
      %p38 = scmp.ne.s32.totalorder %s27, %s28
      %p39 = scmp.eq.s32.totalorder %s19, 0
      %p40 = por %p38, %p39
      %p41 = scmp.ne.s32.totalorder %s27, %s28
      %p42 = scmp.eq.s32.totalorder %s20, 1
      %p43 = por %p41, %p42
      %p45 = scmp.ne.s32.totalorder %s28, %s44
      %p46 = scmp.eq.s32.totalorder %s20, 0
      %p47 = por %p45, %p46
      %s49 = sadd.s32 %s48, 1
      %p52 = scmp.eq.s32.totalorder %s14, 1
      %p53 = scmp.ne.s32.totalorder %s48, %s50
      %p54 = scmp.eq.s32.totalorder %s14, 0
      %p55 = por %p53, %p54
      %p56 = scmp.ne.s32.totalorder %s48, %s50
      %p57 = scmp.eq.s32.totalorder %s19, 1
      %p58 = por %p56, %p57
      %p59 = scmp.ne.s32.totalorder %s50, %s51
      %p60 = scmp.eq.s32.totalorder %s19, 0
      %p61 = por %p59, %p60
      %p62 = scmp.ne.s32.totalorder %s50, %s51
      %p63 = scmp.eq.s32.totalorder %s20, 1
      %p64 = por %p62, %p63
      %p66 = scmp.ne.s32.totalorder %s51, %s65
      %p67 = scmp.eq.s32.totalorder %s20, 0
      %p68 = por %p66, %p67
      %s70 = sadd.s32 %s69, 1
      %p73 = scmp.eq.s32.totalorder %s14, 1
      %p74 = scmp.ne.s32.totalorder %s69, %s71
      %p75 = scmp.eq.s32.totalorder %s14, 0
      %p76 = por %p74, %p75
      %p77 = scmp.ne.s32.totalorder %s69, %s71
      %p78 = scmp.eq.s32.totalorder %s19, 1
      %p79 = por %p77, %p78
      %p80 = scmp.ne.s32.totalorder %s71, %s72
      %p81 = scmp.eq.s32.totalorder %s19, 0
      %p82 = por %p80, %p81
      %p83 = scmp.ne.s32.totalorder %s71, %s72
      %p84 = scmp.eq.s32.totalorder %s20, 1
      %p85 = por %p83, %p84
      %p87 = scmp.ne.s32.totalorder %s72, %s86
      %p88 = scmp.eq.s32.totalorder %s20, 0
      %p89 = por %p87, %p88
      %s91 = sadd.s32 %s90, 1
      %p94 = scmp.eq.s32.totalorder %s14, 1
      %p95 = scmp.ne.s32.totalorder %s90, %s92
      %p96 = scmp.eq.s32.totalorder %s14, 0
      %p97 = por %p95, %p96
      %p98 = scmp.ne.s32.totalorder %s90, %s92
      %p99 = scmp.eq.s32.totalorder %s19, 1
      %p100 = por %p98, %p99
      %p101 = scmp.ne.s32.totalorder %s92, %s93
      %p102 = scmp.eq.s32.totalorder %s19, 0
      %p103 = por %p101, %p102
      %p104 = scmp.ne.s32.totalorder %s92, %s93
      %p105 = scmp.eq.s32.totalorder %s20, 1
      %p106 = por %p104, %p105
      %p108 = scmp.ne.s32.totalorder %s93, %s107
      %p109 = scmp.eq.s32.totalorder %s20, 0
      %p110 = por %p108, %p109
      %s112 = sadd.s32 %s111, 1
      %p115 = scmp.eq.s32.totalorder %s14, 1
      %p116 = scmp.ne.s32.totalorder %s111, %s113
      %p117 = scmp.eq.s32.totalorder %s14, 0
      %p118 = por %p116, %p117
      %p119 = scmp.ne.s32.totalorder %s111, %s113
      %p120 = scmp.eq.s32.totalorder %s19, 1
      %p121 = por %p119, %p120
      %p122 = scmp.ne.s32.totalorder %s113, %s114
      %p123 = scmp.eq.s32.totalorder %s19, 0
      %p124 = por %p122, %p123
      %p125 = scmp.ne.s32.totalorder %s113, %s114
      %p126 = scmp.eq.s32.totalorder %s20, 1
      %p127 = por %p125, %p126
      %p129 = scmp.ne.s32.totalorder %s114, %s128
      %p130 = scmp.eq.s32.totalorder %s20, 0
      %p131 = por %p129, %p130
      %s132 = ssub.s32 %s14, %s21
      %p133 = scmp.eq.s32.totalorder %s132, 0
      %s135 = sadd.s32 %s134, 1
      %s136 = scalar_select %p133, %s134, %s135
      %p139 = pneg %p133
      %p140 = scmp.eq.s32.totalorder %s14, 1
      %p141 = por %p139, %p140
      %p142 = scmp.ne.s32.totalorder %s134, %s137
      %p143 = scmp.eq.s32.totalorder %s14, 0
      %p144 = por %p142, %p143
      %p145 = scmp.ne.s32.totalorder %s134, %s137
      %p146 = scmp.eq.s32.totalorder %s19, 1
      %p147 = por %p145, %p146
      %p148 = scmp.ne.s32.totalorder %s137, %s138
      %p149 = scmp.eq.s32.totalorder %s19, 0
      %p150 = por %p148, %p149
      %p151 = scmp.ne.s32.totalorder %s137, %s138
      %p152 = scmp.eq.s32.totalorder %s20, 1
      %p153 = por %p151, %p152
      %p155 = scmp.ne.s32.totalorder %s138, %s154
      %p156 = scmp.eq.s32.totalorder %s20, 0
      %p157 = por %p155, %p156
      %p158 = scmp.le.s32.totalorder 1, %s14
      %p159 = scmp.lt.s32.totalorder %s14, 3
      %p160 = pnand %p158, %p159
      %p161 = pneg %p160
      // Predicated region
      $region9: #{basic_block_forward.1} parent=5 // pred_check
        _
      $region10: #{basic_block_forward.1} parent=5 // pred_check_branch
        %163 = sbr.rel (%p160) target = $region12
      $region11: #{basic_block_forward.1} parent=5 // pred_region
        %s164 = ssub.s32 %s14, 1
        // Predicated region
        $region13: #{basic_block_forward.1} parent=11 // pred_check
          %p165 = pneg %p61
        $region14: #{basic_block_forward.1} parent=11 // pred_check_branch
          %167 = sbr.rel (%p165) target = $region16
        $region15: #{basic_block_forward.1} parent=11 // pred_region
          _
        $region16: #{basic_block_forward.1} parent=11 // pred_fallthru
          _
        // Predicated region
        $region17: #{basic_block_forward.1} parent=11 // pred_check
          %p168 = pneg %p82
        $region18: #{basic_block_forward.1} parent=11 // pred_check_branch
          %170 = sbr.rel (%p168) target = $region20
        $region19: #{basic_block_forward.1} parent=11 // pred_region
          _
        $region20: #{basic_block_forward.1} parent=11 // pred_fallthru
          _
        // Predicated region
        $region21: #{basic_block_forward.1} parent=11 // pred_check
          %p171 = pneg %p103
        $region22: #{basic_block_forward.1} parent=11 // pred_check_branch
          %173 = sbr.rel (%p171) target = $region24
        $region23: #{basic_block_forward.1} parent=11 // pred_region
          _
        $region24: #{basic_block_forward.1} parent=11 // pred_fallthru
          _
        // Predicated region
        $region25: #{basic_block_forward.1} parent=11 // pred_check
          %p174 = pneg %p124
        $region26: #{basic_block_forward.1} parent=11 // pred_check_branch
          %176 = sbr.rel (%p174) target = $region28
        $region27: #{basic_block_forward.1} parent=11 // pred_region
          _
        $region28: #{basic_block_forward.1} parent=11 // pred_fallthru
          _
      $region12: #{basic_block_forward.1} parent=5 // pred_fallthru
        _
      %p177 = scmp.lt.s32.totalorder %s14, 2
      // Predicated region
      $region29: #{basic_block_forward.1} parent=5 // pred_check
        %p178 = pneg %p177
      $region30: #{basic_block_forward.1} parent=5 // pred_check_branch
        %180 = sbr.rel (%p178) target = $region32
      $region31: #{basic_block_forward.1} parent=5 // pred_region
        // Predicated region
        $region33: #{basic_block_forward.1} parent=31 // pred_check
          %p181 = pneg %p34
        $region34: #{basic_block_forward.1} parent=31 // pred_check_branch
          %183 = sbr.rel (%p181) target = $region36
        $region35: #{basic_block_forward.1} parent=31 // pred_region
          %p184 = scmp.lt.s32.totalorder %s14, 1
          %s185 = scalar_select %p184, %s14, 1
          %s186 = smul.addr %s185, 16
          %s187 = smul.addr %s186, 8
          %s188 = scalar_lea.vmem %s0, %s187
        $region36: #{basic_block_forward.1} parent=31 // pred_fallthru
          _
      $region32: #{basic_block_forward.1} parent=5 // pred_fallthru
        _
      %p189 = scmp.le.s32.totalorder 1, %s14
      %p190 = scmp.lt.s32.totalorder %s14, 3
      %p191 = pnand %p189, %p190
      %p192 = pneg %p191
      // Predicated region
      $region37: #{basic_block_forward.1} parent=5 // pred_check
        _
      $region38: #{basic_block_forward.1} parent=5 // pred_check_branch
        %194 = sbr.rel (%p191) target = $region40
      $region39: #{basic_block_forward.1} parent=5 // pred_region
        %s195 = ssub.s32 %s14, 1
        %p196 = scmp.lt.s32.totalorder %s19, 1
        %s197 = scalar_select %p196, %s19, 1
        %s198 = smul.addr %s197, 16
        %s199 = smul.addr %s198, 8
        %s200 = scalar_lea.vmem %s0, %s199
        %p201 = pneg %p40
        %p202 = pneg %p37
        %p203 = pneg %p61
        %p204 = pneg %p58
        %p205 = pneg %p82
        %p206 = pneg %p79
        %p207 = pneg %p103
        %p208 = pneg %p100
        %p209 = pneg %p124
        %p210 = pneg %p121
        %p211 = pneg %p150
        %p212 = pneg %p147
        %s213 = sand.u32 %s137, 1
        %s214 = scalar_lea.sflag [#allocation5], %s213
        %s215 = sand.u32 %s137, 1
        %s216 = smul.addr %s215, 128
        %s217 = scalar_lea.vmem [#allocation4], %s216
        %p218 = scmp.lt.s32.totalorder %s19, 1
        %s219 = scalar_select %p218, %s19, 1
        %s220 = smul.addr %s219, 16
        %s221 = smul.addr %s220, 8
        %s222 = scalar_lea.vmem %s0, %s221
        %224 = vst [vmem:[#allocation2] sm:$0xff] 0.0
        %225 = vst [vmem:[#allocation2 + $0x8] sm:$0x3] 0.0
        %226 = vst [vmem:[#allocation2 + $0x10] sm:$0xff] 0.0
        %227 = vst [vmem:[#allocation2 + $0x18] sm:$0x3] 0.0
        %228 = vst [vmem:[#allocation2 + $0x20] sm:$0xff] 0.0
        %229 = vst [vmem:[#allocation2 + $0x28] sm:$0x3] 0.0
        %230 = vst [vmem:[#allocation2 + $0x30] sm:$0xff] 0.0
        %231 = vst [vmem:[#allocation2 + $0x38] sm:$0x3] 0.0
        %232 = vst [vmem:[#allocation2 + $0x40] sm:$0xff] 0.0
        %233 = vst [vmem:[#allocation2 + $0x48] sm:$0x3] 0.0
        %234 = vst [vmem:[#allocation2 + $0x50] sm:$0xff] 0.0
        %235 = vst [vmem:[#allocation2 + $0x58] sm:$0x3] 0.0
        %236 = vst [vmem:[#allocation2 + $0x60] sm:$0xff] 0.0
        %237 = vst [vmem:[#allocation2 + $0x68] sm:$0x3] 0.0
        %238 = vst [vmem:[#allocation2 + $0x70] sm:$0xff] 0.0
        %239 = vst [vmem:[#allocation2 + $0x78] sm:$0x3] 0.0
        %240 = vst [vmem:[#allocation2 + $0x80] sm:$0xff] 0.0
        %241 = vst [vmem:[#allocation2 + $0x88] sm:$0x3] 0.0
        %242 = vst [vmem:[#allocation2 + $0x90] sm:$0xff] 0.0
        %243 = vst [vmem:[#allocation2 + $0x98] sm:$0x3] 0.0
        %244 = vst [vmem:[#allocation2 + $0xa0] sm:$0xff] 0.0
        %245 = vst [vmem:[#allocation2 + $0xa8] sm:$0x3] 0.0
        %246 = vst [vmem:[#allocation2 + $0xb0] sm:$0xff] 0.0
        %247 = vst [vmem:[#allocation2 + $0xb8] sm:$0x3] 0.0
        %248 = vst [vmem:[#allocation2 + $0xc0] sm:$0xff] 0.0
        %249 = vst [vmem:[#allocation2 + $0xc8] sm:$0x3] 0.0
        %250 = vst [vmem:[#allocation2 + $0xd0] sm:$0xff] 0.0
        %251 = vst [vmem:[#allocation2 + $0xd8] sm:$0x3] 0.0
        %252 = vst [vmem:[#allocation2 + $0xe0] sm:$0xff] 0.0
        %253 = vst [vmem:[#allocation2 + $0xe8] sm:$0x3] 0.0
        %254 = vst [vmem:[#allocation2 + $0xf0] sm:$0xff] 0.0
        %255 = vst [vmem:[#allocation2 + $0xf8] sm:$0x3] 0.0
        %256 = vst [vmem:[#allocation2 + $0x100] sm:$0xff] 0.0
        %257 = vst [vmem:[#allocation2 + $0x108] sm:$0x3] 0.0
        %258 = vst [vmem:[#allocation2 + $0x110] sm:$0xff] 0.0
        %259 = vst [vmem:[#allocation2 + $0x118] sm:$0x3] 0.0
        %v260 = vld [vmem:[%s222] sm:$0xff]
        %v261 = vld [vmem:[%s222 + $0x8] sm:$0xff]
        %v262 = vld [vmem:[%s222 + $0x10] sm:$0xff]
        %v263 = vld [vmem:[%s222 + $0x18] sm:$0xff]
        %v264 = vld [vmem:[%s222 + $0x20] sm:$0xff]
        %v265 = vld [vmem:[%s222 + $0x28] sm:$0xff]
        %v266 = vld [vmem:[%s222 + $0x30] sm:$0xff]
        %v267 = vld [vmem:[%s222 + $0x38] sm:$0xff]
        %v268 = vld [vmem:[%s222 + $0x40] sm:$0xff]
        %v269 = vld [vmem:[%s222 + $0x48] sm:$0xff]
        %v270 = vld [vmem:[%s222 + $0x50] sm:$0xff]
        %v271 = vld [vmem:[%s222 + $0x58] sm:$0xff]
        %v272 = vld [vmem:[%s222 + $0x60] sm:$0xff]
        %v273 = vld [vmem:[%s222 + $0x68] sm:$0xff]
        %v274 = vld [vmem:[%s222 + $0x70] sm:$0xff]
        %v275 = vld [vmem:[%s222 + $0x78] sm:$0xff]
        %s276 = scalar_lea.vmem [#allocation2], 16
        %277 = vst [vmem:[%s276 + $0x1] sm:$0xff] %v260
        %278 = vst [vmem:[%s276 + $0x11] sm:$0xff] %v261
        %279 = vst [vmem:[%s276 + $0x21] sm:$0xff] %v262
        %280 = vst [vmem:[%s276 + $0x31] sm:$0xff] %v263
        %281 = vst [vmem:[%s276 + $0x41] sm:$0xff] %v264
        %282 = vst [vmem:[%s276 + $0x51] sm:$0xff] %v265
        %283 = vst [vmem:[%s276 + $0x61] sm:$0xff] %v266
        %284 = vst [vmem:[%s276 + $0x71] sm:$0xff] %v267
        %285 = vst [vmem:[%s276 + $0x81] sm:$0xff] %v268
        %286 = vst [vmem:[%s276 + $0x91] sm:$0xff] %v269
        %287 = vst [vmem:[%s276 + $0xa1] sm:$0xff] %v270
        %288 = vst [vmem:[%s276 + $0xb1] sm:$0xff] %v271
        %289 = vst [vmem:[%s276 + $0xc1] sm:$0xff] %v272
        %290 = vst [vmem:[%s276 + $0xd1] sm:$0xff] %v273
        %291 = vst [vmem:[%s276 + $0xe1] sm:$0xff] %v274
        %292 = vst [vmem:[%s276 + $0xf1] sm:$0xff] %v275
        %v293 = vld [vmem:[#allocation2] sm:$0xff]
        %v294 = vld [vmem:[#allocation2 + $0x10] sm:$0xff]
        %v295 = vld [vmem:[#allocation2 + $0x20] sm:$0xff]
        %v296 = vld [vmem:[#allocation2 + $0x30] sm:$0xff]
        %v297 = vld [vmem:[#allocation2 + $0x40] sm:$0xff]
        %v298 = vld [vmem:[#allocation2 + $0x50] sm:$0xff]
        %v299 = vld [vmem:[#allocation2 + $0x60] sm:$0xff]
        %v300 = vld [vmem:[#allocation2 + $0x70] sm:$0xff]
        %v301 = vld [vmem:[#allocation2 + $0x80] sm:$0xff]
        %v302 = vld [vmem:[#allocation2 + $0x90] sm:$0xff]
        %v303 = vld [vmem:[#allocation2 + $0xa0] sm:$0xff]
        %v304 = vld [vmem:[#allocation2 + $0xb0] sm:$0xff]
        %v305 = vld [vmem:[#allocation2 + $0xc0] sm:$0xff]
        %v306 = vld [vmem:[#allocation2 + $0xd0] sm:$0xff]
        %v307 = vld [vmem:[#allocation2 + $0xe0] sm:$0xff]
        %v308 = vld [vmem:[#allocation2 + $0xf0] sm:$0xff]
        %v309 = vpack.c.bf16 %v294, %v293
        %v310 = vpack.c.bf16 %v296, %v295
        %v311 = vpack.c.bf16 %v298, %v297
        %v312 = vpack.c.bf16 %v300, %v299
        %v313 = vpack.c.bf16 %v302, %v301
        %v314 = vpack.c.bf16 %v304, %v303
        %v315 = vpack.c.bf16 %v306, %v305
        %v316 = vpack.c.bf16 %v308, %v307
        %317 = vst [vmem:[#allocation3] sm:$0xff] %v309
        %318 = vst [vmem:[#allocation3 + $0x48] sm:$0xff] %v310
        %319 = vst [vmem:[#allocation3 + $0x90] sm:$0xff] %v311
        %320 = vst [vmem:[#allocation3 + $0xd8] sm:$0xff] %v312
        %321 = vst [vmem:[#allocation3 + $0x120] sm:$0xff] %v313
        %322 = vst [vmem:[#allocation3 + $0x168] sm:$0xff] %v314
        %323 = vst [vmem:[#allocation3 + $0x1b0] sm:$0xff] %v315
        %324 = vst [vmem:[#allocation3 + $0x1f8] sm:$0xff] %v316
        %v325 = vld [vmem:[#allocation2 + $0x1] sm:$0xff]
        %v326 = vld [vmem:[#allocation2 + $0x11] sm:$0xff]
        %v327 = vld [vmem:[#allocation2 + $0x21] sm:$0xff]
        %v328 = vld [vmem:[#allocation2 + $0x31] sm:$0xff]
        %v329 = vld [vmem:[#allocation2 + $0x41] sm:$0xff]
        %v330 = vld [vmem:[#allocation2 + $0x51] sm:$0xff]
        %v331 = vld [vmem:[#allocation2 + $0x61] sm:$0xff]
        %v332 = vld [vmem:[#allocation2 + $0x71] sm:$0xff]
        %v333 = vld [vmem:[#allocation2 + $0x81] sm:$0xff]
        %v334 = vld [vmem:[#allocation2 + $0x91] sm:$0xff]
        %v335 = vld [vmem:[#allocation2 + $0xa1] sm:$0xff]
        %v336 = vld [vmem:[#allocation2 + $0xb1] sm:$0xff]
        %v337 = vld [vmem:[#allocation2 + $0xc1] sm:$0xff]
        %v338 = vld [vmem:[#allocation2 + $0xd1] sm:$0xff]
        %v339 = vld [vmem:[#allocation2 + $0xe1] sm:$0xff]
        %v340 = vld [vmem:[#allocation2 + $0xf1] sm:$0xff]
        %v341 = vpack.c.bf16 %v326, %v325
        %v342 = vpack.c.bf16 %v328, %v327
        %v343 = vpack.c.bf16 %v330, %v329
        %v344 = vpack.c.bf16 %v332, %v331
        %v345 = vpack.c.bf16 %v334, %v333
        %v346 = vpack.c.bf16 %v336, %v335
        %v347 = vpack.c.bf16 %v338, %v337
        %v348 = vpack.c.bf16 %v340, %v339
        %349 = vst [vmem:[#allocation3 + $0x8] sm:$0xff] %v341
        %350 = vst [vmem:[#allocation3 + $0x50] sm:$0xff] %v342
        %351 = vst [vmem:[#allocation3 + $0x98] sm:$0xff] %v343
        %352 = vst [vmem:[#allocation3 + $0xe0] sm:$0xff] %v344
        %353 = vst [vmem:[#allocation3 + $0x128] sm:$0xff] %v345
        %354 = vst [vmem:[#allocation3 + $0x170] sm:$0xff] %v346
        %355 = vst [vmem:[#allocation3 + $0x1b8] sm:$0xff] %v347
        %356 = vst [vmem:[#allocation3 + $0x200] sm:$0xff] %v348
        %v357 = vld [vmem:[#allocation2 + $0x2] sm:$0xff]
        %v358 = vld [vmem:[#allocation2 + $0x12] sm:$0xff]
        %v359 = vld [vmem:[#allocation2 + $0x22] sm:$0xff]
        %v360 = vld [vmem:[#allocation2 + $0x32] sm:$0xff]
        %v361 = vld [vmem:[#allocation2 + $0x42] sm:$0xff]
        %v362 = vld [vmem:[#allocation2 + $0x52] sm:$0xff]
        %v363 = vld [vmem:[#allocation2 + $0x62] sm:$0xff]
        %v364 = vld [vmem:[#allocation2 + $0x72] sm:$0xff]
        %v365 = vld [vmem:[#allocation2 + $0x82] sm:$0xff]
        %v366 = vld [vmem:[#allocation2 + $0x92] sm:$0xff]
        %v367 = vld [vmem:[#allocation2 + $0xa2] sm:$0xff]
        %v368 = vld [vmem:[#allocation2 + $0xb2] sm:$0xff]
        %v369 = vld [vmem:[#allocation2 + $0xc2] sm:$0xff]
        %v370 = vld [vmem:[#allocation2 + $0xd2] sm:$0xff]
        %v371 = vld [vmem:[#allocation2 + $0xe2] sm:$0xff]
        %v372 = vld [vmem:[#allocation2 + $0xf2] sm:$0xff]
        %v373 = vpack.c.bf16 %v358, %v357
        %v374 = vpack.c.bf16 %v360, %v359
        %v375 = vpack.c.bf16 %v362, %v361
        %v376 = vpack.c.bf16 %v364, %v363
        %v377 = vpack.c.bf16 %v366, %v365
        %v378 = vpack.c.bf16 %v368, %v367
        %v379 = vpack.c.bf16 %v370, %v369
        %v380 = vpack.c.bf16 %v372, %v371
        %381 = vst [vmem:[#allocation3 + $0x10] sm:$0xff] %v373
        %382 = vst [vmem:[#allocation3 + $0x58] sm:$0xff] %v374
        %383 = vst [vmem:[#allocation3 + $0xa0] sm:$0xff] %v375
        %384 = vst [vmem:[#allocation3 + $0xe8] sm:$0xff] %v376
        %385 = vst [vmem:[#allocation3 + $0x130] sm:$0xff] %v377
        %386 = vst [vmem:[#allocation3 + $0x178] sm:$0xff] %v378
        %387 = vst [vmem:[#allocation3 + $0x1c0] sm:$0xff] %v379
        %388 = vst [vmem:[#allocation3 + $0x208] sm:$0xff] %v380
        %v389 = vld [vmem:[%s276] sm:$0xff]
        %v390 = vld [vmem:[%s276 + $0x10] sm:$0xff]
        %v391 = vld [vmem:[%s276 + $0x20] sm:$0xff]
        %v392 = vld [vmem:[%s276 + $0x30] sm:$0xff]
        %v393 = vld [vmem:[%s276 + $0x40] sm:$0xff]
        %v394 = vld [vmem:[%s276 + $0x50] sm:$0xff]
        %v395 = vld [vmem:[%s276 + $0x60] sm:$0xff]
        %v396 = vld [vmem:[%s276 + $0x70] sm:$0xff]
        %v397 = vld [vmem:[%s276 + $0x80] sm:$0xff]
        %v398 = vld [vmem:[%s276 + $0x90] sm:$0xff]
        %v399 = vld [vmem:[%s276 + $0xa0] sm:$0xff]
        %v400 = vld [vmem:[%s276 + $0xb0] sm:$0xff]
        %v401 = vld [vmem:[%s276 + $0xc0] sm:$0xff]
        %v402 = vld [vmem:[%s276 + $0xd0] sm:$0xff]
        %v403 = vld [vmem:[%s276 + $0xe0] sm:$0xff]
        %v404 = vld [vmem:[%s276 + $0xf0] sm:$0xff]
        %v405 = vpack.c.bf16 %v390, %v389
        %v406 = vpack.c.bf16 %v392, %v391
        %v407 = vpack.c.bf16 %v394, %v393
        %v408 = vpack.c.bf16 %v396, %v395
        %v409 = vpack.c.bf16 %v398, %v397
        %v410 = vpack.c.bf16 %v400, %v399
        %v411 = vpack.c.bf16 %v402, %v401
        %v412 = vpack.c.bf16 %v404, %v403
        %413 = vst [vmem:[#allocation3 + $0x18] sm:$0xff] %v405
        %414 = vst [vmem:[#allocation3 + $0x60] sm:$0xff] %v406
        %415 = vst [vmem:[#allocation3 + $0xa8] sm:$0xff] %v407
        %416 = vst [vmem:[#allocation3 + $0xf0] sm:$0xff] %v408
        %417 = vst [vmem:[#allocation3 + $0x138] sm:$0xff] %v409
        %418 = vst [vmem:[#allocation3 + $0x180] sm:$0xff] %v410
        %419 = vst [vmem:[#allocation3 + $0x1c8] sm:$0xff] %v411
        %420 = vst [vmem:[#allocation3 + $0x210] sm:$0xff] %v412
        %v421 = vld [vmem:[%s276 + $0x1] sm:$0xff]
        %v422 = vld [vmem:[%s276 + $0x11] sm:$0xff]
        %v423 = vld [vmem:[%s276 + $0x21] sm:$0xff]
        %v424 = vld [vmem:[%s276 + $0x31] sm:$0xff]
        %v425 = vld [vmem:[%s276 + $0x41] sm:$0xff]
        %v426 = vld [vmem:[%s276 + $0x51] sm:$0xff]
        %v427 = vld [vmem:[%s276 + $0x61] sm:$0xff]
        %v428 = vld [vmem:[%s276 + $0x71] sm:$0xff]
        %v429 = vld [vmem:[%s276 + $0x81] sm:$0xff]
        %v430 = vld [vmem:[%s276 + $0x91] sm:$0xff]
        %v431 = vld [vmem:[%s276 + $0xa1] sm:$0xff]
        %v432 = vld [vmem:[%s276 + $0xb1] sm:$0xff]
        %v433 = vld [vmem:[%s276 + $0xc1] sm:$0xff]
        %v434 = vld [vmem:[%s276 + $0xd1] sm:$0xff]
        %v435 = vld [vmem:[%s276 + $0xe1] sm:$0xff]
        %v436 = vld [vmem:[%s276 + $0xf1] sm:$0xff]
        %v437 = vpack.c.bf16 %v422, %v421
        %v438 = vpack.c.bf16 %v424, %v423
        %v439 = vpack.c.bf16 %v426, %v425
        %v440 = vpack.c.bf16 %v428, %v427
        %v441 = vpack.c.bf16 %v430, %v429
        %v442 = vpack.c.bf16 %v432, %v431
        %v443 = vpack.c.bf16 %v434, %v433
        %v444 = vpack.c.bf16 %v436, %v435
        %445 = vst [vmem:[#allocation3 + $0x20] sm:$0xff] %v437
        %446 = vst [vmem:[#allocation3 + $0x68] sm:$0xff] %v438
        %447 = vst [vmem:[#allocation3 + $0xb0] sm:$0xff] %v439
        %448 = vst [vmem:[#allocation3 + $0xf8] sm:$0xff] %v440
        %449 = vst [vmem:[#allocation3 + $0x140] sm:$0xff] %v441
        %450 = vst [vmem:[#allocation3 + $0x188] sm:$0xff] %v442
        %451 = vst [vmem:[#allocation3 + $0x1d0] sm:$0xff] %v443
        %452 = vst [vmem:[#allocation3 + $0x218] sm:$0xff] %v444
        %v453 = vld [vmem:[%s276 + $0x2] sm:$0xff]
        %v454 = vld [vmem:[%s276 + $0x12] sm:$0xff]
        %v455 = vld [vmem:[%s276 + $0x22] sm:$0xff]
        %v456 = vld [vmem:[%s276 + $0x32] sm:$0xff]
        %v457 = vld [vmem:[%s276 + $0x42] sm:$0xff]
        %v458 = vld [vmem:[%s276 + $0x52] sm:$0xff]
        %v459 = vld [vmem:[%s276 + $0x62] sm:$0xff]
        %v460 = vld [vmem:[%s276 + $0x72] sm:$0xff]
        %v461 = vld [vmem:[%s276 + $0x82] sm:$0xff]
        %v462 = vld [vmem:[%s276 + $0x92] sm:$0xff]
        %v463 = vld [vmem:[%s276 + $0xa2] sm:$0xff]
        %v464 = vld [vmem:[%s276 + $0xb2] sm:$0xff]
        %v465 = vld [vmem:[%s276 + $0xc2] sm:$0xff]
        %v466 = vld [vmem:[%s276 + $0xd2] sm:$0xff]
        %v467 = vld [vmem:[%s276 + $0xe2] sm:$0xff]
        %v468 = vld [vmem:[%s276 + $0xf2] sm:$0xff]
        %v469 = vpack.c.bf16 %v454, %v453
        %v470 = vpack.c.bf16 %v456, %v455
        %v471 = vpack.c.bf16 %v458, %v457
        %v472 = vpack.c.bf16 %v460, %v459
        %v473 = vpack.c.bf16 %v462, %v461
        %v474 = vpack.c.bf16 %v464, %v463
        %v475 = vpack.c.bf16 %v466, %v465
        %v476 = vpack.c.bf16 %v468, %v467
        %477 = vst [vmem:[#allocation3 + $0x28] sm:$0xff] %v469
        %478 = vst [vmem:[#allocation3 + $0x70] sm:$0xff] %v470
        %479 = vst [vmem:[#allocation3 + $0xb8] sm:$0xff] %v471
        %480 = vst [vmem:[#allocation3 + $0x100] sm:$0xff] %v472
        %481 = vst [vmem:[#allocation3 + $0x148] sm:$0xff] %v473
        %482 = vst [vmem:[#allocation3 + $0x190] sm:$0xff] %v474
        %483 = vst [vmem:[#allocation3 + $0x1d8] sm:$0xff] %v475
        %484 = vst [vmem:[#allocation3 + $0x220] sm:$0xff] %v476
        %s485 = scalar_lea.vmem [#allocation2], 32
        %v486 = vld [vmem:[%s485] sm:$0xff]
        %v487 = vld [vmem:[%s485 + $0x10] sm:$0xff]
        %v488 = vld [vmem:[%s485 + $0x20] sm:$0xff]
        %v489 = vld [vmem:[%s485 + $0x30] sm:$0xff]
        %v490 = vld [vmem:[%s485 + $0x40] sm:$0xff]
        %v491 = vld [vmem:[%s485 + $0x50] sm:$0xff]
        %v492 = vld [vmem:[%s485 + $0x60] sm:$0xff]
        %v493 = vld [vmem:[%s485 + $0x70] sm:$0xff]
        %v494 = vld [vmem:[%s485 + $0x80] sm:$0xff]
        %v495 = vld [vmem:[%s485 + $0x90] sm:$0xff]
        %v496 = vld [vmem:[%s485 + $0xa0] sm:$0xff]
        %v497 = vld [vmem:[%s485 + $0xb0] sm:$0xff]
        %v498 = vld [vmem:[%s485 + $0xc0] sm:$0xff]
        %v499 = vld [vmem:[%s485 + $0xd0] sm:$0xff]
        %v500 = vld [vmem:[%s485 + $0xe0] sm:$0xff]
        %v501 = vld [vmem:[%s485 + $0xf0] sm:$0xff]
        %v502 = vpack.c.bf16 %v487, %v486
        %v503 = vpack.c.bf16 %v489, %v488
        %v504 = vpack.c.bf16 %v491, %v490
        %v505 = vpack.c.bf16 %v493, %v492
        %v506 = vpack.c.bf16 %v495, %v494
        %v507 = vpack.c.bf16 %v497, %v496
        %v508 = vpack.c.bf16 %v499, %v498
        %v509 = vpack.c.bf16 %v501, %v500
        %510 = vst [vmem:[#allocation3 + $0x30] sm:$0xff] %v502
        %511 = vst [vmem:[#allocation3 + $0x78] sm:$0xff] %v503
        %512 = vst [vmem:[#allocation3 + $0xc0] sm:$0xff] %v504
        %513 = vst [vmem:[#allocation3 + $0x108] sm:$0xff] %v505
        %514 = vst [vmem:[#allocation3 + $0x150] sm:$0xff] %v506
        %515 = vst [vmem:[#allocation3 + $0x198] sm:$0xff] %v507
        %516 = vst [vmem:[#allocation3 + $0x1e0] sm:$0xff] %v508
        %517 = vst [vmem:[#allocation3 + $0x228] sm:$0xff] %v509
        %v518 = vld [vmem:[%s485 + $0x1] sm:$0xff]
        %v519 = vld [vmem:[%s485 + $0x11] sm:$0xff]
        %v520 = vld [vmem:[%s485 + $0x21] sm:$0xff]
        %v521 = vld [vmem:[%s485 + $0x31] sm:$0xff]
        %v522 = vld [vmem:[%s485 + $0x41] sm:$0xff]
        %v523 = vld [vmem:[%s485 + $0x51] sm:$0xff]
        %v524 = vld [vmem:[%s485 + $0x61] sm:$0xff]
        %v525 = vld [vmem:[%s485 + $0x71] sm:$0xff]
        %v526 = vld [vmem:[%s485 + $0x81] sm:$0xff]
        %v527 = vld [vmem:[%s485 + $0x91] sm:$0xff]
        %v528 = vld [vmem:[%s485 + $0xa1] sm:$0xff]
        %v529 = vld [vmem:[%s485 + $0xb1] sm:$0xff]
        %v530 = vld [vmem:[%s485 + $0xc1] sm:$0xff]
        %v531 = vld [vmem:[%s485 + $0xd1] sm:$0xff]
        %v532 = vld [vmem:[%s485 + $0xe1] sm:$0xff]
        %v533 = vld [vmem:[%s485 + $0xf1] sm:$0xff]
        %v534 = vpack.c.bf16 %v519, %v518
        %v535 = vpack.c.bf16 %v521, %v520
        %v536 = vpack.c.bf16 %v523, %v522
        %v537 = vpack.c.bf16 %v525, %v524
        %v538 = vpack.c.bf16 %v527, %v526
        %v539 = vpack.c.bf16 %v529, %v528
        %v540 = vpack.c.bf16 %v531, %v530
        %v541 = vpack.c.bf16 %v533, %v532
        %542 = vst [vmem:[#allocation3 + $0x38] sm:$0xff] %v534
        %543 = vst [vmem:[#allocation3 + $0x80] sm:$0xff] %v535
        %544 = vst [vmem:[#allocation3 + $0xc8] sm:$0xff] %v536
        %545 = vst [vmem:[#allocation3 + $0x110] sm:$0xff] %v537
        %546 = vst [vmem:[#allocation3 + $0x158] sm:$0xff] %v538
        %547 = vst [vmem:[#allocation3 + $0x1a0] sm:$0xff] %v539
        %548 = vst [vmem:[#allocation3 + $0x1e8] sm:$0xff] %v540
        %549 = vst [vmem:[#allocation3 + $0x230] sm:$0xff] %v541
        %v550 = vld [vmem:[%s485 + $0x2] sm:$0xff]
        %v551 = vld [vmem:[%s485 + $0x12] sm:$0xff]
        %v552 = vld [vmem:[%s485 + $0x22] sm:$0xff]
        %v553 = vld [vmem:[%s485 + $0x32] sm:$0xff]
        %v554 = vld [vmem:[%s485 + $0x42] sm:$0xff]
        %v555 = vld [vmem:[%s485 + $0x52] sm:$0xff]
        %v556 = vld [vmem:[%s485 + $0x62] sm:$0xff]
        %v557 = vld [vmem:[%s485 + $0x72] sm:$0xff]
        %v558 = vld [vmem:[%s485 + $0x82] sm:$0xff]
        %v559 = vld [vmem:[%s485 + $0x92] sm:$0xff]
        %v560 = vld [vmem:[%s485 + $0xa2] sm:$0xff]
        %v561 = vld [vmem:[%s485 + $0xb2] sm:$0xff]
        %v562 = vld [vmem:[%s485 + $0xc2] sm:$0xff]
        %v563 = vld [vmem:[%s485 + $0xd2] sm:$0xff]
        %v564 = vld [vmem:[%s485 + $0xe2] sm:$0xff]
        %v565 = vld [vmem:[%s485 + $0xf2] sm:$0xff]
        %v566 = vpack.c.bf16 %v551, %v550
        %v567 = vpack.c.bf16 %v553, %v552
        %v568 = vpack.c.bf16 %v555, %v554
        %v569 = vpack.c.bf16 %v557, %v556
        %v570 = vpack.c.bf16 %v559, %v558
        %v571 = vpack.c.bf16 %v561, %v560
        %v572 = vpack.c.bf16 %v563, %v562
        %v573 = vpack.c.bf16 %v565, %v564
        %574 = vst [vmem:[#allocation3 + $0x40] sm:$0xff] %v566
        %575 = vst [vmem:[#allocation3 + $0x88] sm:$0xff] %v567
        %576 = vst [vmem:[#allocation3 + $0xd0] sm:$0xff] %v568
        %577 = vst [vmem:[#allocation3 + $0x118] sm:$0xff] %v569
        %578 = vst [vmem:[#allocation3 + $0x160] sm:$0xff] %v570
        %579 = vst [vmem:[#allocation3 + $0x1a8] sm:$0xff] %v571
        %580 = vst [vmem:[#allocation3 + $0x1f0] sm:$0xff] %v572
        %581 = vst [vmem:[#allocation3 + $0x238] sm:$0xff] %v573
        %v582 = vld [vmem:[#allocation3] sm:$0xff]
        %v583 = vld [vmem:[#allocation3 + $0x8] sm:$0xff]
        %v584 = vld [vmem:[#allocation3 + $0x10] sm:$0xff]
        %v585 = vld [vmem:[#allocation3 + $0x18] sm:$0xff]
        %v586 = vld [vmem:[#allocation3 + $0x20] sm:$0xff]
        %v587 = vld [vmem:[#allocation3 + $0x28] sm:$0xff]
        %v588 = vld [vmem:[#allocation3 + $0x30] sm:$0xff]
        %v589 = vld [vmem:[#allocation3 + $0x38] sm:$0xff]
        %v590 = vld [vmem:[#allocation3 + $0x40] sm:$0xff]
        %v591 = vld [vmem:[#allocation3 + $0x48] sm:$0xff]
        %v592 = vld [vmem:[#allocation3 + $0x50] sm:$0xff]
        %v593 = vld [vmem:[#allocation3 + $0x58] sm:$0xff]
        %v594 = vld [vmem:[#allocation3 + $0x60] sm:$0xff]
        %v595 = vld [vmem:[#allocation3 + $0x68] sm:$0xff]
        %v596 = vld [vmem:[#allocation3 + $0x70] sm:$0xff]
        %v597 = vld [vmem:[#allocation3 + $0x78] sm:$0xff]
        %v598 = vld [vmem:[#allocation3 + $0x80] sm:$0xff]
        %v599 = vld [vmem:[#allocation3 + $0x88] sm:$0xff]
        %v600 = vld [vmem:[#allocation3 + $0x90] sm:$0xff]
        %v601 = vld [vmem:[#allocation3 + $0x98] sm:$0xff]
        %v602 = vld [vmem:[#allocation3 + $0xa0] sm:$0xff]
        %v603 = vld [vmem:[#allocation3 + $0xa8] sm:$0xff]
        %v604 = vld [vmem:[#allocation3 + $0xb0] sm:$0xff]
        %v605 = vld [vmem:[#allocation3 + $0xb8] sm:$0xff]
        %v606 = vld [vmem:[#allocation3 + $0xc0] sm:$0xff]
        %v607 = vld [vmem:[#allocation3 + $0xc8] sm:$0xff]
        %v608 = vld [vmem:[#allocation3 + $0xd0] sm:$0xff]
        %v609 = vld [vmem:[#allocation3 + $0xd8] sm:$0xff]
        %v610 = vld [vmem:[#allocation3 + $0xe0] sm:$0xff]
        %v611 = vld [vmem:[#allocation3 + $0xe8] sm:$0xff]
        %v612 = vld [vmem:[#allocation3 + $0xf0] sm:$0xff]
        %v613 = vld [vmem:[#allocation3 + $0xf8] sm:$0xff]
        %v614 = vld [vmem:[#allocation3 + $0x100] sm:$0xff]
        %v615 = vld [vmem:[#allocation3 + $0x108] sm:$0xff]
        %v616 = vld [vmem:[#allocation3 + $0x110] sm:$0xff]
        %v617 = vld [vmem:[#allocation3 + $0x118] sm:$0xff]
        %v618 = vld [vmem:[#allocation3 + $0x120] sm:$0xff]
        %v619 = vld [vmem:[#allocation3 + $0x128] sm:$0xff]
        %v620 = vld [vmem:[#allocation3 + $0x130] sm:$0xff]
        %v621 = vld [vmem:[#allocation3 + $0x138] sm:$0xff]
        %v622 = vld [vmem:[#allocation3 + $0x140] sm:$0xff]
        %v623 = vld [vmem:[#allocation3 + $0x148] sm:$0xff]
        %v624 = vld [vmem:[#allocation3 + $0x150] sm:$0xff]
        %v625 = vld [vmem:[#allocation3 + $0x158] sm:$0xff]
        %v626 = vld [vmem:[#allocation3 + $0x160] sm:$0xff]
        %v627 = vld [vmem:[#allocation3 + $0x168] sm:$0xff]
        %v628 = vld [vmem:[#allocation3 + $0x170] sm:$0xff]
        %v629 = vld [vmem:[#allocation3 + $0x178] sm:$0xff]
        %v630 = vld [vmem:[#allocation3 + $0x180] sm:$0xff]
        %v631 = vld [vmem:[#allocation3 + $0x188] sm:$0xff]
        %v632 = vld [vmem:[#allocation3 + $0x190] sm:$0xff]
        %v633 = vld [vmem:[#allocation3 + $0x198] sm:$0xff]
        %v634 = vld [vmem:[#allocation3 + $0x1a0] sm:$0xff]
        %v635 = vld [vmem:[#allocation3 + $0x1a8] sm:$0xff]
        %v636 = vld [vmem:[#allocation3 + $0x1b0] sm:$0xff]
        %v637 = vld [vmem:[#allocation3 + $0x1b8] sm:$0xff]
        %v638 = vld [vmem:[#allocation3 + $0x1c0] sm:$0xff]
        %v639 = vld [vmem:[#allocation3 + $0x1c8] sm:$0xff]
        %v640 = vld [vmem:[#allocation3 + $0x1d0] sm:$0xff]
        %v641 = vld [vmem:[#allocation3 + $0x1d8] sm:$0xff]
        %v642 = vld [vmem:[#allocation3 + $0x1e0] sm:$0xff]
        %v643 = vld [vmem:[#allocation3 + $0x1e8] sm:$0xff]
        %v644 = vld [vmem:[#allocation3 + $0x1f0] sm:$0xff]
        %v645 = vld [vmem:[#allocation3 + $0x1f8] sm:$0xff]
        %v646 = vld [vmem:[#allocation3 + $0x200] sm:$0xff]
        %v647 = vld [vmem:[#allocation3 + $0x208] sm:$0xff]
        %v648 = vld [vmem:[#allocation3 + $0x210] sm:$0xff]
        %v649 = vld [vmem:[#allocation3 + $0x218] sm:$0xff]
        %v650 = vld [vmem:[#allocation3 + $0x220] sm:$0xff]
        %v651 = vld [vmem:[#allocation3 + $0x228] sm:$0xff]
        %v652 = vld [vmem:[#allocation3 + $0x230] sm:$0xff]
        %v653 = vld [vmem:[#allocation3 + $0x238] sm:$0xff]
        %v654 = vld [vmem:[%s1] sm:$0xf]
        %v655 = vld [vmem:[%s1 + $0x4] sm:$0xf]
        %v656 = vld [vmem:[%s1 + $0x8] sm:$0xf]
        %v657 = vld [vmem:[%s1 + $0xc] sm:$0xf]
        %v658 = vld [vmem:[%s1 + $0x10] sm:$0xf]
        %v659 = vld [vmem:[%s1 + $0x14] sm:$0xf]
        %v660 = vld [vmem:[%s1 + $0x18] sm:$0xf]
        %v661 = vld [vmem:[%s1 + $0x1c] sm:$0xf]
        %v662 = vld [vmem:[%s1 + $0x20] sm:$0xf]
        %v663 = vld [vmem:[%s1 + $0x24] sm:$0xf]
        %v664 = vld [vmem:[%s1 + $0x28] sm:$0xf]
        %v665 = vld [vmem:[%s1 + $0x2c] sm:$0xf]
        %v666 = vld [vmem:[%s1 + $0x30] sm:$0xf]
        %v667 = vld [vmem:[%s1 + $0x34] sm:$0xf]
        %v668 = vld [vmem:[%s1 + $0x38] sm:$0xf]
        %v669 = vld [vmem:[%s1 + $0x3c] sm:$0xf]
        %v670 = vld [vmem:[%s1 + $0x40] sm:$0xf]
        %v671 = vld [vmem:[%s1 + $0x44] sm:$0xf]
        %v672 = vld [vmem:[%s1 + $0x48] sm:$0xf]
        %v673 = vld [vmem:[%s1 + $0x4c] sm:$0xf]
        %v674 = vld [vmem:[%s1 + $0x50] sm:$0xf]
        %v675 = vld [vmem:[%s1 + $0x54] sm:$0xf]
        %v676 = vld [vmem:[%s1 + $0x58] sm:$0xf]
        %v677 = vld [vmem:[%s1 + $0x5c] sm:$0xf]
        %v678 = vld [vmem:[%s1 + $0x60] sm:$0xf]
        %v679 = vld [vmem:[%s1 + $0x64] sm:$0xf]
        %v680 = vld [vmem:[%s1 + $0x68] sm:$0xf]
        %v681 = vld [vmem:[%s1 + $0x6c] sm:$0xf]
        %v682 = vld [vmem:[%s1 + $0x70] sm:$0xf]
        %v683 = vld [vmem:[%s1 + $0x74] sm:$0xf]
        %v684 = vld [vmem:[%s1 + $0x78] sm:$0xf]
        %v685 = vld [vmem:[%s1 + $0x7c] sm:$0xf]
        %v686 = vld [vmem:[%s1 + $0x80] sm:$0xf]
        %v687 = vld [vmem:[%s1 + $0x84] sm:$0xf]
        %v688 = vld [vmem:[%s1 + $0x88] sm:$0xf]
        %v689 = vld [vmem:[%s1 + $0x8c] sm:$0xf]
        %v690 = vld [vmem:[%s1 + $0x90] sm:$0xf]
        %v691 = vld [vmem:[%s1 + $0x94] sm:$0xf]
        %v692 = vld [vmem:[%s1 + $0x98] sm:$0xf]
        %v693 = vld [vmem:[%s1 + $0x9c] sm:$0xf]
        %v694 = vld [vmem:[%s1 + $0xa0] sm:$0xf]
        %v695 = vld [vmem:[%s1 + $0xa4] sm:$0xf]
        %v696 = vld [vmem:[%s1 + $0xa8] sm:$0xf]
        %v697 = vld [vmem:[%s1 + $0xac] sm:$0xf]
        %v698 = vld [vmem:[%s1 + $0xb0] sm:$0xf]
        %v699 = vld [vmem:[%s1 + $0xb4] sm:$0xf]
        %v700 = vld [vmem:[%s1 + $0xb8] sm:$0xf]
        %v701 = vld [vmem:[%s1 + $0xbc] sm:$0xf]
        %v702 = vld [vmem:[%s1 + $0xc0] sm:$0xf]
        %v703 = vld [vmem:[%s1 + $0xc4] sm:$0xf]
        %v704 = vld [vmem:[%s1 + $0xc8] sm:$0xf]
        %v705 = vld [vmem:[%s1 + $0xcc] sm:$0xf]
        %v706 = vld [vmem:[%s1 + $0xd0] sm:$0xf]
        %v707 = vld [vmem:[%s1 + $0xd4] sm:$0xf]
        %v708 = vld [vmem:[%s1 + $0xd8] sm:$0xf]
        %v709 = vld [vmem:[%s1 + $0xdc] sm:$0xf]
        %v710 = vld [vmem:[%s1 + $0xe0] sm:$0xf]
        %v711 = vld [vmem:[%s1 + $0xe4] sm:$0xf]
        %v712 = vld [vmem:[%s1 + $0xe8] sm:$0xf]
        %v713 = vld [vmem:[%s1 + $0xec] sm:$0xf]
        %v714 = vld [vmem:[%s1 + $0xf0] sm:$0xf]
        %v715 = vld [vmem:[%s1 + $0xf4] sm:$0xf]
        %v716 = vld [vmem:[%s1 + $0xf8] sm:$0xf]
        %v717 = vld [vmem:[%s1 + $0xfc] sm:$0xf]
        %v718 = vld [vmem:[%s1 + $0x100] sm:$0xf]
        %v719 = vld [vmem:[%s1 + $0x104] sm:$0xf]
        %v720 = vld [vmem:[%s1 + $0x108] sm:$0xf]
        %v721 = vld [vmem:[%s1 + $0x10c] sm:$0xf]
        %v722 = vld [vmem:[%s1 + $0x110] sm:$0xf]
        %v723 = vld [vmem:[%s1 + $0x114] sm:$0xf]
        %v724 = vld [vmem:[%s1 + $0x118] sm:$0xf]
        %v725 = vld [vmem:[%s1 + $0x11c] sm:$0xf]
        %v726 = vld [vmem:[%s1 + $0x120] sm:$0xf]
        %v727 = vld [vmem:[%s1 + $0x124] sm:$0xf]
        %v728 = vld [vmem:[%s1 + $0x128] sm:$0xf]
        %v729 = vld [vmem:[%s1 + $0x12c] sm:$0xf]
        %v730 = vld [vmem:[%s1 + $0x130] sm:$0xf]
        %v731 = vld [vmem:[%s1 + $0x134] sm:$0xf]
        %v732 = vld [vmem:[%s1 + $0x138] sm:$0xf]
        %v733 = vld [vmem:[%s1 + $0x13c] sm:$0xf]
        %v734 = vld [vmem:[%s1 + $0x140] sm:$0xf]
        %v735 = vld [vmem:[%s1 + $0x144] sm:$0xf]
        %v736 = vld [vmem:[%s1 + $0x148] sm:$0xf]
        %v737 = vld [vmem:[%s1 + $0x14c] sm:$0xf]
        %v738 = vld [vmem:[%s1 + $0x150] sm:$0xf]
        %v739 = vld [vmem:[%s1 + $0x154] sm:$0xf]
        %v740 = vld [vmem:[%s1 + $0x158] sm:$0xf]
        %v741 = vld [vmem:[%s1 + $0x15c] sm:$0xf]
        %v742 = vld [vmem:[%s1 + $0x160] sm:$0xf]
        %v743 = vld [vmem:[%s1 + $0x164] sm:$0xf]
        %v744 = vld [vmem:[%s1 + $0x168] sm:$0xf]
        %v745 = vld [vmem:[%s1 + $0x16c] sm:$0xf]
        %v746 = vld [vmem:[%s1 + $0x170] sm:$0xf]
        %v747 = vld [vmem:[%s1 + $0x174] sm:$0xf]
        %v748 = vld [vmem:[%s1 + $0x178] sm:$0xf]
        %v749 = vld [vmem:[%s1 + $0x17c] sm:$0xf]
        %v750 = vld [vmem:[%s1 + $0x180] sm:$0xf]
        %v751 = vld [vmem:[%s1 + $0x184] sm:$0xf]
        %v752 = vld [vmem:[%s1 + $0x188] sm:$0xf]
        %v753 = vld [vmem:[%s1 + $0x18c] sm:$0xf]
        %v754 = vld [vmem:[%s1 + $0x190] sm:$0xf]
        %v755 = vld [vmem:[%s1 + $0x194] sm:$0xf]
        %v756 = vld [vmem:[%s1 + $0x198] sm:$0xf]
        %v757 = vld [vmem:[%s1 + $0x19c] sm:$0xf]
        %v758 = vld [vmem:[%s1 + $0x1a0] sm:$0xf]
        %v759 = vld [vmem:[%s1 + $0x1a4] sm:$0xf]
        %v760 = vld [vmem:[%s1 + $0x1a8] sm:$0xf]
        %v761 = vld [vmem:[%s1 + $0x1ac] sm:$0xf]
        %v762 = vld [vmem:[%s1 + $0x1b0] sm:$0xf]
        %v763 = vld [vmem:[%s1 + $0x1b4] sm:$0xf]
        %v764 = vld [vmem:[%s1 + $0x1b8] sm:$0xf]
        %v765 = vld [vmem:[%s1 + $0x1bc] sm:$0xf]
        %v766 = vld [vmem:[%s1 + $0x1c0] sm:$0xf]
        %v767 = vld [vmem:[%s1 + $0x1c4] sm:$0xf]
        %v768 = vld [vmem:[%s1 + $0x1c8] sm:$0xf]
        %v769 = vld [vmem:[%s1 + $0x1cc] sm:$0xf]
        %v770 = vld [vmem:[%s1 + $0x1d0] sm:$0xf]
        %v771 = vld [vmem:[%s1 + $0x1d4] sm:$0xf]
        %v772 = vld [vmem:[%s1 + $0x1d8] sm:$0xf]
        %v773 = vld [vmem:[%s1 + $0x1dc] sm:$0xf]
        %v774 = vld [vmem:[%s1 + $0x1e0] sm:$0xf]
        %v775 = vld [vmem:[%s1 + $0x1e4] sm:$0xf]
        %v776 = vld [vmem:[%s1 + $0x1e8] sm:$0xf]
        %v777 = vld [vmem:[%s1 + $0x1ec] sm:$0xf]
        %v778 = vld [vmem:[%s1 + $0x1f0] sm:$0xf]
        %v779 = vld [vmem:[%s1 + $0x1f4] sm:$0xf]
        %v780 = vld [vmem:[%s1 + $0x1f8] sm:$0xf]
        %v781 = vld [vmem:[%s1 + $0x1fc] sm:$0xf]
        %v782 = vld [vmem:[%s1 + $0x200] sm:$0xf]
        %v783 = vld [vmem:[%s1 + $0x204] sm:$0xf]
        %v784 = vld [vmem:[%s1 + $0x208] sm:$0xf]
        %v785 = vld [vmem:[%s1 + $0x20c] sm:$0xf]
        %v786 = vld [vmem:[%s1 + $0x210] sm:$0xf]
        %v787 = vld [vmem:[%s1 + $0x214] sm:$0xf]
        %v788 = vld [vmem:[%s1 + $0x218] sm:$0xf]
        %v789 = vld [vmem:[%s1 + $0x21c] sm:$0xf]
        %v790 = vld [vmem:[%s1 + $0x220] sm:$0xf]
        %v791 = vld [vmem:[%s1 + $0x224] sm:$0xf]
        %v792 = vld [vmem:[%s1 + $0x228] sm:$0xf]
        %v793 = vld [vmem:[%s1 + $0x22c] sm:$0xf]
        %v794 = vld [vmem:[%s1 + $0x230] sm:$0xf]
        %v795 = vld [vmem:[%s1 + $0x234] sm:$0xf]
        %v796 = vld [vmem:[%s1 + $0x238] sm:$0xf]
        %v797 = vld [vmem:[%s1 + $0x23c] sm:$0xf]
        %v798 = vld [vmem:[%s2] sm:$0x1]
        %v800 = vlaneseq
        %v801 = vshrl.u32 %v800, 7
        %v802 = vsub.s32 0, %v801
        %v803 = vrot.slane %v798, %v802
        %v949 = vunpack.c.l.b16 %v654
        %v950 = vunpack.c.l.b16 %v655
        %v951 = vunpack.c.l.b16 %v656
        %v952 = vunpack.c.l.b16 %v657
        %v953 = vunpack.c.l.b16 %v658
        %v954 = vunpack.c.l.b16 %v659
        %v955 = vunpack.c.l.b16 %v660
        %v956 = vunpack.c.l.b16 %v661
        %v957 = vunpack.c.l.b16 %v662
        %v958 = vunpack.c.l.b16 %v663
        %v959 = vunpack.c.l.b16 %v664
        %v960 = vunpack.c.l.b16 %v665
        %v961 = vunpack.c.l.b16 %v666
        %v962 = vunpack.c.l.b16 %v667
        %v963 = vunpack.c.l.b16 %v668
        %v964 = vunpack.c.l.b16 %v669
        %v965 = vunpack.c.l.b16 %v670
        %v966 = vunpack.c.l.b16 %v671
        %v967 = vunpack.c.l.b16 %v672
        %v968 = vunpack.c.l.b16 %v673
        %v969 = vunpack.c.l.b16 %v674
        %v970 = vunpack.c.l.b16 %v675
        %v971 = vunpack.c.l.b16 %v676
        %v972 = vunpack.c.l.b16 %v677
        %v973 = vunpack.c.l.b16 %v678
        %v974 = vunpack.c.l.b16 %v679
        %v975 = vunpack.c.l.b16 %v680
        %v976 = vunpack.c.l.b16 %v681
        %v977 = vunpack.c.l.b16 %v682
        %v978 = vunpack.c.l.b16 %v683
        %v979 = vunpack.c.l.b16 %v684
        %v980 = vunpack.c.l.b16 %v685
        %v981 = vunpack.c.l.b16 %v686
        %v982 = vunpack.c.l.b16 %v687
        %v983 = vunpack.c.l.b16 %v688
        %v984 = vunpack.c.l.b16 %v689
        %v985 = vunpack.c.l.b16 %v690
        %v986 = vunpack.c.l.b16 %v691
        %v987 = vunpack.c.l.b16 %v692
        %v988 = vunpack.c.l.b16 %v693
        %v989 = vunpack.c.l.b16 %v694
        %v990 = vunpack.c.l.b16 %v695
        %v991 = vunpack.c.l.b16 %v696
        %v992 = vunpack.c.l.b16 %v697
        %v993 = vunpack.c.l.b16 %v698
        %v994 = vunpack.c.l.b16 %v699
        %v995 = vunpack.c.l.b16 %v700
        %v996 = vunpack.c.l.b16 %v701
        %v997 = vunpack.c.l.b16 %v702
        %v998 = vunpack.c.l.b16 %v703
        %v999 = vunpack.c.l.b16 %v704
        %v1000 = vunpack.c.l.b16 %v705
        %v1001 = vunpack.c.l.b16 %v706
        %v1002 = vunpack.c.l.b16 %v707
        %v1003 = vunpack.c.l.b16 %v708
        %v1004 = vunpack.c.l.b16 %v709
        %v1005 = vunpack.c.l.b16 %v710
        %v1006 = vunpack.c.l.b16 %v711
        %v1007 = vunpack.c.l.b16 %v712
        %v1008 = vunpack.c.l.b16 %v713
        %v1009 = vunpack.c.l.b16 %v714
        %v1010 = vunpack.c.l.b16 %v715
        %v1011 = vunpack.c.l.b16 %v716
        %v1012 = vunpack.c.l.b16 %v717
        %v1013 = vunpack.c.l.b16 %v718
        %v1014 = vunpack.c.l.b16 %v719
        %v1015 = vunpack.c.l.b16 %v720
        %v1016 = vunpack.c.l.b16 %v721
        %v1017 = vunpack.c.l.b16 %v722
        %v1018 = vunpack.c.l.b16 %v723
        %v1019 = vunpack.c.l.b16 %v724
        %v1020 = vunpack.c.l.b16 %v725
        %v1021 = vunpack.c.l.b16 %v726
        %v1022 = vunpack.c.l.b16 %v727
        %v1023 = vunpack.c.l.b16 %v728
        %v1024 = vunpack.c.l.b16 %v729
        %v1025 = vunpack.c.l.b16 %v730
        %v1026 = vunpack.c.l.b16 %v731
        %v1027 = vunpack.c.l.b16 %v732
        %v1028 = vunpack.c.l.b16 %v733
        %v1029 = vunpack.c.l.b16 %v734
        %v1030 = vunpack.c.l.b16 %v735
        %v1031 = vunpack.c.l.b16 %v736
        %v1032 = vunpack.c.l.b16 %v737
        %v1033 = vunpack.c.l.b16 %v738
        %v1034 = vunpack.c.l.b16 %v739
        %v1035 = vunpack.c.l.b16 %v740
        %v1036 = vunpack.c.l.b16 %v741
        %v1037 = vunpack.c.l.b16 %v742
        %v1038 = vunpack.c.l.b16 %v743
        %v1039 = vunpack.c.l.b16 %v744
        %v1040 = vunpack.c.l.b16 %v745
        %v1041 = vunpack.c.l.b16 %v746
        %v1042 = vunpack.c.l.b16 %v747
        %v1043 = vunpack.c.l.b16 %v748
        %v1044 = vunpack.c.l.b16 %v749
        %v1045 = vunpack.c.l.b16 %v750
        %v1046 = vunpack.c.l.b16 %v751
        %v1047 = vunpack.c.l.b16 %v752
        %v1048 = vunpack.c.l.b16 %v753
        %v1049 = vunpack.c.l.b16 %v754
        %v1050 = vunpack.c.l.b16 %v755
        %v1051 = vunpack.c.l.b16 %v756
        %v1052 = vunpack.c.l.b16 %v757
        %v1053 = vunpack.c.l.b16 %v758
        %v1054 = vunpack.c.l.b16 %v759
        %v1055 = vunpack.c.l.b16 %v760
        %v1056 = vunpack.c.l.b16 %v761
        %v1057 = vunpack.c.l.b16 %v762
        %v1058 = vunpack.c.l.b16 %v763
        %v1059 = vunpack.c.l.b16 %v764
        %v1060 = vunpack.c.l.b16 %v765
        %v1061 = vunpack.c.l.b16 %v766
        %v1062 = vunpack.c.l.b16 %v767
        %v1063 = vunpack.c.l.b16 %v768
        %v1064 = vunpack.c.l.b16 %v769
        %v1065 = vunpack.c.l.b16 %v770
        %v1066 = vunpack.c.l.b16 %v771
        %v1067 = vunpack.c.l.b16 %v772
        %v1068 = vunpack.c.l.b16 %v773
        %v1069 = vunpack.c.l.b16 %v774
        %v1070 = vunpack.c.l.b16 %v775
        %v1071 = vunpack.c.l.b16 %v776
        %v1072 = vunpack.c.l.b16 %v777
        %v1073 = vunpack.c.l.b16 %v778
        %v1074 = vunpack.c.l.b16 %v779
        %v1075 = vunpack.c.l.b16 %v780
        %v1076 = vunpack.c.l.b16 %v781
        %v1077 = vunpack.c.l.b16 %v782
        %v1078 = vunpack.c.l.b16 %v783
        %v1079 = vunpack.c.l.b16 %v784
        %v1080 = vunpack.c.l.b16 %v785
        %v1081 = vunpack.c.l.b16 %v786
        %v1082 = vunpack.c.l.b16 %v787
        %v1083 = vunpack.c.l.b16 %v788
        %v1084 = vunpack.c.l.b16 %v789
        %v1085 = vunpack.c.l.b16 %v790
        %v1086 = vunpack.c.l.b16 %v791
        %v1087 = vunpack.c.l.b16 %v792
        %v1088 = vunpack.c.l.b16 %v793
        %v1089 = vunpack.c.l.b16 %v794
        %v1090 = vunpack.c.l.b16 %v795
        %v1091 = vunpack.c.l.b16 %v796
        %v1092 = vunpack.c.l.b16 %v797
        %v1093 = vpack.c.b16 %v950, %v949
        %v1094 = vpack.c.b16 %v952, %v951
        %v1095 = vpack.c.b16 %v954, %v953
        %v1096 = vpack.c.b16 %v956, %v955
        %v1097 = vpack.c.b16 %v958, %v957
        %v1098 = vpack.c.b16 %v960, %v959
        %v1099 = vpack.c.b16 %v962, %v961
        %v1100 = vpack.c.b16 %v964, %v963
        %v1101 = vpack.c.b16 %v966, %v965
        %v1102 = vpack.c.b16 %v968, %v967
        %v1103 = vpack.c.b16 %v970, %v969
        %v1104 = vpack.c.b16 %v972, %v971
        %v1105 = vpack.c.b16 %v974, %v973
        %v1106 = vpack.c.b16 %v976, %v975
        %v1107 = vpack.c.b16 %v978, %v977
        %v1108 = vpack.c.b16 %v980, %v979
        %v1109 = vpack.c.b16 %v982, %v981
        %v1110 = vpack.c.b16 %v984, %v983
        %v1111 = vpack.c.b16 %v986, %v985
        %v1112 = vpack.c.b16 %v988, %v987
        %v1113 = vpack.c.b16 %v990, %v989
        %v1114 = vpack.c.b16 %v992, %v991
        %v1115 = vpack.c.b16 %v994, %v993
        %v1116 = vpack.c.b16 %v996, %v995
        %v1117 = vpack.c.b16 %v998, %v997
        %v1118 = vpack.c.b16 %v1000, %v999
        %v1119 = vpack.c.b16 %v1002, %v1001
        %v1120 = vpack.c.b16 %v1004, %v1003
        %v1121 = vpack.c.b16 %v1006, %v1005
        %v1122 = vpack.c.b16 %v1008, %v1007
        %v1123 = vpack.c.b16 %v1010, %v1009
        %v1124 = vpack.c.b16 %v1012, %v1011
        %v1125 = vpack.c.b16 %v1014, %v1013
        %v1126 = vpack.c.b16 %v1016, %v1015
        %v1127 = vpack.c.b16 %v1018, %v1017
        %v1128 = vpack.c.b16 %v1020, %v1019
        %v1129 = vpack.c.b16 %v1022, %v1021
        %v1130 = vpack.c.b16 %v1024, %v1023
        %v1131 = vpack.c.b16 %v1026, %v1025
        %v1132 = vpack.c.b16 %v1028, %v1027
        %v1133 = vpack.c.b16 %v1030, %v1029
        %v1134 = vpack.c.b16 %v1032, %v1031
        %v1135 = vpack.c.b16 %v1034, %v1033
        %v1136 = vpack.c.b16 %v1036, %v1035
        %v1137 = vpack.c.b16 %v1038, %v1037
        %v1138 = vpack.c.b16 %v1040, %v1039
        %v1139 = vpack.c.b16 %v1042, %v1041
        %v1140 = vpack.c.b16 %v1044, %v1043
        %v1141 = vpack.c.b16 %v1046, %v1045
        %v1142 = vpack.c.b16 %v1048, %v1047
        %v1143 = vpack.c.b16 %v1050, %v1049
        %v1144 = vpack.c.b16 %v1052, %v1051
        %v1145 = vpack.c.b16 %v1054, %v1053
        %v1146 = vpack.c.b16 %v1056, %v1055
        %v1147 = vpack.c.b16 %v1058, %v1057
        %v1148 = vpack.c.b16 %v1060, %v1059
        %v1149 = vpack.c.b16 %v1062, %v1061
        %v1150 = vpack.c.b16 %v1064, %v1063
        %v1151 = vpack.c.b16 %v1066, %v1065
        %v1152 = vpack.c.b16 %v1068, %v1067
        %v1153 = vpack.c.b16 %v1070, %v1069
        %v1154 = vpack.c.b16 %v1072, %v1071
        %v1155 = vpack.c.b16 %v1074, %v1073
        %v1156 = vpack.c.b16 %v1076, %v1075
        %v1157 = vpack.c.b16 %v1078, %v1077
        %v1158 = vpack.c.b16 %v1080, %v1079
        %v1159 = vpack.c.b16 %v1082, %v1081
        %v1160 = vpack.c.b16 %v1084, %v1083
        %v1161 = vpack.c.b16 %v1086, %v1085
        %v1162 = vpack.c.b16 %v1088, %v1087
        %v1163 = vpack.c.b16 %v1090, %v1089
        %v1164 = vpack.c.b16 %v1092, %v1091
        %1237 = vmatprep.subr.bf16.mxu0 0
        %1238 = vmatpush1.bf16.msra.mxu0 %v1093
        %1239 = vmatprep.subr.bf16.mxu0 0
        %1240 = vmatpush1.bf16.msra.mxu0 %v1094
        %1241 = vmatprep.subr.bf16.mxu0 0
        %1242 = vmatpush1.bf16.msra.mxu0 %v1095
        %1243 = vmatprep.subr.bf16.mxu0 0
        %1244 = vmatpush1.bf16.msra.mxu0 %v1096
        %1245 = vmatprep.subr.bf16.mxu0 0
        %1246 = vmatpush1.bf16.msra.mxu0 %v1097
        %1247 = vmatprep.subr.bf16.mxu0 0
        %1248 = vmatpush1.bf16.msra.mxu0 %v1098
        %1249 = vmatprep.subr.bf16.mxu0 0
        %1250 = vmatpush1.bf16.msra.mxu0 %v1099
        %1251 = vmatprep.subr.bf16.mxu0 0
        %1252 = vmatpush1.bf16.msra.mxu0 %v1100
        %1253 = vmatprep.subr.bf16.mxu0 0
        %1254 = vmatpush1.bf16.msra.mxu0 %v1101
        %1255 = vmatprep.subr.bf16.mxu0 0
        %1256 = vmatpush1.bf16.msra.mxu0 %v1102
        %1257 = vmatprep.subr.bf16.mxu0 0
        %1258 = vmatpush1.bf16.msra.mxu0 %v1103
        %1259 = vmatprep.subr.bf16.mxu0 0
        %1260 = vmatpush1.bf16.msra.mxu0 %v1104
        %1261 = vmatprep.subr.bf16.mxu0 0
        %1262 = vmatpush1.bf16.msra.mxu0 %v1105
        %1263 = vmatprep.subr.bf16.mxu0 0
        %1264 = vmatpush1.bf16.msra.mxu0 %v1106
        %1265 = vmatprep.subr.bf16.mxu0 0
        %1266 = vmatpush1.bf16.msra.mxu0 %v1107
        %1267 = vmatprep.subr.bf16.mxu0 0
        %1268 = vmatpush1.bf16.msra.mxu0 %v1108
        %1269 = vmatprep.mubr.bf16.mxu0 %v583
        %1270 = vmatmul.mubr.bf16.gmra.mrb[0].mxu0 %v582
        %v1271 = vpop.f32.mrb[0].mxu0
        %v1272 = vadd.f32 %v803, %v1271
        %v1273 = vpop.f32.mrb[0].mxu0
        %v1274 = vpop.f32.mrb[0].mxu0
        %v1275 = vadd.f32 %v803, %v1274
        %v1276 = vpop.f32.mrb[0].mxu0
        %1277 = vmatprep.mubr.bf16.mxu0 %v592
        %1278 = vmatmul.mubr.bf16.gmra.mrb[0].mxu0 %v591
        %v1279 = vpop.f32.mrb[0].mxu0
        %v1280 = vadd.f32 %v803, %v1279
        %v1281 = vpop.f32.mrb[0].mxu0
        %v1282 = vpop.f32.mrb[0].mxu0
        %v1283 = vadd.f32 %v803, %v1282
        %v1284 = vpop.f32.mrb[0].mxu0
        %1285 = vmatprep.mubr.bf16.mxu0 %v601
        %1286 = vmatmul.mubr.bf16.gmra.mrb[0].mxu0 %v600
        %v1287 = vpop.f32.mrb[0].mxu0
        %v1288 = vadd.f32 %v803, %v1287
        %v1289 = vpop.f32.mrb[0].mxu0
        %v1290 = vpop.f32.mrb[0].mxu0
        %v1291 = vadd.f32 %v803, %v1290
        %v1292 = vpop.f32.mrb[0].mxu0
        %1293 = vmatprep.mubr.bf16.mxu0 %v610
        %1294 = vmatmul.mubr.bf16.gmra.mrb[0].mxu0 %v609
        %v1295 = vpop.f32.mrb[0].mxu0
        %v1296 = vadd.f32 %v803, %v1295
        %v1297 = vpop.f32.mrb[0].mxu0
        %v1298 = vpop.f32.mrb[0].mxu0
        %v1299 = vadd.f32 %v803, %v1298
        %v1300 = vpop.f32.mrb[0].mxu0
        %1301 = vmatprep.mubr.bf16.mxu0 %v619
        %1302 = vmatmul.mubr.bf16.gmra.mrb[0].mxu0 %v618
        %v1303 = vpop.f32.mrb[0].mxu0
        %v1304 = vadd.f32 %v803, %v1303
        %v1305 = vpop.f32.mrb[0].mxu0
        %v1306 = vpop.f32.mrb[0].mxu0
        %v1307 = vadd.f32 %v803, %v1306
        %v1308 = vpop.f32.mrb[0].mxu0
        %1309 = vmatprep.mubr.bf16.mxu0 %v628
        %1310 = vmatmul.mubr.bf16.gmra.mrb[0].mxu0 %v627
        %v1311 = vpop.f32.mrb[0].mxu0
        %v1312 = vadd.f32 %v803, %v1311
        %v1313 = vpop.f32.mrb[0].mxu0
        %v1314 = vpop.f32.mrb[0].mxu0
        %v1315 = vadd.f32 %v803, %v1314
        %v1316 = vpop.f32.mrb[0].mxu0
        %1317 = vmatprep.mubr.bf16.mxu0 %v637
        %1318 = vmatmul.mubr.bf16.gmra.mrb[0].mxu0 %v636
        %v1319 = vpop.f32.mrb[0].mxu0
        %v1320 = vadd.f32 %v803, %v1319
        %v1321 = vpop.f32.mrb[0].mxu0
        %v1322 = vpop.f32.mrb[0].mxu0
        %v1323 = vadd.f32 %v803, %v1322
        %v1324 = vpop.f32.mrb[0].mxu0
        %1325 = vmatprep.mubr.bf16.mxu0 %v646
        %1326 = vmatmul.mubr.bf16.gmra.mrb[0].mxu0 %v645
        %v1327 = vpop.f32.mrb[0].mxu0
        %v1328 = vadd.f32 %v803, %v1327
        %v1329 = vpop.f32.mrb[0].mxu0
        %v1330 = vpop.f32.mrb[0].mxu0
        %v1331 = vadd.f32 %v803, %v1330
        %v1332 = vpop.f32.mrb[0].mxu0
        %1333 = vdwg.mxu0
        %1334 = vmatprep.subr.bf16.mxu0 0
        %1335 = vmatpush1.bf16.msra.mxu0 %v1109
        %1336 = vmatprep.subr.bf16.mxu0 0
        %1337 = vmatpush1.bf16.msra.mxu0 %v1110
        %1338 = vmatprep.subr.bf16.mxu0 0
        %1339 = vmatpush1.bf16.msra.mxu0 %v1111
        %1340 = vmatprep.subr.bf16.mxu0 0
        %1341 = vmatpush1.bf16.msra.mxu0 %v1112
        %1342 = vmatprep.subr.bf16.mxu0 0
        %1343 = vmatpush1.bf16.msra.mxu0 %v1113
        %1344 = vmatprep.subr.bf16.mxu0 0
        %1345 = vmatpush1.bf16.msra.mxu0 %v1114
        %1346 = vmatprep.subr.bf16.mxu0 0
        %1347 = vmatpush1.bf16.msra.mxu0 %v1115
        %1348 = vmatprep.subr.bf16.mxu0 0
        %1349 = vmatpush1.bf16.msra.mxu0 %v1116
        %1350 = vmatprep.subr.bf16.mxu0 0
        %1351 = vmatpush1.bf16.msra.mxu0 %v1117
        %1352 = vmatprep.subr.bf16.mxu0 0
        %1353 = vmatpush1.bf16.msra.mxu0 %v1118
        %1354 = vmatprep.subr.bf16.mxu0 0
        %1355 = vmatpush1.bf16.msra.mxu0 %v1119
        %1356 = vmatprep.subr.bf16.mxu0 0
        %1357 = vmatpush1.bf16.msra.mxu0 %v1120
        %1358 = vmatprep.subr.bf16.mxu0 0
        %1359 = vmatpush1.bf16.msra.mxu0 %v1121
        %1360 = vmatprep.subr.bf16.mxu0 0
        %1361 = vmatpush1.bf16.msra.mxu0 %v1122
        %1362 = vmatprep.subr.bf16.mxu0 0
        %1363 = vmatpush1.bf16.msra.mxu0 %v1123
        %1364 = vmatprep.subr.bf16.mxu0 0
        %1365 = vmatpush1.bf16.msra.mxu0 %v1124
        %1366 = vmatprep.mubr.bf16.mxu0 %v585
        %1367 = vmatmul.mubr.bf16.gmra.mrb[0].mxu0 %v584
        %v1368 = vpop.f32.mrb[0].mxu0
        %v1369 = vadd.f32 %v1272, %v1368
        %v1370 = vpop.f32.mrb[0].mxu0
        %v1371 = vpop.f32.mrb[0].mxu0
        %v1372 = vadd.f32 %v1275, %v1371
        %v1373 = vpop.f32.mrb[0].mxu0
        %1374 = vmatprep.mubr.bf16.mxu0 %v594
        %1375 = vmatmul.mubr.bf16.gmra.mrb[0].mxu0 %v593
        %v1376 = vpop.f32.mrb[0].mxu0
        %v1377 = vadd.f32 %v1280, %v1376
        %v1378 = vpop.f32.mrb[0].mxu0
        %v1379 = vpop.f32.mrb[0].mxu0
        %v1380 = vadd.f32 %v1283, %v1379
        %v1381 = vpop.f32.mrb[0].mxu0
        %1382 = vmatprep.mubr.bf16.mxu0 %v603
        %1383 = vmatmul.mubr.bf16.gmra.mrb[0].mxu0 %v602
        %v1384 = vpop.f32.mrb[0].mxu0
        %v1385 = vadd.f32 %v1288, %v1384
        %v1386 = vpop.f32.mrb[0].mxu0
        %v1387 = vpop.f32.mrb[0].mxu0
        %v1388 = vadd.f32 %v1291, %v1387
        %v1389 = vpop.f32.mrb[0].mxu0
        %1390 = vmatprep.mubr.bf16.mxu0 %v612
        %1391 = vmatmul.mubr.bf16.gmra.mrb[0].mxu0 %v611
        %v1392 = vpop.f32.mrb[0].mxu0
        %v1393 = vadd.f32 %v1296, %v1392
        %v1394 = vpop.f32.mrb[0].mxu0
        %v1395 = vpop.f32.mrb[0].mxu0
        %v1396 = vadd.f32 %v1299, %v1395
        %v1397 = vpop.f32.mrb[0].mxu0
        %1398 = vmatprep.mubr.bf16.mxu0 %v621
        %1399 = vmatmul.mubr.bf16.gmra.mrb[0].mxu0 %v620
        %v1400 = vpop.f32.mrb[0].mxu0
        %v1401 = vadd.f32 %v1304, %v1400
        %v1402 = vpop.f32.mrb[0].mxu0
        %v1403 = vpop.f32.mrb[0].mxu0
        %v1404 = vadd.f32 %v1307, %v1403
        %v1405 = vpop.f32.mrb[0].mxu0
        %1406 = vmatprep.mubr.bf16.mxu0 %v630
        %1407 = vmatmul.mubr.bf16.gmra.mrb[0].mxu0 %v629
        %v1408 = vpop.f32.mrb[0].mxu0
        %v1409 = vadd.f32 %v1312, %v1408
        %v1410 = vpop.f32.mrb[0].mxu0
        %v1411 = vpop.f32.mrb[0].mxu0
        %v1412 = vadd.f32 %v1315, %v1411
        %v1413 = vpop.f32.mrb[0].mxu0
        %1414 = vmatprep.mubr.bf16.mxu0 %v639
        %1415 = vmatmul.mubr.bf16.gmra.mrb[0].mxu0 %v638
        %v1416 = vpop.f32.mrb[0].mxu0
        %v1417 = vadd.f32 %v1320, %v1416
        %v1418 = vpop.f32.mrb[0].mxu0
        %v1419 = vpop.f32.mrb[0].mxu0
        %v1420 = vadd.f32 %v1323, %v1419
        %v1421 = vpop.f32.mrb[0].mxu0
        %1422 = vmatprep.mubr.bf16.mxu0 %v648
        %1423 = vmatmul.mubr.bf16.gmra.mrb[0].mxu0 %v647
        %v1424 = vpop.f32.mrb[0].mxu0
        %v1425 = vadd.f32 %v1328, %v1424
        %v1426 = vpop.f32.mrb[0].mxu0
        %v1427 = vpop.f32.mrb[0].mxu0
        %v1428 = vadd.f32 %v1331, %v1427
        %v1429 = vpop.f32.mrb[0].mxu0
        %1430 = vdwg.mxu0
        %1431 = vmatprep.subr.bf16.mxu0 0
        %1432 = vmatpush1.bf16.msra.mxu0 %v1125
        %1433 = vmatprep.subr.bf16.mxu0 0
        %1434 = vmatpush1.bf16.msra.mxu0 %v1126
        %1435 = vmatprep.subr.bf16.mxu0 0
        %1436 = vmatpush1.bf16.msra.mxu0 %v1127
        %1437 = vmatprep.subr.bf16.mxu0 0
        %1438 = vmatpush1.bf16.msra.mxu0 %v1128
        %1439 = vmatprep.subr.bf16.mxu0 0
        %1440 = vmatpush1.bf16.msra.mxu0 %v1129
        %1441 = vmatprep.subr.bf16.mxu0 0
        %1442 = vmatpush1.bf16.msra.mxu0 %v1130
        %1443 = vmatprep.subr.bf16.mxu0 0
        %1444 = vmatpush1.bf16.msra.mxu0 %v1131
        %1445 = vmatprep.subr.bf16.mxu0 0
        %1446 = vmatpush1.bf16.msra.mxu0 %v1132
        %1447 = vmatprep.subr.bf16.mxu0 0
        %1448 = vmatpush1.bf16.msra.mxu0 %v1133
        %1449 = vmatprep.subr.bf16.mxu0 0
        %1450 = vmatpush1.bf16.msra.mxu0 %v1134
        %1451 = vmatprep.subr.bf16.mxu0 0
        %1452 = vmatpush1.bf16.msra.mxu0 %v1135
        %1453 = vmatprep.subr.bf16.mxu0 0
        %1454 = vmatpush1.bf16.msra.mxu0 %v1136
        %1455 = vmatprep.subr.bf16.mxu0 0
        %1456 = vmatpush1.bf16.msra.mxu0 %v1137
        %1457 = vmatprep.subr.bf16.mxu0 0
        %1458 = vmatpush1.bf16.msra.mxu0 %v1138
        %1459 = vmatprep.subr.bf16.mxu0 0
        %1460 = vmatpush1.bf16.msra.mxu0 %v1139
        %1461 = vmatprep.subr.bf16.mxu0 0
        %1462 = vmatpush1.bf16.msra.mxu0 %v1140
        %1463 = vmatprep.mubr.bf16.mxu0 %v587
        %1464 = vmatmul.mubr.bf16.gmra.mrb[0].mxu0 %v586
        %v1465 = vpop.f32.mrb[0].mxu0
        %v1466 = vadd.f32 %v1369, %v1465
        %v1467 = vpop.f32.mrb[0].mxu0
        %v1468 = vpop.f32.mrb[0].mxu0
        %v1469 = vadd.f32 %v1372, %v1468
        %v1470 = vpop.f32.mrb[0].mxu0
        %1471 = vmatprep.mubr.bf16.mxu0 %v596
        %1472 = vmatmul.mubr.bf16.gmra.mrb[0].mxu0 %v595
        %v1473 = vpop.f32.mrb[0].mxu0
        %v1474 = vadd.f32 %v1377, %v1473
        %v1475 = vpop.f32.mrb[0].mxu0
        %v1476 = vpop.f32.mrb[0].mxu0
        %v1477 = vadd.f32 %v1380, %v1476
        %v1478 = vpop.f32.mrb[0].mxu0
        %1479 = vmatprep.mubr.bf16.mxu0 %v605
        %1480 = vmatmul.mubr.bf16.gmra.mrb[0].mxu0 %v604
        %v1481 = vpop.f32.mrb[0].mxu0
        %v1482 = vadd.f32 %v1385, %v1481
        %v1483 = vpop.f32.mrb[0].mxu0
        %v1484 = vpop.f32.mrb[0].mxu0
        %v1485 = vadd.f32 %v1388, %v1484
        %v1486 = vpop.f32.mrb[0].mxu0
        %1487 = vmatprep.mubr.bf16.mxu0 %v614
        %1488 = vmatmul.mubr.bf16.gmra.mrb[0].mxu0 %v613
        %v1489 = vpop.f32.mrb[0].mxu0
        %v1490 = vadd.f32 %v1393, %v1489
        %v1491 = vpop.f32.mrb[0].mxu0
        %v1492 = vpop.f32.mrb[0].mxu0
        %v1493 = vadd.f32 %v1396, %v1492
        %v1494 = vpop.f32.mrb[0].mxu0
        %1495 = vmatprep.mubr.bf16.mxu0 %v623
        %1496 = vmatmul.mubr.bf16.gmra.mrb[0].mxu0 %v622
        %v1497 = vpop.f32.mrb[0].mxu0
        %v1498 = vadd.f32 %v1401, %v1497
        %v1499 = vpop.f32.mrb[0].mxu0
        %v1500 = vpop.f32.mrb[0].mxu0
        %v1501 = vadd.f32 %v1404, %v1500
        %v1502 = vpop.f32.mrb[0].mxu0
        %1503 = vmatprep.mubr.bf16.mxu0 %v632
        %1504 = vmatmul.mubr.bf16.gmra.mrb[0].mxu0 %v631
        %v1505 = vpop.f32.mrb[0].mxu0
        %v1506 = vadd.f32 %v1409, %v1505
        %v1507 = vpop.f32.mrb[0].mxu0
        %v1508 = vpop.f32.mrb[0].mxu0
        %v1509 = vadd.f32 %v1412, %v1508
        %v1510 = vpop.f32.mrb[0].mxu0
        %1511 = vmatprep.mubr.bf16.mxu0 %v641
        %1512 = vmatmul.mubr.bf16.gmra.mrb[0].mxu0 %v640
        %v1513 = vpop.f32.mrb[0].mxu0
        %v1514 = vadd.f32 %v1417, %v1513
        %v1515 = vpop.f32.mrb[0].mxu0
        %v1516 = vpop.f32.mrb[0].mxu0
        %v1517 = vadd.f32 %v1420, %v1516
        %v1518 = vpop.f32.mrb[0].mxu0
        %1519 = vmatprep.mubr.bf16.mxu0 %v650
        %1520 = vmatmul.mubr.bf16.gmra.mrb[0].mxu0 %v649
        %v1521 = vpop.f32.mrb[0].mxu0
        %v1522 = vadd.f32 %v1425, %v1521
        %v1523 = vpop.f32.mrb[0].mxu0
        %v1524 = vpop.f32.mrb[0].mxu0
        %v1525 = vadd.f32 %v1428, %v1524
        %v1526 = vpop.f32.mrb[0].mxu0
        %1527 = vdwg.mxu0
        %1528 = vmatprep.subr.bf16.mxu0 0
        %1529 = vmatpush1.bf16.msra.mxu0 %v1141
        %1530 = vmatprep.subr.bf16.mxu0 0
        %1531 = vmatpush1.bf16.msra.mxu0 %v1142
        %1532 = vmatprep.subr.bf16.mxu0 0
        %1533 = vmatpush1.bf16.msra.mxu0 %v1143
        %1534 = vmatprep.subr.bf16.mxu0 0
        %1535 = vmatpush1.bf16.msra.mxu0 %v1144
        %1536 = vmatprep.subr.bf16.mxu0 0
        %1537 = vmatpush1.bf16.msra.mxu0 %v1145
        %1538 = vmatprep.subr.bf16.mxu0 0
        %1539 = vmatpush1.bf16.msra.mxu0 %v1146
        %1540 = vmatprep.subr.bf16.mxu0 0
        %1541 = vmatpush1.bf16.msra.mxu0 %v1147
        %1542 = vmatprep.subr.bf16.mxu0 0
        %1543 = vmatpush1.bf16.msra.mxu0 %v1148
        %1544 = vmatprep.subr.bf16.mxu0 0
        %1545 = vmatpush1.bf16.msra.mxu0 %v1149
        %1546 = vmatprep.subr.bf16.mxu0 0
        %1547 = vmatpush1.bf16.msra.mxu0 %v1150
        %1548 = vmatprep.subr.bf16.mxu0 0
        %1549 = vmatpush1.bf16.msra.mxu0 %v1151
        %1550 = vmatprep.subr.bf16.mxu0 0
        %1551 = vmatpush1.bf16.msra.mxu0 %v1152
        %1552 = vmatprep.subr.bf16.mxu0 0
        %1553 = vmatpush1.bf16.msra.mxu0 %v1153
        %1554 = vmatprep.subr.bf16.mxu0 0
        %1555 = vmatpush1.bf16.msra.mxu0 %v1154
        %1556 = vmatprep.subr.bf16.mxu0 0
        %1557 = vmatpush1.bf16.msra.mxu0 %v1155
        %1558 = vmatprep.subr.bf16.mxu0 0
        %1559 = vmatpush1.bf16.msra.mxu0 %v1156
        %1560 = vmatprep.mubr.bf16.mxu0 %v589
        %1561 = vmatmul.mubr.bf16.gmra.mrb[0].mxu0 %v588
        %v1562 = vpop.f32.mrb[0].mxu0
        %v1563 = vadd.f32 %v1466, %v1562
        %v1564 = vpop.f32.mrb[0].mxu0
        %v1565 = vpop.f32.mrb[0].mxu0
        %v1566 = vadd.f32 %v1469, %v1565
        %v1567 = vpop.f32.mrb[0].mxu0
        %1568 = vmatprep.mubr.bf16.mxu0 %v598
        %1569 = vmatmul.mubr.bf16.gmra.mrb[0].mxu0 %v597
        %v1570 = vpop.f32.mrb[0].mxu0
        %v1571 = vadd.f32 %v1474, %v1570
        %v1572 = vpop.f32.mrb[0].mxu0
        %v1573 = vpop.f32.mrb[0].mxu0
        %v1574 = vadd.f32 %v1477, %v1573
        %v1575 = vpop.f32.mrb[0].mxu0
        %1576 = vmatprep.mubr.bf16.mxu0 %v607
        %1577 = vmatmul.mubr.bf16.gmra.mrb[0].mxu0 %v606
        %v1578 = vpop.f32.mrb[0].mxu0
        %v1579 = vadd.f32 %v1482, %v1578
        %v1580 = vpop.f32.mrb[0].mxu0
        %v1581 = vpop.f32.mrb[0].mxu0
        %v1582 = vadd.f32 %v1485, %v1581
        %v1583 = vpop.f32.mrb[0].mxu0
        %1584 = vmatprep.mubr.bf16.mxu0 %v616
        %1585 = vmatmul.mubr.bf16.gmra.mrb[0].mxu0 %v615
        %v1586 = vpop.f32.mrb[0].mxu0
        %v1587 = vadd.f32 %v1490, %v1586
        %v1588 = vpop.f32.mrb[0].mxu0
        %v1589 = vpop.f32.mrb[0].mxu0
        %v1590 = vadd.f32 %v1493, %v1589
        %v1591 = vpop.f32.mrb[0].mxu0
        %1592 = vmatprep.mubr.bf16.mxu0 %v625
        %1593 = vmatmul.mubr.bf16.gmra.mrb[0].mxu0 %v624
        %v1594 = vpop.f32.mrb[0].mxu0
        %v1595 = vadd.f32 %v1498, %v1594
        %v1596 = vpop.f32.mrb[0].mxu0
        %v1597 = vpop.f32.mrb[0].mxu0
        %v1598 = vadd.f32 %v1501, %v1597
        %v1599 = vpop.f32.mrb[0].mxu0
        %1600 = vmatprep.mubr.bf16.mxu0 %v634
        %1601 = vmatmul.mubr.bf16.gmra.mrb[0].mxu0 %v633
        %v1602 = vpop.f32.mrb[0].mxu0
        %v1603 = vadd.f32 %v1506, %v1602
        %v1604 = vpop.f32.mrb[0].mxu0
        %v1605 = vpop.f32.mrb[0].mxu0
        %v1606 = vadd.f32 %v1509, %v1605
        %v1607 = vpop.f32.mrb[0].mxu0
        %1608 = vmatprep.mubr.bf16.mxu0 %v643
        %1609 = vmatmul.mubr.bf16.gmra.mrb[0].mxu0 %v642
        %v1610 = vpop.f32.mrb[0].mxu0
        %v1611 = vadd.f32 %v1514, %v1610
        %v1612 = vpop.f32.mrb[0].mxu0
        %v1613 = vpop.f32.mrb[0].mxu0
        %v1614 = vadd.f32 %v1517, %v1613
        %v1615 = vpop.f32.mrb[0].mxu0
        %1616 = vmatprep.mubr.bf16.mxu0 %v652
        %1617 = vmatmul.mubr.bf16.gmra.mrb[0].mxu0 %v651
        %v1618 = vpop.f32.mrb[0].mxu0
        %v1619 = vadd.f32 %v1522, %v1618
        %v1620 = vpop.f32.mrb[0].mxu0
        %v1621 = vpop.f32.mrb[0].mxu0
        %v1622 = vadd.f32 %v1525, %v1621
        %v1623 = vpop.f32.mrb[0].mxu0
        %1624 = vdwg.mxu0
        %1625 = vmatprep.subr.bf16.mxu0 0
        %1626 = vmatpush1.bf16.msra.mxu0 %v1157
        %1627 = vmatprep.subr.bf16.mxu0 0
        %1628 = vmatpush1.bf16.msra.mxu0 %v1158
        %1629 = vmatprep.subr.bf16.mxu0 0
        %1630 = vmatpush1.bf16.msra.mxu0 %v1159
        %1631 = vmatprep.subr.bf16.mxu0 0
        %1632 = vmatpush1.bf16.msra.mxu0 %v1160
        %1633 = vmatprep.subr.bf16.mxu0 0
        %1634 = vmatpush1.bf16.msra.mxu0 %v1161
        %1635 = vmatprep.subr.bf16.mxu0 0
        %1636 = vmatpush1.bf16.msra.mxu0 %v1162
        %1637 = vmatprep.subr.bf16.mxu0 0
        %1638 = vmatpush1.bf16.msra.mxu0 %v1163
        %1639 = vmatprep.subr.bf16.mxu0 0
        %1640 = vmatpush1.bf16.msra.mxu0 %v1164
        %1641 = vmatprep.subr.bf16.mxu0 0
        %1642 = vmatpush1.bf16.msra.mxu0 0
        %1643 = vmatprep.subr.bf16.mxu0 0
        %1644 = vmatpush1.bf16.msra.mxu0 0
        %1645 = vmatprep.subr.bf16.mxu0 0
        %1646 = vmatpush1.bf16.msra.mxu0 0
        %1647 = vmatprep.subr.bf16.mxu0 0
        %1648 = vmatpush1.bf16.msra.mxu0 0
        %1649 = vmatprep.subr.bf16.mxu0 0
        %1650 = vmatpush1.bf16.msra.mxu0 0
        %1651 = vmatprep.subr.bf16.mxu0 0
        %1652 = vmatpush1.bf16.msra.mxu0 0
        %1653 = vmatprep.subr.bf16.mxu0 0
        %1654 = vmatpush1.bf16.msra.mxu0 0
        %1655 = vmatprep.subr.bf16.mxu0 0
        %1656 = vmatpush1.bf16.msra.mxu0 0
        %1657 = vmatprep.mubr.bf16.mxu0 0
        %1658 = vmatmul.mubr.bf16.gmra.mrb[0].mxu0 %v590
        %v1659 = vpop.f32.mrb[0].mxu0
        %v1660 = vadd.f32 %v1563, %v1659
        %v1661 = vpop.f32.mrb[0].mxu0
        %v1662 = vpop.f32.mrb[0].mxu0
        %v1663 = vadd.f32 %v1566, %v1662
        %v1664 = vpop.f32.mrb[0].mxu0
        %1665 = vmatprep.mubr.bf16.mxu0 0
        %1666 = vmatmul.mubr.bf16.gmra.mrb[0].mxu0 %v599
        %v1667 = vpop.f32.mrb[0].mxu0
        %v1668 = vadd.f32 %v1571, %v1667
        %v1669 = vpop.f32.mrb[0].mxu0
        %v1670 = vpop.f32.mrb[0].mxu0
        %v1671 = vadd.f32 %v1574, %v1670
        %v1672 = vpop.f32.mrb[0].mxu0
        %1673 = vmatprep.mubr.bf16.mxu0 0
        %1674 = vmatmul.mubr.bf16.gmra.mrb[0].mxu0 %v608
        %v1675 = vpop.f32.mrb[0].mxu0
        %v1676 = vadd.f32 %v1579, %v1675
        %v1677 = vpop.f32.mrb[0].mxu0
        %v1678 = vpop.f32.mrb[0].mxu0
        %v1679 = vadd.f32 %v1582, %v1678
        %v1680 = vpop.f32.mrb[0].mxu0
        %1681 = vmatprep.mubr.bf16.mxu0 0
        %1682 = vmatmul.mubr.bf16.gmra.mrb[0].mxu0 %v617
        %v1683 = vpop.f32.mrb[0].mxu0
        %v1684 = vadd.f32 %v1587, %v1683
        %v1685 = vpop.f32.mrb[0].mxu0
        %v1686 = vpop.f32.mrb[0].mxu0
        %v1687 = vadd.f32 %v1590, %v1686
        %v1688 = vpop.f32.mrb[0].mxu0
        %1689 = vmatprep.mubr.bf16.mxu0 0
        %1690 = vmatmul.mubr.bf16.gmra.mrb[0].mxu0 %v626
        %v1691 = vpop.f32.mrb[0].mxu0
        %v1692 = vadd.f32 %v1595, %v1691
        %v1693 = vpop.f32.mrb[0].mxu0
        %v1694 = vpop.f32.mrb[0].mxu0
        %v1695 = vadd.f32 %v1598, %v1694
        %v1696 = vpop.f32.mrb[0].mxu0
        %1697 = vmatprep.mubr.bf16.mxu0 0
        %1698 = vmatmul.mubr.bf16.gmra.mrb[0].mxu0 %v635
        %v1699 = vpop.f32.mrb[0].mxu0
        %v1700 = vadd.f32 %v1603, %v1699
        %v1701 = vpop.f32.mrb[0].mxu0
        %v1702 = vpop.f32.mrb[0].mxu0
        %v1703 = vadd.f32 %v1606, %v1702
        %v1704 = vpop.f32.mrb[0].mxu0
        %1705 = vmatprep.mubr.bf16.mxu0 0
        %1706 = vmatmul.mubr.bf16.gmra.mrb[0].mxu0 %v644
        %v1707 = vpop.f32.mrb[0].mxu0
        %v1708 = vadd.f32 %v1611, %v1707
        %v1709 = vpop.f32.mrb[0].mxu0
        %v1710 = vpop.f32.mrb[0].mxu0
        %v1711 = vadd.f32 %v1614, %v1710
        %v1712 = vpop.f32.mrb[0].mxu0
        %1713 = vmatprep.mubr.bf16.mxu0 0
        %1714 = vmatmul.mubr.bf16.gmra.mrb[0].mxu0 %v653
        %v1715 = vpop.f32.mrb[0].mxu0
        %v1716 = vadd.f32 %v1619, %v1715
        %v1717 = vpop.f32.mrb[0].mxu0
        %v1718 = vpop.f32.mrb[0].mxu0
        %v1719 = vadd.f32 %v1622, %v1718
        %v1720 = vpop.f32.mrb[0].mxu0
        %1721 = vdwg.mxu0
        %v1722 = vmax.f32 %v1660, 0.0
        %v1723 = vmax.f32 %v1663, 0.0
        %v1724 = vmax.f32 %v1668, 0.0
        %v1725 = vmax.f32 %v1671, 0.0
        %v1726 = vmax.f32 %v1676, 0.0
        %v1727 = vmax.f32 %v1679, 0.0
        %v1728 = vmax.f32 %v1684, 0.0
        %v1729 = vmax.f32 %v1687, 0.0
        %v1730 = vmax.f32 %v1692, 0.0
        %v1731 = vmax.f32 %v1695, 0.0
        %v1732 = vmax.f32 %v1700, 0.0
        %v1733 = vmax.f32 %v1703, 0.0
        %v1734 = vmax.f32 %v1708, 0.0
        %v1735 = vmax.f32 %v1711, 0.0
        %v1736 = vmax.f32 %v1716, 0.0
        %v1737 = vmax.f32 %v1719, 0.0
        %1738 = vst [vmem:[%s276 + $0x1] sm:$0xff] %v1722
        %1739 = vst [vmem:[%s276 + $0x11] sm:$0xff] %v1723
        %1740 = vst [vmem:[%s276 + $0x21] sm:$0xff] %v1724
        %1741 = vst [vmem:[%s276 + $0x31] sm:$0xff] %v1725
        %1742 = vst [vmem:[%s276 + $0x41] sm:$0xff] %v1726
        %1743 = vst [vmem:[%s276 + $0x51] sm:$0xff] %v1727
        %1744 = vst [vmem:[%s276 + $0x61] sm:$0xff] %v1728
        %1745 = vst [vmem:[%s276 + $0x71] sm:$0xff] %v1729
        %1746 = vst [vmem:[%s276 + $0x81] sm:$0xff] %v1730
        %1747 = vst [vmem:[%s276 + $0x91] sm:$0xff] %v1731
        %1748 = vst [vmem:[%s276 + $0xa1] sm:$0xff] %v1732
        %1749 = vst [vmem:[%s276 + $0xb1] sm:$0xff] %v1733
        %1750 = vst [vmem:[%s276 + $0xc1] sm:$0xff] %v1734
        %1751 = vst [vmem:[%s276 + $0xd1] sm:$0xff] %v1735
        %1752 = vst [vmem:[%s276 + $0xe1] sm:$0xff] %v1736
        %1753 = vst [vmem:[%s276 + $0xf1] sm:$0xff] %v1737
        %v1754 = vld [vmem:[#allocation2] sm:$0xff]
        %v1755 = vld [vmem:[#allocation2 + $0x10] sm:$0xff]
        %v1756 = vld [vmem:[#allocation2 + $0x20] sm:$0xff]
        %v1757 = vld [vmem:[#allocation2 + $0x30] sm:$0xff]
        %v1758 = vld [vmem:[#allocation2 + $0x40] sm:$0xff]
        %v1759 = vld [vmem:[#allocation2 + $0x50] sm:$0xff]
        %v1760 = vld [vmem:[#allocation2 + $0x60] sm:$0xff]
        %v1761 = vld [vmem:[#allocation2 + $0x70] sm:$0xff]
        %v1762 = vld [vmem:[#allocation2 + $0x80] sm:$0xff]
        %v1763 = vld [vmem:[#allocation2 + $0x90] sm:$0xff]
        %v1764 = vld [vmem:[#allocation2 + $0xa0] sm:$0xff]
        %v1765 = vld [vmem:[#allocation2 + $0xb0] sm:$0xff]
        %v1766 = vld [vmem:[#allocation2 + $0xc0] sm:$0xff]
        %v1767 = vld [vmem:[#allocation2 + $0xd0] sm:$0xff]
        %v1768 = vld [vmem:[#allocation2 + $0xe0] sm:$0xff]
        %v1769 = vld [vmem:[#allocation2 + $0xf0] sm:$0xff]
        %v1770 = vpack.c.bf16 %v1755, %v1754
        %v1771 = vpack.c.bf16 %v1757, %v1756
        %v1772 = vpack.c.bf16 %v1759, %v1758
        %v1773 = vpack.c.bf16 %v1761, %v1760
        %v1774 = vpack.c.bf16 %v1763, %v1762
        %v1775 = vpack.c.bf16 %v1765, %v1764
        %v1776 = vpack.c.bf16 %v1767, %v1766
        %v1777 = vpack.c.bf16 %v1769, %v1768
        %1778 = vst [vmem:[#allocation3] sm:$0xff] %v1770
        %1779 = vst [vmem:[#allocation3 + $0x48] sm:$0xff] %v1771
        %1780 = vst [vmem:[#allocation3 + $0x90] sm:$0xff] %v1772
        %1781 = vst [vmem:[#allocation3 + $0xd8] sm:$0xff] %v1773
        %1782 = vst [vmem:[#allocation3 + $0x120] sm:$0xff] %v1774
        %1783 = vst [vmem:[#allocation3 + $0x168] sm:$0xff] %v1775
        %1784 = vst [vmem:[#allocation3 + $0x1b0] sm:$0xff] %v1776
        %1785 = vst [vmem:[#allocation3 + $0x1f8] sm:$0xff] %v1777
        %v1786 = vld [vmem:[#allocation2 + $0x1] sm:$0xff]
        %v1787 = vld [vmem:[#allocation2 + $0x11] sm:$0xff]
        %v1788 = vld [vmem:[#allocation2 + $0x21] sm:$0xff]
        %v1789 = vld [vmem:[#allocation2 + $0x31] sm:$0xff]
        %v1790 = vld [vmem:[#allocation2 + $0x41] sm:$0xff]
        %v1791 = vld [vmem:[#allocation2 + $0x51] sm:$0xff]
        %v1792 = vld [vmem:[#allocation2 + $0x61] sm:$0xff]
        %v1793 = vld [vmem:[#allocation2 + $0x71] sm:$0xff]
        %v1794 = vld [vmem:[#allocation2 + $0x81] sm:$0xff]
        %v1795 = vld [vmem:[#allocation2 + $0x91] sm:$0xff]
        %v1796 = vld [vmem:[#allocation2 + $0xa1] sm:$0xff]
        %v1797 = vld [vmem:[#allocation2 + $0xb1] sm:$0xff]
        %v1798 = vld [vmem:[#allocation2 + $0xc1] sm:$0xff]
        %v1799 = vld [vmem:[#allocation2 + $0xd1] sm:$0xff]
        %v1800 = vld [vmem:[#allocation2 + $0xe1] sm:$0xff]
        %v1801 = vld [vmem:[#allocation2 + $0xf1] sm:$0xff]
        %v1802 = vpack.c.bf16 %v1787, %v1786
        %v1803 = vpack.c.bf16 %v1789, %v1788
        %v1804 = vpack.c.bf16 %v1791, %v1790
        %v1805 = vpack.c.bf16 %v1793, %v1792
        %v1806 = vpack.c.bf16 %v1795, %v1794
        %v1807 = vpack.c.bf16 %v1797, %v1796
        %v1808 = vpack.c.bf16 %v1799, %v1798
        %v1809 = vpack.c.bf16 %v1801, %v1800
        %1810 = vst [vmem:[#allocation3 + $0x8] sm:$0xff] %v1802
        %1811 = vst [vmem:[#allocation3 + $0x50] sm:$0xff] %v1803
        %1812 = vst [vmem:[#allocation3 + $0x98] sm:$0xff] %v1804
        %1813 = vst [vmem:[#allocation3 + $0xe0] sm:$0xff] %v1805
        %1814 = vst [vmem:[#allocation3 + $0x128] sm:$0xff] %v1806
        %1815 = vst [vmem:[#allocation3 + $0x170] sm:$0xff] %v1807
        %1816 = vst [vmem:[#allocation3 + $0x1b8] sm:$0xff] %v1808
        %1817 = vst [vmem:[#allocation3 + $0x200] sm:$0xff] %v1809
        %v1818 = vld [vmem:[#allocation2 + $0x2] sm:$0xff]
        %v1819 = vld [vmem:[#allocation2 + $0x12] sm:$0xff]
        %v1820 = vld [vmem:[#allocation2 + $0x22] sm:$0xff]
        %v1821 = vld [vmem:[#allocation2 + $0x32] sm:$0xff]
        %v1822 = vld [vmem:[#allocation2 + $0x42] sm:$0xff]
        %v1823 = vld [vmem:[#allocation2 + $0x52] sm:$0xff]
        %v1824 = vld [vmem:[#allocation2 + $0x62] sm:$0xff]
        %v1825 = vld [vmem:[#allocation2 + $0x72] sm:$0xff]
        %v1826 = vld [vmem:[#allocation2 + $0x82] sm:$0xff]
        %v1827 = vld [vmem:[#allocation2 + $0x92] sm:$0xff]
        %v1828 = vld [vmem:[#allocation2 + $0xa2] sm:$0xff]
        %v1829 = vld [vmem:[#allocation2 + $0xb2] sm:$0xff]
        %v1830 = vld [vmem:[#allocation2 + $0xc2] sm:$0xff]
        %v1831 = vld [vmem:[#allocation2 + $0xd2] sm:$0xff]
        %v1832 = vld [vmem:[#allocation2 + $0xe2] sm:$0xff]
        %v1833 = vld [vmem:[#allocation2 + $0xf2] sm:$0xff]
        %v1834 = vpack.c.bf16 %v1819, %v1818
        %v1835 = vpack.c.bf16 %v1821, %v1820
        %v1836 = vpack.c.bf16 %v1823, %v1822
        %v1837 = vpack.c.bf16 %v1825, %v1824
        %v1838 = vpack.c.bf16 %v1827, %v1826
        %v1839 = vpack.c.bf16 %v1829, %v1828
        %v1840 = vpack.c.bf16 %v1831, %v1830
        %v1841 = vpack.c.bf16 %v1833, %v1832
        %1842 = vst [vmem:[#allocation3 + $0x10] sm:$0xff] %v1834
        %1843 = vst [vmem:[#allocation3 + $0x58] sm:$0xff] %v1835
        %1844 = vst [vmem:[#allocation3 + $0xa0] sm:$0xff] %v1836
        %1845 = vst [vmem:[#allocation3 + $0xe8] sm:$0xff] %v1837
        %1846 = vst [vmem:[#allocation3 + $0x130] sm:$0xff] %v1838
        %1847 = vst [vmem:[#allocation3 + $0x178] sm:$0xff] %v1839
        %1848 = vst [vmem:[#allocation3 + $0x1c0] sm:$0xff] %v1840
        %1849 = vst [vmem:[#allocation3 + $0x208] sm:$0xff] %v1841
        %v1850 = vld [vmem:[%s276] sm:$0xff]
        %v1851 = vld [vmem:[%s276 + $0x10] sm:$0xff]
        %v1852 = vld [vmem:[%s276 + $0x20] sm:$0xff]
        %v1853 = vld [vmem:[%s276 + $0x30] sm:$0xff]
        %v1854 = vld [vmem:[%s276 + $0x40] sm:$0xff]
        %v1855 = vld [vmem:[%s276 + $0x50] sm:$0xff]
        %v1856 = vld [vmem:[%s276 + $0x60] sm:$0xff]
        %v1857 = vld [vmem:[%s276 + $0x70] sm:$0xff]
        %v1858 = vld [vmem:[%s276 + $0x80] sm:$0xff]
        %v1859 = vld [vmem:[%s276 + $0x90] sm:$0xff]
        %v1860 = vld [vmem:[%s276 + $0xa0] sm:$0xff]
        %v1861 = vld [vmem:[%s276 + $0xb0] sm:$0xff]
        %v1862 = vld [vmem:[%s276 + $0xc0] sm:$0xff]
        %v1863 = vld [vmem:[%s276 + $0xd0] sm:$0xff]
        %v1864 = vld [vmem:[%s276 + $0xe0] sm:$0xff]
        %v1865 = vld [vmem:[%s276 + $0xf0] sm:$0xff]
        %v1866 = vpack.c.bf16 %v1851, %v1850
        %v1867 = vpack.c.bf16 %v1853, %v1852
        %v1868 = vpack.c.bf16 %v1855, %v1854
        %v1869 = vpack.c.bf16 %v1857, %v1856
        %v1870 = vpack.c.bf16 %v1859, %v1858
        %v1871 = vpack.c.bf16 %v1861, %v1860
        %v1872 = vpack.c.bf16 %v1863, %v1862
        %v1873 = vpack.c.bf16 %v1865, %v1864
        %1874 = vst [vmem:[#allocation3 + $0x18] sm:$0xff] %v1866
        %1875 = vst [vmem:[#allocation3 + $0x60] sm:$0xff] %v1867
        %1876 = vst [vmem:[#allocation3 + $0xa8] sm:$0xff] %v1868
        %1877 = vst [vmem:[#allocation3 + $0xf0] sm:$0xff] %v1869
        %1878 = vst [vmem:[#allocation3 + $0x138] sm:$0xff] %v1870
        %1879 = vst [vmem:[#allocation3 + $0x180] sm:$0xff] %v1871
        %1880 = vst [vmem:[#allocation3 + $0x1c8] sm:$0xff] %v1872
        %1881 = vst [vmem:[#allocation3 + $0x210] sm:$0xff] %v1873
        %v1882 = vld [vmem:[%s276 + $0x1] sm:$0xff]
        %v1883 = vld [vmem:[%s276 + $0x11] sm:$0xff]
        %v1884 = vld [vmem:[%s276 + $0x21] sm:$0xff]
        %v1885 = vld [vmem:[%s276 + $0x31] sm:$0xff]
        %v1886 = vld [vmem:[%s276 + $0x41] sm:$0xff]
        %v1887 = vld [vmem:[%s276 + $0x51] sm:$0xff]
        %v1888 = vld [vmem:[%s276 + $0x61] sm:$0xff]
        %v1889 = vld [vmem:[%s276 + $0x71] sm:$0xff]
        %v1890 = vld [vmem:[%s276 + $0x81] sm:$0xff]
        %v1891 = vld [vmem:[%s276 + $0x91] sm:$0xff]
        %v1892 = vld [vmem:[%s276 + $0xa1] sm:$0xff]
        %v1893 = vld [vmem:[%s276 + $0xb1] sm:$0xff]
        %v1894 = vld [vmem:[%s276 + $0xc1] sm:$0xff]
        %v1895 = vld [vmem:[%s276 + $0xd1] sm:$0xff]
        %v1896 = vld [vmem:[%s276 + $0xe1] sm:$0xff]
        %v1897 = vld [vmem:[%s276 + $0xf1] sm:$0xff]
        %v1898 = vpack.c.bf16 %v1883, %v1882
        %v1899 = vpack.c.bf16 %v1885, %v1884
        %v1900 = vpack.c.bf16 %v1887, %v1886
        %v1901 = vpack.c.bf16 %v1889, %v1888
        %v1902 = vpack.c.bf16 %v1891, %v1890
        %v1903 = vpack.c.bf16 %v1893, %v1892
        %v1904 = vpack.c.bf16 %v1895, %v1894
        %v1905 = vpack.c.bf16 %v1897, %v1896
        %1906 = vst [vmem:[#allocation3 + $0x20] sm:$0xff] %v1898
        %1907 = vst [vmem:[#allocation3 + $0x68] sm:$0xff] %v1899
        %1908 = vst [vmem:[#allocation3 + $0xb0] sm:$0xff] %v1900
        %1909 = vst [vmem:[#allocation3 + $0xf8] sm:$0xff] %v1901
        %1910 = vst [vmem:[#allocation3 + $0x140] sm:$0xff] %v1902
        %1911 = vst [vmem:[#allocation3 + $0x188] sm:$0xff] %v1903
        %1912 = vst [vmem:[#allocation3 + $0x1d0] sm:$0xff] %v1904
        %1913 = vst [vmem:[#allocation3 + $0x218] sm:$0xff] %v1905
        %v1914 = vld [vmem:[%s276 + $0x2] sm:$0xff]
        %v1915 = vld [vmem:[%s276 + $0x12] sm:$0xff]
        %v1916 = vld [vmem:[%s276 + $0x22] sm:$0xff]
        %v1917 = vld [vmem:[%s276 + $0x32] sm:$0xff]
        %v1918 = vld [vmem:[%s276 + $0x42] sm:$0xff]
        %v1919 = vld [vmem:[%s276 + $0x52] sm:$0xff]
        %v1920 = vld [vmem:[%s276 + $0x62] sm:$0xff]
        %v1921 = vld [vmem:[%s276 + $0x72] sm:$0xff]
        %v1922 = vld [vmem:[%s276 + $0x82] sm:$0xff]
        %v1923 = vld [vmem:[%s276 + $0x92] sm:$0xff]
        %v1924 = vld [vmem:[%s276 + $0xa2] sm:$0xff]
        %v1925 = vld [vmem:[%s276 + $0xb2] sm:$0xff]
        %v1926 = vld [vmem:[%s276 + $0xc2] sm:$0xff]
        %v1927 = vld [vmem:[%s276 + $0xd2] sm:$0xff]
        %v1928 = vld [vmem:[%s276 + $0xe2] sm:$0xff]
        %v1929 = vld [vmem:[%s276 + $0xf2] sm:$0xff]
        %v1930 = vpack.c.bf16 %v1915, %v1914
        %v1931 = vpack.c.bf16 %v1917, %v1916
        %v1932 = vpack.c.bf16 %v1919, %v1918
        %v1933 = vpack.c.bf16 %v1921, %v1920
        %v1934 = vpack.c.bf16 %v1923, %v1922
        %v1935 = vpack.c.bf16 %v1925, %v1924
        %v1936 = vpack.c.bf16 %v1927, %v1926
        %v1937 = vpack.c.bf16 %v1929, %v1928
        %1938 = vst [vmem:[#allocation3 + $0x28] sm:$0xff] %v1930
        %1939 = vst [vmem:[#allocation3 + $0x70] sm:$0xff] %v1931
        %1940 = vst [vmem:[#allocation3 + $0xb8] sm:$0xff] %v1932
        %1941 = vst [vmem:[#allocation3 + $0x100] sm:$0xff] %v1933
        %1942 = vst [vmem:[#allocation3 + $0x148] sm:$0xff] %v1934
        %1943 = vst [vmem:[#allocation3 + $0x190] sm:$0xff] %v1935
        %1944 = vst [vmem:[#allocation3 + $0x1d8] sm:$0xff] %v1936
        %1945 = vst [vmem:[#allocation3 + $0x220] sm:$0xff] %v1937
        %v1946 = vld [vmem:[%s485] sm:$0xff]
        %v1947 = vld [vmem:[%s485 + $0x10] sm:$0xff]
        %v1948 = vld [vmem:[%s485 + $0x20] sm:$0xff]
        %v1949 = vld [vmem:[%s485 + $0x30] sm:$0xff]
        %v1950 = vld [vmem:[%s485 + $0x40] sm:$0xff]
        %v1951 = vld [vmem:[%s485 + $0x50] sm:$0xff]
        %v1952 = vld [vmem:[%s485 + $0x60] sm:$0xff]
        %v1953 = vld [vmem:[%s485 + $0x70] sm:$0xff]
        %v1954 = vld [vmem:[%s485 + $0x80] sm:$0xff]
        %v1955 = vld [vmem:[%s485 + $0x90] sm:$0xff]
        %v1956 = vld [vmem:[%s485 + $0xa0] sm:$0xff]
        %v1957 = vld [vmem:[%s485 + $0xb0] sm:$0xff]
        %v1958 = vld [vmem:[%s485 + $0xc0] sm:$0xff]
        %v1959 = vld [vmem:[%s485 + $0xd0] sm:$0xff]
        %v1960 = vld [vmem:[%s485 + $0xe0] sm:$0xff]
        %v1961 = vld [vmem:[%s485 + $0xf0] sm:$0xff]
        %v1962 = vpack.c.bf16 %v1947, %v1946
        %v1963 = vpack.c.bf16 %v1949, %v1948
        %v1964 = vpack.c.bf16 %v1951, %v1950
        %v1965 = vpack.c.bf16 %v1953, %v1952
        %v1966 = vpack.c.bf16 %v1955, %v1954
        %v1967 = vpack.c.bf16 %v1957, %v1956
        %v1968 = vpack.c.bf16 %v1959, %v1958
        %v1969 = vpack.c.bf16 %v1961, %v1960
        %1970 = vst [vmem:[#allocation3 + $0x30] sm:$0xff] %v1962
        %1971 = vst [vmem:[#allocation3 + $0x78] sm:$0xff] %v1963
        %1972 = vst [vmem:[#allocation3 + $0xc0] sm:$0xff] %v1964
        %1973 = vst [vmem:[#allocation3 + $0x108] sm:$0xff] %v1965
        %1974 = vst [vmem:[#allocation3 + $0x150] sm:$0xff] %v1966
        %1975 = vst [vmem:[#allocation3 + $0x198] sm:$0xff] %v1967
        %1976 = vst [vmem:[#allocation3 + $0x1e0] sm:$0xff] %v1968
        %1977 = vst [vmem:[#allocation3 + $0x228] sm:$0xff] %v1969
        %v1978 = vld [vmem:[%s485 + $0x1] sm:$0xff]
        %v1979 = vld [vmem:[%s485 + $0x11] sm:$0xff]
        %v1980 = vld [vmem:[%s485 + $0x21] sm:$0xff]
        %v1981 = vld [vmem:[%s485 + $0x31] sm:$0xff]
        %v1982 = vld [vmem:[%s485 + $0x41] sm:$0xff]
        %v1983 = vld [vmem:[%s485 + $0x51] sm:$0xff]
        %v1984 = vld [vmem:[%s485 + $0x61] sm:$0xff]
        %v1985 = vld [vmem:[%s485 + $0x71] sm:$0xff]
        %v1986 = vld [vmem:[%s485 + $0x81] sm:$0xff]
        %v1987 = vld [vmem:[%s485 + $0x91] sm:$0xff]
        %v1988 = vld [vmem:[%s485 + $0xa1] sm:$0xff]
        %v1989 = vld [vmem:[%s485 + $0xb1] sm:$0xff]
        %v1990 = vld [vmem:[%s485 + $0xc1] sm:$0xff]
        %v1991 = vld [vmem:[%s485 + $0xd1] sm:$0xff]
        %v1992 = vld [vmem:[%s485 + $0xe1] sm:$0xff]
        %v1993 = vld [vmem:[%s485 + $0xf1] sm:$0xff]
        %v1994 = vpack.c.bf16 %v1979, %v1978
        %v1995 = vpack.c.bf16 %v1981, %v1980
        %v1996 = vpack.c.bf16 %v1983, %v1982
        %v1997 = vpack.c.bf16 %v1985, %v1984
        %v1998 = vpack.c.bf16 %v1987, %v1986
        %v1999 = vpack.c.bf16 %v1989, %v1988
        %v2000 = vpack.c.bf16 %v1991, %v1990
        %v2001 = vpack.c.bf16 %v1993, %v1992
        %2002 = vst [vmem:[#allocation3 + $0x38] sm:$0xff] %v1994
        %2003 = vst [vmem:[#allocation3 + $0x80] sm:$0xff] %v1995
        %2004 = vst [vmem:[#allocation3 + $0xc8] sm:$0xff] %v1996
        %2005 = vst [vmem:[#allocation3 + $0x110] sm:$0xff] %v1997
        %2006 = vst [vmem:[#allocation3 + $0x158] sm:$0xff] %v1998
        %2007 = vst [vmem:[#allocation3 + $0x1a0] sm:$0xff] %v1999
        %2008 = vst [vmem:[#allocation3 + $0x1e8] sm:$0xff] %v2000
        %2009 = vst [vmem:[#allocation3 + $0x230] sm:$0xff] %v2001
        %v2010 = vld [vmem:[%s485 + $0x2] sm:$0xff]
        %v2011 = vld [vmem:[%s485 + $0x12] sm:$0xff]
        %v2012 = vld [vmem:[%s485 + $0x22] sm:$0xff]
        %v2013 = vld [vmem:[%s485 + $0x32] sm:$0xff]
        %v2014 = vld [vmem:[%s485 + $0x42] sm:$0xff]
        %v2015 = vld [vmem:[%s485 + $0x52] sm:$0xff]
        %v2016 = vld [vmem:[%s485 + $0x62] sm:$0xff]
        %v2017 = vld [vmem:[%s485 + $0x72] sm:$0xff]
        %v2018 = vld [vmem:[%s485 + $0x82] sm:$0xff]
        %v2019 = vld [vmem:[%s485 + $0x92] sm:$0xff]
        %v2020 = vld [vmem:[%s485 + $0xa2] sm:$0xff]
        %v2021 = vld [vmem:[%s485 + $0xb2] sm:$0xff]
        %v2022 = vld [vmem:[%s485 + $0xc2] sm:$0xff]
        %v2023 = vld [vmem:[%s485 + $0xd2] sm:$0xff]
        %v2024 = vld [vmem:[%s485 + $0xe2] sm:$0xff]
        %v2025 = vld [vmem:[%s485 + $0xf2] sm:$0xff]
        %v2026 = vpack.c.bf16 %v2011, %v2010
        %v2027 = vpack.c.bf16 %v2013, %v2012
        %v2028 = vpack.c.bf16 %v2015, %v2014
        %v2029 = vpack.c.bf16 %v2017, %v2016
        %v2030 = vpack.c.bf16 %v2019, %v2018
        %v2031 = vpack.c.bf16 %v2021, %v2020
        %v2032 = vpack.c.bf16 %v2023, %v2022
        %v2033 = vpack.c.bf16 %v2025, %v2024
        %2034 = vst [vmem:[#allocation3 + $0x40] sm:$0xff] %v2026
        %2035 = vst [vmem:[#allocation3 + $0x88] sm:$0xff] %v2027
        %2036 = vst [vmem:[#allocation3 + $0xd0] sm:$0xff] %v2028
        %2037 = vst [vmem:[#allocation3 + $0x118] sm:$0xff] %v2029
        %2038 = vst [vmem:[#allocation3 + $0x160] sm:$0xff] %v2030
        %2039 = vst [vmem:[#allocation3 + $0x1a8] sm:$0xff] %v2031
        %2040 = vst [vmem:[#allocation3 + $0x1f0] sm:$0xff] %v2032
        %2041 = vst [vmem:[#allocation3 + $0x238] sm:$0xff] %v2033
        %v2042 = vld [vmem:[#allocation3] sm:$0xff]
        %v2043 = vld [vmem:[#allocation3 + $0x8] sm:$0xff]
        %v2044 = vld [vmem:[#allocation3 + $0x10] sm:$0xff]
        %v2045 = vld [vmem:[#allocation3 + $0x18] sm:$0xff]
        %v2046 = vld [vmem:[#allocation3 + $0x20] sm:$0xff]
        %v2047 = vld [vmem:[#allocation3 + $0x28] sm:$0xff]
        %v2048 = vld [vmem:[#allocation3 + $0x30] sm:$0xff]
        %v2049 = vld [vmem:[#allocation3 + $0x38] sm:$0xff]
        %v2050 = vld [vmem:[#allocation3 + $0x40] sm:$0xff]
        %v2051 = vld [vmem:[#allocation3 + $0x48] sm:$0xff]
        %v2052 = vld [vmem:[#allocation3 + $0x50] sm:$0xff]
        %v2053 = vld [vmem:[#allocation3 + $0x58] sm:$0xff]
        %v2054 = vld [vmem:[#allocation3 + $0x60] sm:$0xff]
        %v2055 = vld [vmem:[#allocation3 + $0x68] sm:$0xff]
        %v2056 = vld [vmem:[#allocation3 + $0x70] sm:$0xff]
        %v2057 = vld [vmem:[#allocation3 + $0x78] sm:$0xff]
        %v2058 = vld [vmem:[#allocation3 + $0x80] sm:$0xff]
        %v2059 = vld [vmem:[#allocation3 + $0x88] sm:$0xff]
        %v2060 = vld [vmem:[#allocation3 + $0x90] sm:$0xff]
        %v2061 = vld [vmem:[#allocation3 + $0x98] sm:$0xff]
        %v2062 = vld [vmem:[#allocation3 + $0xa0] sm:$0xff]
        %v2063 = vld [vmem:[#allocation3 + $0xa8] sm:$0xff]
        %v2064 = vld [vmem:[#allocation3 + $0xb0] sm:$0xff]
        %v2065 = vld [vmem:[#allocation3 + $0xb8] sm:$0xff]
        %v2066 = vld [vmem:[#allocation3 + $0xc0] sm:$0xff]
        %v2067 = vld [vmem:[#allocation3 + $0xc8] sm:$0xff]
        %v2068 = vld [vmem:[#allocation3 + $0xd0] sm:$0xff]
        %v2069 = vld [vmem:[#allocation3 + $0xd8] sm:$0xff]
        %v2070 = vld [vmem:[#allocation3 + $0xe0] sm:$0xff]
        %v2071 = vld [vmem:[#allocation3 + $0xe8] sm:$0xff]
        %v2072 = vld [vmem:[#allocation3 + $0xf0] sm:$0xff]
        %v2073 = vld [vmem:[#allocation3 + $0xf8] sm:$0xff]
        %v2074 = vld [vmem:[#allocation3 + $0x100] sm:$0xff]
        %v2075 = vld [vmem:[#allocation3 + $0x108] sm:$0xff]
        %v2076 = vld [vmem:[#allocation3 + $0x110] sm:$0xff]
        %v2077 = vld [vmem:[#allocation3 + $0x118] sm:$0xff]
        %v2078 = vld [vmem:[#allocation3 + $0x120] sm:$0xff]
        %v2079 = vld [vmem:[#allocation3 + $0x128] sm:$0xff]
        %v2080 = vld [vmem:[#allocation3 + $0x130] sm:$0xff]
        %v2081 = vld [vmem:[#allocation3 + $0x138] sm:$0xff]
        %v2082 = vld [vmem:[#allocation3 + $0x140] sm:$0xff]
        %v2083 = vld [vmem:[#allocation3 + $0x148] sm:$0xff]
        %v2084 = vld [vmem:[#allocation3 + $0x150] sm:$0xff]
        %v2085 = vld [vmem:[#allocation3 + $0x158] sm:$0xff]
        %v2086 = vld [vmem:[#allocation3 + $0x160] sm:$0xff]
        %v2087 = vld [vmem:[#allocation3 + $0x168] sm:$0xff]
        %v2088 = vld [vmem:[#allocation3 + $0x170] sm:$0xff]
        %v2089 = vld [vmem:[#allocation3 + $0x178] sm:$0xff]
        %v2090 = vld [vmem:[#allocation3 + $0x180] sm:$0xff]
        %v2091 = vld [vmem:[#allocation3 + $0x188] sm:$0xff]
        %v2092 = vld [vmem:[#allocation3 + $0x190] sm:$0xff]
        %v2093 = vld [vmem:[#allocation3 + $0x198] sm:$0xff]
        %v2094 = vld [vmem:[#allocation3 + $0x1a0] sm:$0xff]
        %v2095 = vld [vmem:[#allocation3 + $0x1a8] sm:$0xff]
        %v2096 = vld [vmem:[#allocation3 + $0x1b0] sm:$0xff]
        %v2097 = vld [vmem:[#allocation3 + $0x1b8] sm:$0xff]
        %v2098 = vld [vmem:[#allocation3 + $0x1c0] sm:$0xff]
        %v2099 = vld [vmem:[#allocation3 + $0x1c8] sm:$0xff]
        %v2100 = vld [vmem:[#allocation3 + $0x1d0] sm:$0xff]
        %v2101 = vld [vmem:[#allocation3 + $0x1d8] sm:$0xff]
        %v2102 = vld [vmem:[#allocation3 + $0x1e0] sm:$0xff]
        %v2103 = vld [vmem:[#allocation3 + $0x1e8] sm:$0xff]
        %v2104 = vld [vmem:[#allocation3 + $0x1f0] sm:$0xff]
        %v2105 = vld [vmem:[#allocation3 + $0x1f8] sm:$0xff]
        %v2106 = vld [vmem:[#allocation3 + $0x200] sm:$0xff]
        %v2107 = vld [vmem:[#allocation3 + $0x208] sm:$0xff]
        %v2108 = vld [vmem:[#allocation3 + $0x210] sm:$0xff]
        %v2109 = vld [vmem:[#allocation3 + $0x218] sm:$0xff]
        %v2110 = vld [vmem:[#allocation3 + $0x220] sm:$0xff]
        %v2111 = vld [vmem:[#allocation3 + $0x228] sm:$0xff]
        %v2112 = vld [vmem:[#allocation3 + $0x230] sm:$0xff]
        %v2113 = vld [vmem:[#allocation3 + $0x238] sm:$0xff]
        %v2114 = vld [vmem:[%s3] sm:$0xf]
        %v2115 = vld [vmem:[%s3 + $0x4] sm:$0xf]
        %v2116 = vld [vmem:[%s3 + $0x8] sm:$0xf]
        %v2117 = vld [vmem:[%s3 + $0xc] sm:$0xf]
        %v2118 = vld [vmem:[%s3 + $0x10] sm:$0xf]
        %v2119 = vld [vmem:[%s3 + $0x14] sm:$0xf]
        %v2120 = vld [vmem:[%s3 + $0x18] sm:$0xf]
        %v2121 = vld [vmem:[%s3 + $0x1c] sm:$0xf]
        %v2122 = vld [vmem:[%s3 + $0x20] sm:$0xf]
        %v2123 = vld [vmem:[%s3 + $0x24] sm:$0xf]
        %v2124 = vld [vmem:[%s3 + $0x28] sm:$0xf]
        %v2125 = vld [vmem:[%s3 + $0x2c] sm:$0xf]
        %v2126 = vld [vmem:[%s3 + $0x30] sm:$0xf]
        %v2127 = vld [vmem:[%s3 + $0x34] sm:$0xf]
        %v2128 = vld [vmem:[%s3 + $0x38] sm:$0xf]
        %v2129 = vld [vmem:[%s3 + $0x3c] sm:$0xf]
        %v2130 = vld [vmem:[%s3 + $0x40] sm:$0xf]
        %v2131 = vld [vmem:[%s3 + $0x44] sm:$0xf]
        %v2132 = vld [vmem:[%s3 + $0x48] sm:$0xf]
        %v2133 = vld [vmem:[%s3 + $0x4c] sm:$0xf]
        %v2134 = vld [vmem:[%s3 + $0x50] sm:$0xf]
        %v2135 = vld [vmem:[%s3 + $0x54] sm:$0xf]
        %v2136 = vld [vmem:[%s3 + $0x58] sm:$0xf]
        %v2137 = vld [vmem:[%s3 + $0x5c] sm:$0xf]
        %v2138 = vld [vmem:[%s3 + $0x60] sm:$0xf]
        %v2139 = vld [vmem:[%s3 + $0x64] sm:$0xf]
        %v2140 = vld [vmem:[%s3 + $0x68] sm:$0xf]
        %v2141 = vld [vmem:[%s3 + $0x6c] sm:$0xf]
        %v2142 = vld [vmem:[%s3 + $0x70] sm:$0xf]
        %v2143 = vld [vmem:[%s3 + $0x74] sm:$0xf]
        %v2144 = vld [vmem:[%s3 + $0x78] sm:$0xf]
        %v2145 = vld [vmem:[%s3 + $0x7c] sm:$0xf]
        %v2146 = vld [vmem:[%s3 + $0x80] sm:$0xf]
        %v2147 = vld [vmem:[%s3 + $0x84] sm:$0xf]
        %v2148 = vld [vmem:[%s3 + $0x88] sm:$0xf]
        %v2149 = vld [vmem:[%s3 + $0x8c] sm:$0xf]
        %v2150 = vld [vmem:[%s3 + $0x90] sm:$0xf]
        %v2151 = vld [vmem:[%s3 + $0x94] sm:$0xf]
        %v2152 = vld [vmem:[%s3 + $0x98] sm:$0xf]
        %v2153 = vld [vmem:[%s3 + $0x9c] sm:$0xf]
        %v2154 = vld [vmem:[%s3 + $0xa0] sm:$0xf]
        %v2155 = vld [vmem:[%s3 + $0xa4] sm:$0xf]
        %v2156 = vld [vmem:[%s3 + $0xa8] sm:$0xf]
        %v2157 = vld [vmem:[%s3 + $0xac] sm:$0xf]
        %v2158 = vld [vmem:[%s3 + $0xb0] sm:$0xf]
        %v2159 = vld [vmem:[%s3 + $0xb4] sm:$0xf]
        %v2160 = vld [vmem:[%s3 + $0xb8] sm:$0xf]
        %v2161 = vld [vmem:[%s3 + $0xbc] sm:$0xf]
        %v2162 = vld [vmem:[%s3 + $0xc0] sm:$0xf]
        %v2163 = vld [vmem:[%s3 + $0xc4] sm:$0xf]
        %v2164 = vld [vmem:[%s3 + $0xc8] sm:$0xf]
        %v2165 = vld [vmem:[%s3 + $0xcc] sm:$0xf]
        %v2166 = vld [vmem:[%s3 + $0xd0] sm:$0xf]
        %v2167 = vld [vmem:[%s3 + $0xd4] sm:$0xf]
        %v2168 = vld [vmem:[%s3 + $0xd8] sm:$0xf]
        %v2169 = vld [vmem:[%s3 + $0xdc] sm:$0xf]
        %v2170 = vld [vmem:[%s3 + $0xe0] sm:$0xf]
        %v2171 = vld [vmem:[%s3 + $0xe4] sm:$0xf]
        %v2172 = vld [vmem:[%s3 + $0xe8] sm:$0xf]
        %v2173 = vld [vmem:[%s3 + $0xec] sm:$0xf]
        %v2174 = vld [vmem:[%s3 + $0xf0] sm:$0xf]
        %v2175 = vld [vmem:[%s3 + $0xf4] sm:$0xf]
        %v2176 = vld [vmem:[%s3 + $0xf8] sm:$0xf]
        %v2177 = vld [vmem:[%s3 + $0xfc] sm:$0xf]
        %v2178 = vld [vmem:[%s3 + $0x100] sm:$0xf]
        %v2179 = vld [vmem:[%s3 + $0x104] sm:$0xf]
        %v2180 = vld [vmem:[%s3 + $0x108] sm:$0xf]
        %v2181 = vld [vmem:[%s3 + $0x10c] sm:$0xf]
        %v2182 = vld [vmem:[%s3 + $0x110] sm:$0xf]
        %v2183 = vld [vmem:[%s3 + $0x114] sm:$0xf]
        %v2184 = vld [vmem:[%s3 + $0x118] sm:$0xf]
        %v2185 = vld [vmem:[%s3 + $0x11c] sm:$0xf]
        %v2186 = vld [vmem:[%s3 + $0x120] sm:$0xf]
        %v2187 = vld [vmem:[%s3 + $0x124] sm:$0xf]
        %v2188 = vld [vmem:[%s3 + $0x128] sm:$0xf]
        %v2189 = vld [vmem:[%s3 + $0x12c] sm:$0xf]
        %v2190 = vld [vmem:[%s3 + $0x130] sm:$0xf]
        %v2191 = vld [vmem:[%s3 + $0x134] sm:$0xf]
        %v2192 = vld [vmem:[%s3 + $0x138] sm:$0xf]
        %v2193 = vld [vmem:[%s3 + $0x13c] sm:$0xf]
        %v2194 = vld [vmem:[%s3 + $0x140] sm:$0xf]
        %v2195 = vld [vmem:[%s3 + $0x144] sm:$0xf]
        %v2196 = vld [vmem:[%s3 + $0x148] sm:$0xf]
        %v2197 = vld [vmem:[%s3 + $0x14c] sm:$0xf]
        %v2198 = vld [vmem:[%s3 + $0x150] sm:$0xf]
        %v2199 = vld [vmem:[%s3 + $0x154] sm:$0xf]
        %v2200 = vld [vmem:[%s3 + $0x158] sm:$0xf]
        %v2201 = vld [vmem:[%s3 + $0x15c] sm:$0xf]
        %v2202 = vld [vmem:[%s3 + $0x160] sm:$0xf]
        %v2203 = vld [vmem:[%s3 + $0x164] sm:$0xf]
        %v2204 = vld [vmem:[%s3 + $0x168] sm:$0xf]
        %v2205 = vld [vmem:[%s3 + $0x16c] sm:$0xf]
        %v2206 = vld [vmem:[%s3 + $0x170] sm:$0xf]
        %v2207 = vld [vmem:[%s3 + $0x174] sm:$0xf]
        %v2208 = vld [vmem:[%s3 + $0x178] sm:$0xf]
        %v2209 = vld [vmem:[%s3 + $0x17c] sm:$0xf]
        %v2210 = vld [vmem:[%s3 + $0x180] sm:$0xf]
        %v2211 = vld [vmem:[%s3 + $0x184] sm:$0xf]
        %v2212 = vld [vmem:[%s3 + $0x188] sm:$0xf]
        %v2213 = vld [vmem:[%s3 + $0x18c] sm:$0xf]
        %v2214 = vld [vmem:[%s3 + $0x190] sm:$0xf]
        %v2215 = vld [vmem:[%s3 + $0x194] sm:$0xf]
        %v2216 = vld [vmem:[%s3 + $0x198] sm:$0xf]
        %v2217 = vld [vmem:[%s3 + $0x19c] sm:$0xf]
        %v2218 = vld [vmem:[%s3 + $0x1a0] sm:$0xf]
        %v2219 = vld [vmem:[%s3 + $0x1a4] sm:$0xf]
        %v2220 = vld [vmem:[%s3 + $0x1a8] sm:$0xf]
        %v2221 = vld [vmem:[%s3 + $0x1ac] sm:$0xf]
        %v2222 = vld [vmem:[%s3 + $0x1b0] sm:$0xf]
        %v2223 = vld [vmem:[%s3 + $0x1b4] sm:$0xf]
        %v2224 = vld [vmem:[%s3 + $0x1b8] sm:$0xf]
        %v2225 = vld [vmem:[%s3 + $0x1bc] sm:$0xf]
        %v2226 = vld [vmem:[%s3 + $0x1c0] sm:$0xf]
        %v2227 = vld [vmem:[%s3 + $0x1c4] sm:$0xf]
        %v2228 = vld [vmem:[%s3 + $0x1c8] sm:$0xf]
        %v2229 = vld [vmem:[%s3 + $0x1cc] sm:$0xf]
        %v2230 = vld [vmem:[%s3 + $0x1d0] sm:$0xf]
        %v2231 = vld [vmem:[%s3 + $0x1d4] sm:$0xf]
        %v2232 = vld [vmem:[%s3 + $0x1d8] sm:$0xf]
        %v2233 = vld [vmem:[%s3 + $0x1dc] sm:$0xf]
        %v2234 = vld [vmem:[%s3 + $0x1e0] sm:$0xf]
        %v2235 = vld [vmem:[%s3 + $0x1e4] sm:$0xf]
        %v2236 = vld [vmem:[%s3 + $0x1e8] sm:$0xf]
        %v2237 = vld [vmem:[%s3 + $0x1ec] sm:$0xf]
        %v2238 = vld [vmem:[%s3 + $0x1f0] sm:$0xf]
        %v2239 = vld [vmem:[%s3 + $0x1f4] sm:$0xf]
        %v2240 = vld [vmem:[%s3 + $0x1f8] sm:$0xf]
        %v2241 = vld [vmem:[%s3 + $0x1fc] sm:$0xf]
        %v2242 = vld [vmem:[%s3 + $0x200] sm:$0xf]
        %v2243 = vld [vmem:[%s3 + $0x204] sm:$0xf]
        %v2244 = vld [vmem:[%s3 + $0x208] sm:$0xf]
        %v2245 = vld [vmem:[%s3 + $0x20c] sm:$0xf]
        %v2246 = vld [vmem:[%s3 + $0x210] sm:$0xf]
        %v2247 = vld [vmem:[%s3 + $0x214] sm:$0xf]
        %v2248 = vld [vmem:[%s3 + $0x218] sm:$0xf]
        %v2249 = vld [vmem:[%s3 + $0x21c] sm:$0xf]
        %v2250 = vld [vmem:[%s3 + $0x220] sm:$0xf]
        %v2251 = vld [vmem:[%s3 + $0x224] sm:$0xf]
        %v2252 = vld [vmem:[%s3 + $0x228] sm:$0xf]
        %v2253 = vld [vmem:[%s3 + $0x22c] sm:$0xf]
        %v2254 = vld [vmem:[%s3 + $0x230] sm:$0xf]
        %v2255 = vld [vmem:[%s3 + $0x234] sm:$0xf]
        %v2256 = vld [vmem:[%s3 + $0x238] sm:$0xf]
        %v2257 = vld [vmem:[%s3 + $0x23c] sm:$0xf]
        %v2258 = vld [vmem:[%s4] sm:$0x1]
        %v2260 = vlaneseq
        %v2261 = vshrl.u32 %v2260, 7
        %v2262 = vsub.s32 0, %v2261
        %v2263 = vrot.slane %v2258, %v2262
        %v2409 = vunpack.c.l.b16 %v2114
        %v2410 = vunpack.c.l.b16 %v2115
        %v2411 = vunpack.c.l.b16 %v2116
        %v2412 = vunpack.c.l.b16 %v2117
        %v2413 = vunpack.c.l.b16 %v2118
        %v2414 = vunpack.c.l.b16 %v2119
        %v2415 = vunpack.c.l.b16 %v2120
        %v2416 = vunpack.c.l.b16 %v2121
        %v2417 = vunpack.c.l.b16 %v2122
        %v2418 = vunpack.c.l.b16 %v2123
        %v2419 = vunpack.c.l.b16 %v2124
        %v2420 = vunpack.c.l.b16 %v2125
        %v2421 = vunpack.c.l.b16 %v2126
        %v2422 = vunpack.c.l.b16 %v2127
        %v2423 = vunpack.c.l.b16 %v2128
        %v2424 = vunpack.c.l.b16 %v2129
        %v2425 = vunpack.c.l.b16 %v2130
        %v2426 = vunpack.c.l.b16 %v2131
        %v2427 = vunpack.c.l.b16 %v2132
        %v2428 = vunpack.c.l.b16 %v2133
        %v2429 = vunpack.c.l.b16 %v2134
        %v2430 = vunpack.c.l.b16 %v2135
        %v2431 = vunpack.c.l.b16 %v2136
        %v2432 = vunpack.c.l.b16 %v2137
        %v2433 = vunpack.c.l.b16 %v2138
        %v2434 = vunpack.c.l.b16 %v2139
        %v2435 = vunpack.c.l.b16 %v2140
        %v2436 = vunpack.c.l.b16 %v2141
        %v2437 = vunpack.c.l.b16 %v2142
        %v2438 = vunpack.c.l.b16 %v2143
        %v2439 = vunpack.c.l.b16 %v2144
        %v2440 = vunpack.c.l.b16 %v2145
        %v2441 = vunpack.c.l.b16 %v2146
        %v2442 = vunpack.c.l.b16 %v2147
        %v2443 = vunpack.c.l.b16 %v2148
        %v2444 = vunpack.c.l.b16 %v2149
        %v2445 = vunpack.c.l.b16 %v2150
        %v2446 = vunpack.c.l.b16 %v2151
        %v2447 = vunpack.c.l.b16 %v2152
        %v2448 = vunpack.c.l.b16 %v2153
        %v2449 = vunpack.c.l.b16 %v2154
        %v2450 = vunpack.c.l.b16 %v2155
        %v2451 = vunpack.c.l.b16 %v2156
        %v2452 = vunpack.c.l.b16 %v2157
        %v2453 = vunpack.c.l.b16 %v2158
        %v2454 = vunpack.c.l.b16 %v2159
        %v2455 = vunpack.c.l.b16 %v2160
        %v2456 = vunpack.c.l.b16 %v2161
        %v2457 = vunpack.c.l.b16 %v2162
        %v2458 = vunpack.c.l.b16 %v2163
        %v2459 = vunpack.c.l.b16 %v2164
        %v2460 = vunpack.c.l.b16 %v2165
        %v2461 = vunpack.c.l.b16 %v2166
        %v2462 = vunpack.c.l.b16 %v2167
        %v2463 = vunpack.c.l.b16 %v2168
        %v2464 = vunpack.c.l.b16 %v2169
        %v2465 = vunpack.c.l.b16 %v2170
        %v2466 = vunpack.c.l.b16 %v2171
        %v2467 = vunpack.c.l.b16 %v2172
        %v2468 = vunpack.c.l.b16 %v2173
        %v2469 = vunpack.c.l.b16 %v2174
        %v2470 = vunpack.c.l.b16 %v2175
        %v2471 = vunpack.c.l.b16 %v2176
        %v2472 = vunpack.c.l.b16 %v2177
        %v2473 = vunpack.c.l.b16 %v2178
        %v2474 = vunpack.c.l.b16 %v2179
        %v2475 = vunpack.c.l.b16 %v2180
        %v2476 = vunpack.c.l.b16 %v2181
        %v2477 = vunpack.c.l.b16 %v2182
        %v2478 = vunpack.c.l.b16 %v2183
        %v2479 = vunpack.c.l.b16 %v2184
        %v2480 = vunpack.c.l.b16 %v2185
        %v2481 = vunpack.c.l.b16 %v2186
        %v2482 = vunpack.c.l.b16 %v2187
        %v2483 = vunpack.c.l.b16 %v2188
        %v2484 = vunpack.c.l.b16 %v2189
        %v2485 = vunpack.c.l.b16 %v2190
        %v2486 = vunpack.c.l.b16 %v2191
        %v2487 = vunpack.c.l.b16 %v2192
        %v2488 = vunpack.c.l.b16 %v2193
        %v2489 = vunpack.c.l.b16 %v2194
        %v2490 = vunpack.c.l.b16 %v2195
        %v2491 = vunpack.c.l.b16 %v2196
        %v2492 = vunpack.c.l.b16 %v2197
        %v2493 = vunpack.c.l.b16 %v2198
        %v2494 = vunpack.c.l.b16 %v2199
        %v2495 = vunpack.c.l.b16 %v2200
        %v2496 = vunpack.c.l.b16 %v2201
        %v2497 = vunpack.c.l.b16 %v2202
        %v2498 = vunpack.c.l.b16 %v2203
        %v2499 = vunpack.c.l.b16 %v2204
        %v2500 = vunpack.c.l.b16 %v2205
        %v2501 = vunpack.c.l.b16 %v2206
        %v2502 = vunpack.c.l.b16 %v2207
        %v2503 = vunpack.c.l.b16 %v2208
        %v2504 = vunpack.c.l.b16 %v2209
        %v2505 = vunpack.c.l.b16 %v2210
        %v2506 = vunpack.c.l.b16 %v2211
        %v2507 = vunpack.c.l.b16 %v2212
        %v2508 = vunpack.c.l.b16 %v2213
        %v2509 = vunpack.c.l.b16 %v2214
        %v2510 = vunpack.c.l.b16 %v2215
        %v2511 = vunpack.c.l.b16 %v2216
        %v2512 = vunpack.c.l.b16 %v2217
        %v2513 = vunpack.c.l.b16 %v2218
        %v2514 = vunpack.c.l.b16 %v2219
        %v2515 = vunpack.c.l.b16 %v2220
        %v2516 = vunpack.c.l.b16 %v2221
        %v2517 = vunpack.c.l.b16 %v2222
        %v2518 = vunpack.c.l.b16 %v2223
        %v2519 = vunpack.c.l.b16 %v2224
        %v2520 = vunpack.c.l.b16 %v2225
        %v2521 = vunpack.c.l.b16 %v2226
        %v2522 = vunpack.c.l.b16 %v2227
        %v2523 = vunpack.c.l.b16 %v2228
        %v2524 = vunpack.c.l.b16 %v2229
        %v2525 = vunpack.c.l.b16 %v2230
        %v2526 = vunpack.c.l.b16 %v2231
        %v2527 = vunpack.c.l.b16 %v2232
        %v2528 = vunpack.c.l.b16 %v2233
        %v2529 = vunpack.c.l.b16 %v2234
        %v2530 = vunpack.c.l.b16 %v2235
        %v2531 = vunpack.c.l.b16 %v2236
        %v2532 = vunpack.c.l.b16 %v2237
        %v2533 = vunpack.c.l.b16 %v2238
        %v2534 = vunpack.c.l.b16 %v2239
        %v2535 = vunpack.c.l.b16 %v2240
        %v2536 = vunpack.c.l.b16 %v2241
        %v2537 = vunpack.c.l.b16 %v2242
        %v2538 = vunpack.c.l.b16 %v2243
        %v2539 = vunpack.c.l.b16 %v2244
        %v2540 = vunpack.c.l.b16 %v2245
        %v2541 = vunpack.c.l.b16 %v2246
        %v2542 = vunpack.c.l.b16 %v2247
        %v2543 = vunpack.c.l.b16 %v2248
        %v2544 = vunpack.c.l.b16 %v2249
        %v2545 = vunpack.c.l.b16 %v2250
        %v2546 = vunpack.c.l.b16 %v2251
        %v2547 = vunpack.c.l.b16 %v2252
        %v2548 = vunpack.c.l.b16 %v2253
        %v2549 = vunpack.c.l.b16 %v2254
        %v2550 = vunpack.c.l.b16 %v2255
        %v2551 = vunpack.c.l.b16 %v2256
        %v2552 = vunpack.c.l.b16 %v2257
        %v2553 = vpack.c.b16 %v2410, %v2409
        %v2554 = vpack.c.b16 %v2412, %v2411
        %v2555 = vpack.c.b16 %v2414, %v2413
        %v2556 = vpack.c.b16 %v2416, %v2415
        %v2557 = vpack.c.b16 %v2418, %v2417
        %v2558 = vpack.c.b16 %v2420, %v2419
        %v2559 = vpack.c.b16 %v2422, %v2421
        %v2560 = vpack.c.b16 %v2424, %v2423
        %v2561 = vpack.c.b16 %v2426, %v2425
        %v2562 = vpack.c.b16 %v2428, %v2427
        %v2563 = vpack.c.b16 %v2430, %v2429
        %v2564 = vpack.c.b16 %v2432, %v2431
        %v2565 = vpack.c.b16 %v2434, %v2433
        %v2566 = vpack.c.b16 %v2436, %v2435
        %v2567 = vpack.c.b16 %v2438, %v2437
        %v2568 = vpack.c.b16 %v2440, %v2439
        %v2569 = vpack.c.b16 %v2442, %v2441
        %v2570 = vpack.c.b16 %v2444, %v2443
        %v2571 = vpack.c.b16 %v2446, %v2445
        %v2572 = vpack.c.b16 %v2448, %v2447
        %v2573 = vpack.c.b16 %v2450, %v2449
        %v2574 = vpack.c.b16 %v2452, %v2451
        %v2575 = vpack.c.b16 %v2454, %v2453
        %v2576 = vpack.c.b16 %v2456, %v2455
        %v2577 = vpack.c.b16 %v2458, %v2457
        %v2578 = vpack.c.b16 %v2460, %v2459
        %v2579 = vpack.c.b16 %v2462, %v2461
        %v2580 = vpack.c.b16 %v2464, %v2463
        %v2581 = vpack.c.b16 %v2466, %v2465
        %v2582 = vpack.c.b16 %v2468, %v2467
        %v2583 = vpack.c.b16 %v2470, %v2469
        %v2584 = vpack.c.b16 %v2472, %v2471
        %v2585 = vpack.c.b16 %v2474, %v2473
        %v2586 = vpack.c.b16 %v2476, %v2475
        %v2587 = vpack.c.b16 %v2478, %v2477
        %v2588 = vpack.c.b16 %v2480, %v2479
        %v2589 = vpack.c.b16 %v2482, %v2481
        %v2590 = vpack.c.b16 %v2484, %v2483
        %v2591 = vpack.c.b16 %v2486, %v2485
        %v2592 = vpack.c.b16 %v2488, %v2487
        %v2593 = vpack.c.b16 %v2490, %v2489
        %v2594 = vpack.c.b16 %v2492, %v2491
        %v2595 = vpack.c.b16 %v2494, %v2493
        %v2596 = vpack.c.b16 %v2496, %v2495
        %v2597 = vpack.c.b16 %v2498, %v2497
        %v2598 = vpack.c.b16 %v2500, %v2499
        %v2599 = vpack.c.b16 %v2502, %v2501
        %v2600 = vpack.c.b16 %v2504, %v2503
        %v2601 = vpack.c.b16 %v2506, %v2505
        %v2602 = vpack.c.b16 %v2508, %v2507
        %v2603 = vpack.c.b16 %v2510, %v2509
        %v2604 = vpack.c.b16 %v2512, %v2511
        %v2605 = vpack.c.b16 %v2514, %v2513
        %v2606 = vpack.c.b16 %v2516, %v2515
        %v2607 = vpack.c.b16 %v2518, %v2517
        %v2608 = vpack.c.b16 %v2520, %v2519
        %v2609 = vpack.c.b16 %v2522, %v2521
        %v2610 = vpack.c.b16 %v2524, %v2523
        %v2611 = vpack.c.b16 %v2526, %v2525
        %v2612 = vpack.c.b16 %v2528, %v2527
        %v2613 = vpack.c.b16 %v2530, %v2529
        %v2614 = vpack.c.b16 %v2532, %v2531
        %v2615 = vpack.c.b16 %v2534, %v2533
        %v2616 = vpack.c.b16 %v2536, %v2535
        %v2617 = vpack.c.b16 %v2538, %v2537
        %v2618 = vpack.c.b16 %v2540, %v2539
        %v2619 = vpack.c.b16 %v2542, %v2541
        %v2620 = vpack.c.b16 %v2544, %v2543
        %v2621 = vpack.c.b16 %v2546, %v2545
        %v2622 = vpack.c.b16 %v2548, %v2547
        %v2623 = vpack.c.b16 %v2550, %v2549
        %v2624 = vpack.c.b16 %v2552, %v2551
        %2697 = vmatprep.subr.bf16.mxu0 0
        %2698 = vmatpush1.bf16.msra.mxu0 %v2553
        %2699 = vmatprep.subr.bf16.mxu0 0
        %2700 = vmatpush1.bf16.msra.mxu0 %v2554
        %2701 = vmatprep.subr.bf16.mxu0 0
        %2702 = vmatpush1.bf16.msra.mxu0 %v2555
        %2703 = vmatprep.subr.bf16.mxu0 0
        %2704 = vmatpush1.bf16.msra.mxu0 %v2556
        %2705 = vmatprep.subr.bf16.mxu0 0
        %2706 = vmatpush1.bf16.msra.mxu0 %v2557
        %2707 = vmatprep.subr.bf16.mxu0 0
        %2708 = vmatpush1.bf16.msra.mxu0 %v2558
        %2709 = vmatprep.subr.bf16.mxu0 0
        %2710 = vmatpush1.bf16.msra.mxu0 %v2559
        %2711 = vmatprep.subr.bf16.mxu0 0
        %2712 = vmatpush1.bf16.msra.mxu0 %v2560
        %2713 = vmatprep.subr.bf16.mxu0 0
        %2714 = vmatpush1.bf16.msra.mxu0 %v2561
        %2715 = vmatprep.subr.bf16.mxu0 0
        %2716 = vmatpush1.bf16.msra.mxu0 %v2562
        %2717 = vmatprep.subr.bf16.mxu0 0
        %2718 = vmatpush1.bf16.msra.mxu0 %v2563
        %2719 = vmatprep.subr.bf16.mxu0 0
        %2720 = vmatpush1.bf16.msra.mxu0 %v2564
        %2721 = vmatprep.subr.bf16.mxu0 0
        %2722 = vmatpush1.bf16.msra.mxu0 %v2565
        %2723 = vmatprep.subr.bf16.mxu0 0
        %2724 = vmatpush1.bf16.msra.mxu0 %v2566
        %2725 = vmatprep.subr.bf16.mxu0 0
        %2726 = vmatpush1.bf16.msra.mxu0 %v2567
        %2727 = vmatprep.subr.bf16.mxu0 0
        %2728 = vmatpush1.bf16.msra.mxu0 %v2568
        %2729 = vmatprep.mubr.bf16.mxu0 %v2043
        %2730 = vmatmul.mubr.bf16.gmra.mrb[0].mxu0 %v2042
        %v2731 = vpop.f32.mrb[0].mxu0
        %v2732 = vadd.f32 %v2263, %v2731
        %v2733 = vpop.f32.mrb[0].mxu0
        %v2734 = vpop.f32.mrb[0].mxu0
        %v2735 = vadd.f32 %v2263, %v2734
        %v2736 = vpop.f32.mrb[0].mxu0
        %2737 = vmatprep.mubr.bf16.mxu0 %v2052
        %2738 = vmatmul.mubr.bf16.gmra.mrb[0].mxu0 %v2051
        %v2739 = vpop.f32.mrb[0].mxu0
        %v2740 = vadd.f32 %v2263, %v2739
        %v2741 = vpop.f32.mrb[0].mxu0
        %v2742 = vpop.f32.mrb[0].mxu0
        %v2743 = vadd.f32 %v2263, %v2742
        %v2744 = vpop.f32.mrb[0].mxu0
        %2745 = vmatprep.mubr.bf16.mxu0 %v2061
        %2746 = vmatmul.mubr.bf16.gmra.mrb[0].mxu0 %v2060
        %v2747 = vpop.f32.mrb[0].mxu0
        %v2748 = vadd.f32 %v2263, %v2747
        %v2749 = vpop.f32.mrb[0].mxu0
        %v2750 = vpop.f32.mrb[0].mxu0
        %v2751 = vadd.f32 %v2263, %v2750
        %v2752 = vpop.f32.mrb[0].mxu0
        %2753 = vmatprep.mubr.bf16.mxu0 %v2070
        %2754 = vmatmul.mubr.bf16.gmra.mrb[0].mxu0 %v2069
        %v2755 = vpop.f32.mrb[0].mxu0
        %v2756 = vadd.f32 %v2263, %v2755
        %v2757 = vpop.f32.mrb[0].mxu0
        %v2758 = vpop.f32.mrb[0].mxu0
        %v2759 = vadd.f32 %v2263, %v2758
        %v2760 = vpop.f32.mrb[0].mxu0
        %2761 = vmatprep.mubr.bf16.mxu0 %v2079
        %2762 = vmatmul.mubr.bf16.gmra.mrb[0].mxu0 %v2078
        %v2763 = vpop.f32.mrb[0].mxu0
        %v2764 = vadd.f32 %v2263, %v2763
        %v2765 = vpop.f32.mrb[0].mxu0
        %v2766 = vpop.f32.mrb[0].mxu0
        %v2767 = vadd.f32 %v2263, %v2766
        %v2768 = vpop.f32.mrb[0].mxu0
        %2769 = vmatprep.mubr.bf16.mxu0 %v2088
        %2770 = vmatmul.mubr.bf16.gmra.mrb[0].mxu0 %v2087
        %v2771 = vpop.f32.mrb[0].mxu0
        %v2772 = vadd.f32 %v2263, %v2771
        %v2773 = vpop.f32.mrb[0].mxu0
        %v2774 = vpop.f32.mrb[0].mxu0
        %v2775 = vadd.f32 %v2263, %v2774
        %v2776 = vpop.f32.mrb[0].mxu0
        %2777 = vmatprep.mubr.bf16.mxu0 %v2097
        %2778 = vmatmul.mubr.bf16.gmra.mrb[0].mxu0 %v2096
        %v2779 = vpop.f32.mrb[0].mxu0
        %v2780 = vadd.f32 %v2263, %v2779
        %v2781 = vpop.f32.mrb[0].mxu0
        %v2782 = vpop.f32.mrb[0].mxu0
        %v2783 = vadd.f32 %v2263, %v2782
        %v2784 = vpop.f32.mrb[0].mxu0
        %2785 = vmatprep.mubr.bf16.mxu0 %v2106
        %2786 = vmatmul.mubr.bf16.gmra.mrb[0].mxu0 %v2105
        %v2787 = vpop.f32.mrb[0].mxu0
        %v2788 = vadd.f32 %v2263, %v2787
        %v2789 = vpop.f32.mrb[0].mxu0
        %v2790 = vpop.f32.mrb[0].mxu0
        %v2791 = vadd.f32 %v2263, %v2790
        %v2792 = vpop.f32.mrb[0].mxu0
        %2793 = vdwg.mxu0
        %2794 = vmatprep.subr.bf16.mxu0 0
        %2795 = vmatpush1.bf16.msra.mxu0 %v2569
        %2796 = vmatprep.subr.bf16.mxu0 0
        %2797 = vmatpush1.bf16.msra.mxu0 %v2570
        %2798 = vmatprep.subr.bf16.mxu0 0
        %2799 = vmatpush1.bf16.msra.mxu0 %v2571
        %2800 = vmatprep.subr.bf16.mxu0 0
        %2801 = vmatpush1.bf16.msra.mxu0 %v2572
        %2802 = vmatprep.subr.bf16.mxu0 0
        %2803 = vmatpush1.bf16.msra.mxu0 %v2573
        %2804 = vmatprep.subr.bf16.mxu0 0
        %2805 = vmatpush1.bf16.msra.mxu0 %v2574
        %2806 = vmatprep.subr.bf16.mxu0 0
        %2807 = vmatpush1.bf16.msra.mxu0 %v2575
        %2808 = vmatprep.subr.bf16.mxu0 0
        %2809 = vmatpush1.bf16.msra.mxu0 %v2576
        %2810 = vmatprep.subr.bf16.mxu0 0
        %2811 = vmatpush1.bf16.msra.mxu0 %v2577
        %2812 = vmatprep.subr.bf16.mxu0 0
        %2813 = vmatpush1.bf16.msra.mxu0 %v2578
        %2814 = vmatprep.subr.bf16.mxu0 0
        %2815 = vmatpush1.bf16.msra.mxu0 %v2579
        %2816 = vmatprep.subr.bf16.mxu0 0
        %2817 = vmatpush1.bf16.msra.mxu0 %v2580
        %2818 = vmatprep.subr.bf16.mxu0 0
        %2819 = vmatpush1.bf16.msra.mxu0 %v2581
        %2820 = vmatprep.subr.bf16.mxu0 0
        %2821 = vmatpush1.bf16.msra.mxu0 %v2582
        %2822 = vmatprep.subr.bf16.mxu0 0
        %2823 = vmatpush1.bf16.msra.mxu0 %v2583
        %2824 = vmatprep.subr.bf16.mxu0 0
        %2825 = vmatpush1.bf16.msra.mxu0 %v2584
        %2826 = vmatprep.mubr.bf16.mxu0 %v2045
        %2827 = vmatmul.mubr.bf16.gmra.mrb[0].mxu0 %v2044
        %v2828 = vpop.f32.mrb[0].mxu0
        %v2829 = vadd.f32 %v2732, %v2828
        %v2830 = vpop.f32.mrb[0].mxu0
        %v2831 = vpop.f32.mrb[0].mxu0
        %v2832 = vadd.f32 %v2735, %v2831
        %v2833 = vpop.f32.mrb[0].mxu0
        %2834 = vmatprep.mubr.bf16.mxu0 %v2054
        %2835 = vmatmul.mubr.bf16.gmra.mrb[0].mxu0 %v2053
        %v2836 = vpop.f32.mrb[0].mxu0
        %v2837 = vadd.f32 %v2740, %v2836
        %v2838 = vpop.f32.mrb[0].mxu0
        %v2839 = vpop.f32.mrb[0].mxu0
        %v2840 = vadd.f32 %v2743, %v2839
        %v2841 = vpop.f32.mrb[0].mxu0
        %2842 = vmatprep.mubr.bf16.mxu0 %v2063
        %2843 = vmatmul.mubr.bf16.gmra.mrb[0].mxu0 %v2062
        %v2844 = vpop.f32.mrb[0].mxu0
        %v2845 = vadd.f32 %v2748, %v2844
        %v2846 = vpop.f32.mrb[0].mxu0
        %v2847 = vpop.f32.mrb[0].mxu0
        %v2848 = vadd.f32 %v2751, %v2847
        %v2849 = vpop.f32.mrb[0].mxu0
        %2850 = vmatprep.mubr.bf16.mxu0 %v2072
        %2851 = vmatmul.mubr.bf16.gmra.mrb[0].mxu0 %v2071
        %v2852 = vpop.f32.mrb[0].mxu0
        %v2853 = vadd.f32 %v2756, %v2852
        %v2854 = vpop.f32.mrb[0].mxu0
        %v2855 = vpop.f32.mrb[0].mxu0
        %v2856 = vadd.f32 %v2759, %v2855
        %v2857 = vpop.f32.mrb[0].mxu0
        %2858 = vmatprep.mubr.bf16.mxu0 %v2081
        %2859 = vmatmul.mubr.bf16.gmra.mrb[0].mxu0 %v2080
        %v2860 = vpop.f32.mrb[0].mxu0
        %v2861 = vadd.f32 %v2764, %v2860
        %v2862 = vpop.f32.mrb[0].mxu0
        %v2863 = vpop.f32.mrb[0].mxu0
        %v2864 = vadd.f32 %v2767, %v2863
        %v2865 = vpop.f32.mrb[0].mxu0
        %2866 = vmatprep.mubr.bf16.mxu0 %v2090
        %2867 = vmatmul.mubr.bf16.gmra.mrb[0].mxu0 %v2089
        %v2868 = vpop.f32.mrb[0].mxu0
        %v2869 = vadd.f32 %v2772, %v2868
        %v2870 = vpop.f32.mrb[0].mxu0
        %v2871 = vpop.f32.mrb[0].mxu0
        %v2872 = vadd.f32 %v2775, %v2871
        %v2873 = vpop.f32.mrb[0].mxu0
        %2874 = vmatprep.mubr.bf16.mxu0 %v2099
        %2875 = vmatmul.mubr.bf16.gmra.mrb[0].mxu0 %v2098
        %v2876 = vpop.f32.mrb[0].mxu0
        %v2877 = vadd.f32 %v2780, %v2876
        %v2878 = vpop.f32.mrb[0].mxu0
        %v2879 = vpop.f32.mrb[0].mxu0
        %v2880 = vadd.f32 %v2783, %v2879
        %v2881 = vpop.f32.mrb[0].mxu0
        %2882 = vmatprep.mubr.bf16.mxu0 %v2108
        %2883 = vmatmul.mubr.bf16.gmra.mrb[0].mxu0 %v2107
        %v2884 = vpop.f32.mrb[0].mxu0
        %v2885 = vadd.f32 %v2788, %v2884
        %v2886 = vpop.f32.mrb[0].mxu0
        %v2887 = vpop.f32.mrb[0].mxu0
        %v2888 = vadd.f32 %v2791, %v2887
        %v2889 = vpop.f32.mrb[0].mxu0
        %2890 = vdwg.mxu0
        %2891 = vmatprep.subr.bf16.mxu0 0
        %2892 = vmatpush1.bf16.msra.mxu0 %v2585
        %2893 = vmatprep.subr.bf16.mxu0 0
        %2894 = vmatpush1.bf16.msra.mxu0 %v2586
        %2895 = vmatprep.subr.bf16.mxu0 0
        %2896 = vmatpush1.bf16.msra.mxu0 %v2587
        %2897 = vmatprep.subr.bf16.mxu0 0
        %2898 = vmatpush1.bf16.msra.mxu0 %v2588
        %2899 = vmatprep.subr.bf16.mxu0 0
        %2900 = vmatpush1.bf16.msra.mxu0 %v2589
        %2901 = vmatprep.subr.bf16.mxu0 0
        %2902 = vmatpush1.bf16.msra.mxu0 %v2590
        %2903 = vmatprep.subr.bf16.mxu0 0
        %2904 = vmatpush1.bf16.msra.mxu0 %v2591
        %2905 = vmatprep.subr.bf16.mxu0 0
        %2906 = vmatpush1.bf16.msra.mxu0 %v2592
        %2907 = vmatprep.subr.bf16.mxu0 0
        %2908 = vmatpush1.bf16.msra.mxu0 %v2593
        %2909 = vmatprep.subr.bf16.mxu0 0
        %2910 = vmatpush1.bf16.msra.mxu0 %v2594
        %2911 = vmatprep.subr.bf16.mxu0 0
        %2912 = vmatpush1.bf16.msra.mxu0 %v2595
        %2913 = vmatprep.subr.bf16.mxu0 0
        %2914 = vmatpush1.bf16.msra.mxu0 %v2596
        %2915 = vmatprep.subr.bf16.mxu0 0
        %2916 = vmatpush1.bf16.msra.mxu0 %v2597
        %2917 = vmatprep.subr.bf16.mxu0 0
        %2918 = vmatpush1.bf16.msra.mxu0 %v2598
        %2919 = vmatprep.subr.bf16.mxu0 0
        %2920 = vmatpush1.bf16.msra.mxu0 %v2599
        %2921 = vmatprep.subr.bf16.mxu0 0
        %2922 = vmatpush1.bf16.msra.mxu0 %v2600
        %2923 = vmatprep.mubr.bf16.mxu0 %v2047
        %2924 = vmatmul.mubr.bf16.gmra.mrb[0].mxu0 %v2046
        %v2925 = vpop.f32.mrb[0].mxu0
        %v2926 = vadd.f32 %v2829, %v2925
        %v2927 = vpop.f32.mrb[0].mxu0
        %v2928 = vpop.f32.mrb[0].mxu0
        %v2929 = vadd.f32 %v2832, %v2928
        %v2930 = vpop.f32.mrb[0].mxu0
        %2931 = vmatprep.mubr.bf16.mxu0 %v2056
        %2932 = vmatmul.mubr.bf16.gmra.mrb[0].mxu0 %v2055
        %v2933 = vpop.f32.mrb[0].mxu0
        %v2934 = vadd.f32 %v2837, %v2933
        %v2935 = vpop.f32.mrb[0].mxu0
        %v2936 = vpop.f32.mrb[0].mxu0
        %v2937 = vadd.f32 %v2840, %v2936
        %v2938 = vpop.f32.mrb[0].mxu0
        %2939 = vmatprep.mubr.bf16.mxu0 %v2065
        %2940 = vmatmul.mubr.bf16.gmra.mrb[0].mxu0 %v2064
        %v2941 = vpop.f32.mrb[0].mxu0
        %v2942 = vadd.f32 %v2845, %v2941
        %v2943 = vpop.f32.mrb[0].mxu0
        %v2944 = vpop.f32.mrb[0].mxu0
        %v2945 = vadd.f32 %v2848, %v2944
        %v2946 = vpop.f32.mrb[0].mxu0
        %2947 = vmatprep.mubr.bf16.mxu0 %v2074
        %2948 = vmatmul.mubr.bf16.gmra.mrb[0].mxu0 %v2073
        %v2949 = vpop.f32.mrb[0].mxu0
        %v2950 = vadd.f32 %v2853, %v2949
        %v2951 = vpop.f32.mrb[0].mxu0
        %v2952 = vpop.f32.mrb[0].mxu0
        %v2953 = vadd.f32 %v2856, %v2952
        %v2954 = vpop.f32.mrb[0].mxu0
        %2955 = vmatprep.mubr.bf16.mxu0 %v2083
        %2956 = vmatmul.mubr.bf16.gmra.mrb[0].mxu0 %v2082
        %v2957 = vpop.f32.mrb[0].mxu0
        %v2958 = vadd.f32 %v2861, %v2957
        %v2959 = vpop.f32.mrb[0].mxu0
        %v2960 = vpop.f32.mrb[0].mxu0
        %v2961 = vadd.f32 %v2864, %v2960
        %v2962 = vpop.f32.mrb[0].mxu0
        %2963 = vmatprep.mubr.bf16.mxu0 %v2092
        %2964 = vmatmul.mubr.bf16.gmra.mrb[0].mxu0 %v2091
        %v2965 = vpop.f32.mrb[0].mxu0
        %v2966 = vadd.f32 %v2869, %v2965
        %v2967 = vpop.f32.mrb[0].mxu0
        %v2968 = vpop.f32.mrb[0].mxu0
        %v2969 = vadd.f32 %v2872, %v2968
        %v2970 = vpop.f32.mrb[0].mxu0
        %2971 = vmatprep.mubr.bf16.mxu0 %v2101
        %2972 = vmatmul.mubr.bf16.gmra.mrb[0].mxu0 %v2100
        %v2973 = vpop.f32.mrb[0].mxu0
        %v2974 = vadd.f32 %v2877, %v2973
        %v2975 = vpop.f32.mrb[0].mxu0
        %v2976 = vpop.f32.mrb[0].mxu0
        %v2977 = vadd.f32 %v2880, %v2976
        %v2978 = vpop.f32.mrb[0].mxu0
        %2979 = vmatprep.mubr.bf16.mxu0 %v2110
        %2980 = vmatmul.mubr.bf16.gmra.mrb[0].mxu0 %v2109
        %v2981 = vpop.f32.mrb[0].mxu0
        %v2982 = vadd.f32 %v2885, %v2981
        %v2983 = vpop.f32.mrb[0].mxu0
        %v2984 = vpop.f32.mrb[0].mxu0
        %v2985 = vadd.f32 %v2888, %v2984
        %v2986 = vpop.f32.mrb[0].mxu0
        %2987 = vdwg.mxu0
        %2988 = vmatprep.subr.bf16.mxu0 0
        %2989 = vmatpush1.bf16.msra.mxu0 %v2601
        %2990 = vmatprep.subr.bf16.mxu0 0
        %2991 = vmatpush1.bf16.msra.mxu0 %v2602
        %2992 = vmatprep.subr.bf16.mxu0 0
        %2993 = vmatpush1.bf16.msra.mxu0 %v2603
        %2994 = vmatprep.subr.bf16.mxu0 0
        %2995 = vmatpush1.bf16.msra.mxu0 %v2604
        %2996 = vmatprep.subr.bf16.mxu0 0
        %2997 = vmatpush1.bf16.msra.mxu0 %v2605
        %2998 = vmatprep.subr.bf16.mxu0 0
        %2999 = vmatpush1.bf16.msra.mxu0 %v2606
        %3000 = vmatprep.subr.bf16.mxu0 0
        %3001 = vmatpush1.bf16.msra.mxu0 %v2607
        %3002 = vmatprep.subr.bf16.mxu0 0
        %3003 = vmatpush1.bf16.msra.mxu0 %v2608
        %3004 = vmatprep.subr.bf16.mxu0 0
        %3005 = vmatpush1.bf16.msra.mxu0 %v2609
        %3006 = vmatprep.subr.bf16.mxu0 0
        %3007 = vmatpush1.bf16.msra.mxu0 %v2610
        %3008 = vmatprep.subr.bf16.mxu0 0
        %3009 = vmatpush1.bf16.msra.mxu0 %v2611
        %3010 = vmatprep.subr.bf16.mxu0 0
        %3011 = vmatpush1.bf16.msra.mxu0 %v2612
        %3012 = vmatprep.subr.bf16.mxu0 0
        %3013 = vmatpush1.bf16.msra.mxu0 %v2613
        %3014 = vmatprep.subr.bf16.mxu0 0
        %3015 = vmatpush1.bf16.msra.mxu0 %v2614
        %3016 = vmatprep.subr.bf16.mxu0 0
        %3017 = vmatpush1.bf16.msra.mxu0 %v2615
        %3018 = vmatprep.subr.bf16.mxu0 0
        %3019 = vmatpush1.bf16.msra.mxu0 %v2616
        %3020 = vmatprep.mubr.bf16.mxu0 %v2049
        %3021 = vmatmul.mubr.bf16.gmra.mrb[0].mxu0 %v2048
        %v3022 = vpop.f32.mrb[0].mxu0
        %v3023 = vadd.f32 %v2926, %v3022
        %v3024 = vpop.f32.mrb[0].mxu0
        %v3025 = vpop.f32.mrb[0].mxu0
        %v3026 = vadd.f32 %v2929, %v3025
        %v3027 = vpop.f32.mrb[0].mxu0
        %3028 = vmatprep.mubr.bf16.mxu0 %v2058
        %3029 = vmatmul.mubr.bf16.gmra.mrb[0].mxu0 %v2057
        %v3030 = vpop.f32.mrb[0].mxu0
        %v3031 = vadd.f32 %v2934, %v3030
        %v3032 = vpop.f32.mrb[0].mxu0
        %v3033 = vpop.f32.mrb[0].mxu0
        %v3034 = vadd.f32 %v2937, %v3033
        %v3035 = vpop.f32.mrb[0].mxu0
        %3036 = vmatprep.mubr.bf16.mxu0 %v2067
        %3037 = vmatmul.mubr.bf16.gmra.mrb[0].mxu0 %v2066
        %v3038 = vpop.f32.mrb[0].mxu0
        %v3039 = vadd.f32 %v2942, %v3038
        %v3040 = vpop.f32.mrb[0].mxu0
        %v3041 = vpop.f32.mrb[0].mxu0
        %v3042 = vadd.f32 %v2945, %v3041
        %v3043 = vpop.f32.mrb[0].mxu0
        %3044 = vmatprep.mubr.bf16.mxu0 %v2076
        %3045 = vmatmul.mubr.bf16.gmra.mrb[0].mxu0 %v2075
        %v3046 = vpop.f32.mrb[0].mxu0
        %v3047 = vadd.f32 %v2950, %v3046
        %v3048 = vpop.f32.mrb[0].mxu0
        %v3049 = vpop.f32.mrb[0].mxu0
        %v3050 = vadd.f32 %v2953, %v3049
        %v3051 = vpop.f32.mrb[0].mxu0
        %3052 = vmatprep.mubr.bf16.mxu0 %v2085
        %3053 = vmatmul.mubr.bf16.gmra.mrb[0].mxu0 %v2084
        %v3054 = vpop.f32.mrb[0].mxu0
        %v3055 = vadd.f32 %v2958, %v3054
        %v3056 = vpop.f32.mrb[0].mxu0
        %v3057 = vpop.f32.mrb[0].mxu0
        %v3058 = vadd.f32 %v2961, %v3057
        %v3059 = vpop.f32.mrb[0].mxu0
        %3060 = vmatprep.mubr.bf16.mxu0 %v2094
        %3061 = vmatmul.mubr.bf16.gmra.mrb[0].mxu0 %v2093
        %v3062 = vpop.f32.mrb[0].mxu0
        %v3063 = vadd.f32 %v2966, %v3062
        %v3064 = vpop.f32.mrb[0].mxu0
        %v3065 = vpop.f32.mrb[0].mxu0
        %v3066 = vadd.f32 %v2969, %v3065
        %v3067 = vpop.f32.mrb[0].mxu0
        %3068 = vmatprep.mubr.bf16.mxu0 %v2103
        %3069 = vmatmul.mubr.bf16.gmra.mrb[0].mxu0 %v2102
        %v3070 = vpop.f32.mrb[0].mxu0
        %v3071 = vadd.f32 %v2974, %v3070
        %v3072 = vpop.f32.mrb[0].mxu0
        %v3073 = vpop.f32.mrb[0].mxu0
        %v3074 = vadd.f32 %v2977, %v3073
        %v3075 = vpop.f32.mrb[0].mxu0
        %3076 = vmatprep.mubr.bf16.mxu0 %v2112
        %3077 = vmatmul.mubr.bf16.gmra.mrb[0].mxu0 %v2111
        %v3078 = vpop.f32.mrb[0].mxu0
        %v3079 = vadd.f32 %v2982, %v3078
        %v3080 = vpop.f32.mrb[0].mxu0
        %v3081 = vpop.f32.mrb[0].mxu0
        %v3082 = vadd.f32 %v2985, %v3081
        %v3083 = vpop.f32.mrb[0].mxu0
        %3084 = vdwg.mxu0
        %3085 = vmatprep.subr.bf16.mxu0 0
        %3086 = vmatpush1.bf16.msra.mxu0 %v2617
        %3087 = vmatprep.subr.bf16.mxu0 0
        %3088 = vmatpush1.bf16.msra.mxu0 %v2618
        %3089 = vmatprep.subr.bf16.mxu0 0
        %3090 = vmatpush1.bf16.msra.mxu0 %v2619
        %3091 = vmatprep.subr.bf16.mxu0 0
        %3092 = vmatpush1.bf16.msra.mxu0 %v2620
        %3093 = vmatprep.subr.bf16.mxu0 0
        %3094 = vmatpush1.bf16.msra.mxu0 %v2621
        %3095 = vmatprep.subr.bf16.mxu0 0
        %3096 = vmatpush1.bf16.msra.mxu0 %v2622
        %3097 = vmatprep.subr.bf16.mxu0 0
        %3098 = vmatpush1.bf16.msra.mxu0 %v2623
        %3099 = vmatprep.subr.bf16.mxu0 0
        %3100 = vmatpush1.bf16.msra.mxu0 %v2624
        %3101 = vmatprep.subr.bf16.mxu0 0
        %3102 = vmatpush1.bf16.msra.mxu0 0
        %3103 = vmatprep.subr.bf16.mxu0 0
        %3104 = vmatpush1.bf16.msra.mxu0 0
        %3105 = vmatprep.subr.bf16.mxu0 0
        %3106 = vmatpush1.bf16.msra.mxu0 0
        %3107 = vmatprep.subr.bf16.mxu0 0
        %3108 = vmatpush1.bf16.msra.mxu0 0
        %3109 = vmatprep.subr.bf16.mxu0 0
        %3110 = vmatpush1.bf16.msra.mxu0 0
        %3111 = vmatprep.subr.bf16.mxu0 0
        %3112 = vmatpush1.bf16.msra.mxu0 0
        %3113 = vmatprep.subr.bf16.mxu0 0
        %3114 = vmatpush1.bf16.msra.mxu0 0
        %3115 = vmatprep.subr.bf16.mxu0 0
        %3116 = vmatpush1.bf16.msra.mxu0 0
        %3117 = vmatprep.mubr.bf16.mxu0 0
        %3118 = vmatmul.mubr.bf16.gmra.mrb[0].mxu0 %v2050
        %v3119 = vpop.f32.mrb[0].mxu0
        %v3120 = vadd.f32 %v3023, %v3119
        %v3121 = vpop.f32.mrb[0].mxu0
        %v3122 = vpop.f32.mrb[0].mxu0
        %v3123 = vadd.f32 %v3026, %v3122
        %v3124 = vpop.f32.mrb[0].mxu0
        %3125 = vmatprep.mubr.bf16.mxu0 0
        %3126 = vmatmul.mubr.bf16.gmra.mrb[0].mxu0 %v2059
        %v3127 = vpop.f32.mrb[0].mxu0
        %v3128 = vadd.f32 %v3031, %v3127
        %v3129 = vpop.f32.mrb[0].mxu0
        %v3130 = vpop.f32.mrb[0].mxu0
        %v3131 = vadd.f32 %v3034, %v3130
        %v3132 = vpop.f32.mrb[0].mxu0
        %3133 = vmatprep.mubr.bf16.mxu0 0
        %3134 = vmatmul.mubr.bf16.gmra.mrb[0].mxu0 %v2068
        %v3135 = vpop.f32.mrb[0].mxu0
        %v3136 = vadd.f32 %v3039, %v3135
        %v3137 = vpop.f32.mrb[0].mxu0
        %v3138 = vpop.f32.mrb[0].mxu0
        %v3139 = vadd.f32 %v3042, %v3138
        %v3140 = vpop.f32.mrb[0].mxu0
        %3141 = vmatprep.mubr.bf16.mxu0 0
        %3142 = vmatmul.mubr.bf16.gmra.mrb[0].mxu0 %v2077
        %v3143 = vpop.f32.mrb[0].mxu0
        %v3144 = vadd.f32 %v3047, %v3143
        %v3145 = vpop.f32.mrb[0].mxu0
        %v3146 = vpop.f32.mrb[0].mxu0
        %v3147 = vadd.f32 %v3050, %v3146
        %v3148 = vpop.f32.mrb[0].mxu0
        %3149 = vmatprep.mubr.bf16.mxu0 0
        %3150 = vmatmul.mubr.bf16.gmra.mrb[0].mxu0 %v2086
        %v3151 = vpop.f32.mrb[0].mxu0
        %v3152 = vadd.f32 %v3055, %v3151
        %v3153 = vpop.f32.mrb[0].mxu0
        %v3154 = vpop.f32.mrb[0].mxu0
        %v3155 = vadd.f32 %v3058, %v3154
        %v3156 = vpop.f32.mrb[0].mxu0
        %3157 = vmatprep.mubr.bf16.mxu0 0
        %3158 = vmatmul.mubr.bf16.gmra.mrb[0].mxu0 %v2095
        %v3159 = vpop.f32.mrb[0].mxu0
        %v3160 = vadd.f32 %v3063, %v3159
        %v3161 = vpop.f32.mrb[0].mxu0
        %v3162 = vpop.f32.mrb[0].mxu0
        %v3163 = vadd.f32 %v3066, %v3162
        %v3164 = vpop.f32.mrb[0].mxu0
        %3165 = vmatprep.mubr.bf16.mxu0 0
        %3166 = vmatmul.mubr.bf16.gmra.mrb[0].mxu0 %v2104
        %v3167 = vpop.f32.mrb[0].mxu0
        %v3168 = vadd.f32 %v3071, %v3167
        %v3169 = vpop.f32.mrb[0].mxu0
        %v3170 = vpop.f32.mrb[0].mxu0
        %v3171 = vadd.f32 %v3074, %v3170
        %v3172 = vpop.f32.mrb[0].mxu0
        %3173 = vmatprep.mubr.bf16.mxu0 0
        %3174 = vmatmul.mubr.bf16.gmra.mrb[0].mxu0 %v2113
        %v3175 = vpop.f32.mrb[0].mxu0
        %v3176 = vadd.f32 %v3079, %v3175
        %v3177 = vpop.f32.mrb[0].mxu0
        %v3178 = vpop.f32.mrb[0].mxu0
        %v3179 = vadd.f32 %v3082, %v3178
        %v3180 = vpop.f32.mrb[0].mxu0
        %3181 = vdwg.mxu0
        %v3182 = vadd.f32 %v3120, %v260
        %v3183 = vadd.f32 %v3123, %v261
        %v3184 = vadd.f32 %v3128, %v262
        %v3185 = vadd.f32 %v3131, %v263
        %v3186 = vadd.f32 %v3136, %v264
        %v3187 = vadd.f32 %v3139, %v265
        %v3188 = vadd.f32 %v3144, %v266
        %v3189 = vadd.f32 %v3147, %v267
        %v3190 = vadd.f32 %v3152, %v268
        %v3191 = vadd.f32 %v3155, %v269
        %v3192 = vadd.f32 %v3160, %v270
        %v3193 = vadd.f32 %v3163, %v271
        %v3194 = vadd.f32 %v3168, %v272
        %v3195 = vadd.f32 %v3171, %v273
        %v3196 = vadd.f32 %v3176, %v274
        %v3197 = vadd.f32 %v3179, %v275
        %v3198 = vmax.f32 %v3182, 0.0
        %v3199 = vmax.f32 %v3183, 0.0
        %v3200 = vmax.f32 %v3184, 0.0
        %v3201 = vmax.f32 %v3185, 0.0
        %v3202 = vmax.f32 %v3186, 0.0
        %v3203 = vmax.f32 %v3187, 0.0
        %v3204 = vmax.f32 %v3188, 0.0
        %v3205 = vmax.f32 %v3189, 0.0
        %v3206 = vmax.f32 %v3190, 0.0
        %v3207 = vmax.f32 %v3191, 0.0
        %v3208 = vmax.f32 %v3192, 0.0
        %v3209 = vmax.f32 %v3193, 0.0
        %v3210 = vmax.f32 %v3194, 0.0
        %v3211 = vmax.f32 %v3195, 0.0
        %v3212 = vmax.f32 %v3196, 0.0
        %v3213 = vmax.f32 %v3197, 0.0
        %3214 = vst [vmem:[%s217] sm:$0xff] %v3198
        %3215 = vst [vmem:[%s217 + $0x8] sm:$0xff] %v3199
        %3216 = vst [vmem:[%s217 + $0x10] sm:$0xff] %v3200
        %3217 = vst [vmem:[%s217 + $0x18] sm:$0xff] %v3201
        %3218 = vst [vmem:[%s217 + $0x20] sm:$0xff] %v3202
        %3219 = vst [vmem:[%s217 + $0x28] sm:$0xff] %v3203
        %3220 = vst [vmem:[%s217 + $0x30] sm:$0xff] %v3204
        %3221 = vst [vmem:[%s217 + $0x38] sm:$0xff] %v3205
        %3222 = vst [vmem:[%s217 + $0x40] sm:$0xff] %v3206
        %3223 = vst [vmem:[%s217 + $0x48] sm:$0xff] %v3207
        %3224 = vst [vmem:[%s217 + $0x50] sm:$0xff] %v3208
        %3225 = vst [vmem:[%s217 + $0x58] sm:$0xff] %v3209
        %3226 = vst [vmem:[%s217 + $0x60] sm:$0xff] %v3210
        %3227 = vst [vmem:[%s217 + $0x68] sm:$0xff] %v3211
        %3228 = vst [vmem:[%s217 + $0x70] sm:$0xff] %v3212
        %3229 = vst [vmem:[%s217 + $0x78] sm:$0xff] %v3213
        %s3230 = sand.u32 %s137, 1
        %s3231 = scalar_lea.sflag [#allocation5], %s3230
        %s3232 = sand.u32 %s137, 1
        %s3233 = smul.addr %s3232, 128
        %s3234 = scalar_lea.vmem [#allocation4], %s3233
        // Predicated region
        $region41: #{basic_block_forward.1} parent=39 // pred_check
          %p3235 = pneg %p147
        $region42: #{basic_block_forward.1} parent=39 // pred_check_branch
          %3237 = sbr.rel (%p3235) target = $region44
        $region43: #{basic_block_forward.1} parent=39 // pred_region
          %s3239 = ssub.s32 2048, 2048
          %3240 = vsyncadd %s3231, %s3239
          %s3241 = smul.addr %s19, 16
          %s3242 = smul.addr %s3241, 128
          %s3243 = scalar_lea.hbm %s5, %s3242
          %s3244 = sshll.u32 %s3234, 4
          %s3245 = int_to_ptr.vmem [resolvable:$true] %s3244
          %3250 = dma.vmem_to_hbm [thread:$0]  %s3245, 2048, %s3243, %s3231, 128, 128, 8
        $region44: #{basic_block_forward.1} parent=39 // pred_fallthru
          _
      $region40: #{basic_block_forward.1} parent=5 // pred_fallthru
        _
      %p3251 = scmp.le.s32.totalorder 2, %s14
      // Predicated region
      $region45: #{basic_block_forward.1} parent=5 // pred_check
        %p3252 = pneg %p3251
      $region46: #{basic_block_forward.1} parent=5 // pred_check_branch
        %3254 = sbr.rel (%p3252) target = $region48
      $region47: #{basic_block_forward.1} parent=5 // pred_region
        %s3255 = ssub.s32 %s14, 2
        // Predicated region
        $region49: #{basic_block_forward.1} parent=47 // pred_check
          %p3256 = pneg %p153
        $region50: #{basic_block_forward.1} parent=47 // pred_check_branch
          %3258 = sbr.rel (%p3256) target = $region52
        $region51: #{basic_block_forward.1} parent=47 // pred_region
          %s3259 = sand.u32 %s138, 1
          %s3260 = scalar_lea.sflag [#allocation5], %s3259
          %s3261 = sand.u32 %s138, 1
          %s3262 = smul.addr %s3261, 128
          %s3263 = scalar_lea.vmem [#allocation4], %s3262
          %3264 = dma.done %s3260, 2048
        $region52: #{basic_block_forward.1} parent=47 // pred_fallthru
          _
      $region48: #{basic_block_forward.1} parent=5 // pred_fallthru
        _
    $region6: #{basic_block_forward.1} parent=1 // loop_footer
      %s18 = sadd.s32 1, %s14
    $region7: #{basic_block_forward.1} parent=1 // loop_footer_branch
      %13 = sbr.rel target = $region3
    $region8: #{basic_block_forward.1} parent=1 // loop_exit
      _
    %3265 = vsyncpa [#allocation5], 1
    %s3266 = scalar_lea.sflag [#allocation5], 1
    %3267 = vsyncpa %s3266, 1

</llo_original>
